<compile_context>
chip_gen: v7x
topology: tpu7x:2x2x1
jax: 0.10.0
libtpu: 0.0.40
codegen_flags: <defaults>
</compile_context>

<pallas_src>
import math

import jax
import jax.numpy as jnp
import numpy as np
from jax.experimental import pallas as pl
from jax.experimental.pallas import tpu as pltpu

NUM_LAYERS = 4
NUM_FILTERS = 8


# ------------------------------- Pallas kernel -------------------------------

def _encoder_kernel(x_ref, r1_ref, r2_ref, r3_ref,
                    w0_ref, w1_ref, w2_ref, w3_ref, bias_ref, o_ref):
    """Fused conv stack + global average pool for a block of batch elements.

    x_ref    : (Bt, 4*C, S1)  space-to-depth'ed input (hoisted conv0 gather)
    r{l}_ref : (4, S_l, S_{l+1})  0/1 column-selection (space-to-depth) per tap
    w0_ref   : (F, 4*C)   packed conv0 weights (columns c*4 + 2*kh + kw)
    w{l}_ref : (F, 4*F)   packed conv{l} weights (columns p*F + f)
    bias_ref : (4, F, 1)
    o_ref    : (1, F, Bt) pooled features, batch on lanes
    """
    layer_refs = ((r1_ref, w1_ref), (r2_ref, w2_ref), (r3_ref, w3_ref))
    bt_count = x_ref.shape[0]

    for bt in range(bt_count):                       # static unroll: interleave
        x = x_ref[bt]                                # (4*C, S1)

        # conv0 (space-to-depth already done in the wrapper): one matmul.
        h = jnp.dot(w0_ref[...], x, preferred_element_type=jnp.float32)
        h = jnp.maximum(h + bias_ref[0], 0.0)        # (F, S1)

        # conv1..conv3: 4 gather matmuls -> sublane concat -> one channel mix.
        for layer, (r_ref, w_ref) in enumerate(layer_refs, start=1):
            z = jnp.concatenate(
                [jnp.dot(h, r_ref[p], preferred_element_type=jnp.float32)
                 for p in range(4)],
                axis=0)                              # (4F, S_{l+1}), rows p*F+f
            h = jnp.dot(w_ref[...], z, preferred_element_type=jnp.float32)
            h = jnp.maximum(h + bias_ref[layer], 0.0)

        # adaptive_avg_pool2d((1,1)): mean over remaining spatial (lane) axis.
        inv = 1.0 / float(h.shape[1])
        pooled = jnp.sum(h, axis=1, keepdims=True) * inv      # (F, 1)
        o_ref[0, :, bt:bt + 1] = pooled.astype(o_ref.dtype)


# ----------------------- constant operand preparation ------------------------

def _space_to_depth_selectors(H, W):
    """0/1 matrices R_p (4, H*W, Ho*Wo): column (i,j) of R_p selects input pixel
    (2i+kh, 2j+kw) for tap p = 2*kh + kw (row-major spatial flattening)."""
    Ho, Wo = H // 2, W // 2
    r = np.zeros((4, H * W, Ho * Wo), np.float32)
    for kh in range(2):
        for kw in range(2):
            p = 2 * kh + kw
            for i in range(Ho):
                for j in range(Wo):
                    r[p, (2 * i + kh) * W + (2 * j + kw), i * Wo + j] = 1.0
    return r


def init_encoder_params(obs_shape, key):
    """PyTorch-Conv2d-shaped params: list of (w (F, C_in, 2, 2), b (F,))."""
    c_in = obs_shape[0]
    params = []
    chans = [c_in] + [NUM_FILTERS] * NUM_LAYERS
    for i in range(NUM_LAYERS):
        key, k_w, k_b = jax.random.split(key, 3)
        fan_in = chans[i] * 2 * 2
        bound = 1.0 / math.sqrt(fan_in)
        w = jax.random.uniform(k_w, (NUM_FILTERS, chans[i], 2, 2),
                               jnp.float32, -bound, bound)
        b = jax.random.uniform(k_b, (NUM_FILTERS,), jnp.float32, -bound, bound)
        params.append((w, b))
    return params


def prepare_encoder_operands(params, obs_shape):
    """One-time (init) prep.  Nothing here runs per forward call.

    Returns (w0_cat, r_mats, w_cats, bias_pack):
      w0_cat   (F, 4*C): conv0 weights packed to match the wrapper hoist layout
      r_mats   3x (4, S_l, S_{l+1}): per-tap selectors for conv1..conv3
      w_cats   3x (F, 4*F): conv1..conv3 weights packed (columns p*F + f)
      bias_pack (4, F, 1)
    """
    c_in, H, W = obs_shape
    assert H % (2 ** NUM_LAYERS) == 0 and W % (2 ** NUM_LAYERS) == 0, (
        "spatial dims must be divisible by 16 to match the PyTorch VALID convs")
    F = NUM_FILTERS

    w0 = np.asarray(params[0][0], np.float32)            # (F, C, 2, 2)
    # columns ordered c*4 + 2*kh + kw  (= row-major flatten of (C,2,2))
    w0_cat = jnp.asarray(w0.reshape(F, c_in * 4))

    r_mats, w_cats = [], []
    bias_cols = [np.asarray(params[0][1], np.float32).reshape(F, 1)]
    for l in range(1, NUM_LAYERS):
        h_l, w_l = H >> l, W >> l                        # input spatial of conv l
        r_mats.append(jnp.asarray(_space_to_depth_selectors(h_l, w_l)))
        w = np.asarray(params[l][0], np.float32)         # (F, F, 2, 2)
        # columns ordered p*F + f to match the in-kernel concat row order
        w_cats.append(jnp.asarray(
            w.reshape(F, F, 4).transpose(0, 2, 1).reshape(F, 4 * F)))
        bias_cols.append(np.asarray(params[l][1], np.float32).reshape(F, 1))
    bias_pack = jnp.asarray(np.stack(bias_cols, axis=0))  # (4, F, 1)
    return w0_cat, tuple(r_mats), tuple(w_cats), bias_pack


# ------------------------------ Encoder forward -------------------------------

def _pick_batch_block(B):
    """Largest block <= 8 dividing B that still leaves >= 2 grid steps
    (keeps both v7x TensorCores busy; on v5e/v6e it is harmless)."""
    best = 1
    for cand in range(1, min(B, 8) + 1):
        if B % cand == 0 and (B // cand >= 2 or B == 1):
            best = cand
    return best


def encoder_forward(obs_nchw, operands, use_buffered=True):
    """Matches Encoder.forward: 4x conv(2x2,s2)+ReLU, avg-pool to 1x1, squeeze."""
    w0_cat, r_mats, w_cats, bias_pack = operands
    B, C, H, W = obs_nchw.shape
    H1, W1 = H // 2, W // 2
    S1 = H1 * W1

    # Hoisted layer-0 space-to-depth: (B,C,H,W) -> (B, 4C, S1), channel index
    # c*4 + 2*kh + kw, spatial flattened row-major.  Pure XLA layout op.
    x0 = obs_nchw.reshape(B, C, H1, 2, W1, 2).transpose(0, 1, 3, 5, 2, 4)
    x0 = x0.reshape(B, 4 * C, S1)

    bt = _pick_batch_block(B)
    grid = (B // bt,)

    def _const_spec(arr):
        zeros = (0,) * arr.ndim
        if use_buffered:
            try:
                # constants have a fixed block index -> single buffer is enough
                return pl.BlockSpec(arr.shape, lambda b: zeros,
                                    pipeline_mode=pl.Buffered(1))
            except Exception:
                pass   # older builds: fall back to default buffering
        return pl.BlockSpec(arr.shape, lambda b: zeros)

    in_specs = [pl.BlockSpec((bt, 4 * C, S1), lambda b: (b, 0, 0))]
    in_specs += [_const_spec(r) for r in r_mats]
    in_specs += [_const_spec(w0_cat)]
    in_specs += [_const_spec(w) for w in w_cats]
    in_specs += [_const_spec(bias_pack)]
    out_specs = pl.BlockSpec((1, NUM_FILTERS, bt), lambda b: (b, 0, 0))
    out_shape = jax.ShapeDtypeStruct((B // bt, NUM_FILTERS, bt), obs_nchw.dtype)

    # advisory cost estimate
    flops_per_elem = 2 * NUM_FILTERS * (4 * C) * S1
    s_in = S1
    for _ in range(1, NUM_LAYERS):
        s_out = s_in // 4
        flops_per_elem += 4 * 2 * NUM_FILTERS * s_in * s_out          # gathers
        flops_per_elem += 2 * NUM_FILTERS * (4 * NUM_FILTERS) * s_out  # mix
        s_in = s_out
    const_bytes = 4 * (w0_cat.size + sum(r.size for r in r_mats)
                       + sum(w.size for w in w_cats) + bias_pack.size)
    bytes_accessed = 4 * (x0.size + B * NUM_FILTERS) + const_bytes

    out = pl.pallas_call(
        _encoder_kernel,
        out_shape=out_shape,
        grid=grid,
        in_specs=in_specs,
        out_specs=out_specs,
        compiler_params=pltpu.CompilerParams(dimension_semantics=("parallel",)),
        cost_estimate=pl.CostEstimate(flops=int(B * flops_per_elem),
                                      transcendentals=0,
                                      bytes_accessed=int(bytes_accessed)),
    )(x0, *r_mats, w0_cat, *w_cats, bias_pack)

    # (G, F, Bt) -> (B, F); tiny layout fixup outside the kernel.
    return out.transpose(0, 2, 1).reshape(B, NUM_FILTERS)


# ---------------------------- reference (checking) ---------------------------

def encoder_forward_ref(obs_nchw, params):
    x = obs_nchw
    for (w, b) in params:
        x = jax.lax.conv_general_dilated(
            x, w, window_strides=(2, 2), padding="VALID",
            dimension_numbers=("NCHW", "OIHW", "NCHW"))
        x = jnp.maximum(x + b[None, :, None, None], 0.0)
    return jnp.mean(x, axis=(2, 3))


# ----------------------------------- main ------------------------------------

if __name__ == "__main__":
    key = jax.random.PRNGKey(0)
    k_obs, k_par = jax.random.split(key)

    obs_shape = (4, 16, 16)                          # (C, H, W): 16->8->4->2->1
    batch = 2
    obs = jax.random.normal(k_obs, (batch,) + obs_shape, jnp.float32)

    params = init_encoder_params(obs_shape, k_par)
    operands = prepare_encoder_operands(params, obs_shape)

    def run(use_buffered):
        fn = jax.jit(lambda o: encoder_forward(o, operands,
                                               use_buffered=use_buffered))
        return jax.block_until_ready(fn(obs))

    try:
        out = run(True)
    except Exception:
        # pl.Buffered(1) unsupported in this build -> default double buffering.
        out = run(False)

    ref = jax.block_until_ready(encoder_forward_ref(obs, params))
    assert out.shape == (batch, NUM_FILTERS), out.shape
    assert jnp.allclose(out, ref, atol=1e-5, rtol=1e-5), (out, ref)

    print("KERNEL_OK")
</pallas_src>

<mosaic_0001>
module attributes {stable_mosaic.version = 11 : i64} {
  func.func @_encoder_kernel(%arg0: i32, %arg1: memref<1x16x64xf32, #tpu.memory_space<vmem>>, %arg2: memref<4x64x16xf32, #tpu.memory_space<vmem>>, %arg3: memref<4x16x4xf32, #tpu.memory_space<vmem>>, %arg4: memref<4x4x1xf32, #tpu.memory_space<vmem>>, %arg5: memref<8x16xf32, #tpu.memory_space<vmem>>, %arg6: memref<8x32xf32, #tpu.memory_space<vmem>>, %arg7: memref<8x32xf32, #tpu.memory_space<vmem>>, %arg8: memref<8x32xf32, #tpu.memory_space<vmem>>, %arg9: memref<4x8x1xf32, #tpu.memory_space<vmem>>, %arg10: memref<1x8x1xf32, #tpu.memory_space<vmem>>) attributes {dimension_semantics = [#tpu.dimension_semantics<parallel>], iteration_bounds = array<i64: 2>, scalar_prefetch = 0 : i64, scratch_operands = 0 : i64, tpu.core_type = #tpu.core_type<tc>, window_params = [{transform_indices = @transform_0, window_bounds = array<i64: 1, 16, 64>}, {pipeline_mode = #tpu.pipeline_mode<synchronous>, transform_indices = @transform_1, window_bounds = array<i64: 4, 64, 16>}, {pipeline_mode = #tpu.pipeline_mode<synchronous>, transform_indices = @transform_2, window_bounds = array<i64: 4, 16, 4>}, {pipeline_mode = #tpu.pipeline_mode<synchronous>, transform_indices = @transform_3, window_bounds = array<i64: 4, 4, 1>}, {pipeline_mode = #tpu.pipeline_mode<synchronous>, transform_indices = @transform_4, window_bounds = array<i64: 8, 16>}, {pipeline_mode = #tpu.pipeline_mode<synchronous>, transform_indices = @transform_5, window_bounds = array<i64: 8, 32>}, {pipeline_mode = #tpu.pipeline_mode<synchronous>, transform_indices = @transform_6, window_bounds = array<i64: 8, 32>}, {pipeline_mode = #tpu.pipeline_mode<synchronous>, transform_indices = @transform_7, window_bounds = array<i64: 8, 32>}, {pipeline_mode = #tpu.pipeline_mode<synchronous>, transform_indices = @transform_8, window_bounds = array<i64: 4, 8, 1>}, {transform_indices = @transform_9, window_bounds = array<i64: 1, 8, 1>}]} {
    %c0 = arith.constant 0 : index
    %c0_0 = arith.constant 0 : index
    %c0_1 = arith.constant 0 : index
    %0 = vector.load %arg1[%c0, %c0_0, %c0_1] : memref<1x16x64xf32, #tpu.memory_space<vmem>>, vector<1x16x64xf32>
    %1 = vector.shape_cast %0 : vector<1x16x64xf32> to vector<16x64xf32>
    %c0_2 = arith.constant 0 : index
    %c0_3 = arith.constant 0 : index
    %2 = vector.load %arg5[%c0_2, %c0_3] : memref<8x16xf32, #tpu.memory_space<vmem>>, vector<8x16xf32>
    %cst = arith.constant dense<0.000000e+00> : vector<8x64xf32>
    %3 = tpu.matmul %2, %1, %cst {dimension_numbers = #tpu.dot_dimension_numbers<[1], [0], [0], [1], [0, 0, 1, 1], [], []>} : vector<8x16xf32>, vector<16x64xf32>, vector<8x64xf32> -> vector<8x64xf32>
    %c0_4 = arith.constant 0 : index
    %c0_5 = arith.constant 0 : index
    %c0_6 = arith.constant 0 : index
    %4 = vector.load %arg9[%c0_4, %c0_5, %c0_6] : memref<4x8x1xf32, #tpu.memory_space<vmem>>, vector<1x8x1xf32>
    %5 = vector.shape_cast %4 : vector<1x8x1xf32> to vector<8x1xf32>
    %6 = vector.broadcast %5 : vector<8x1xf32> to vector<8x64xf32>
    %7 = arith.addf %3, %6 : vector<8x64xf32>
    %cst_7 = arith.constant 0.000000e+00 : f32
    %8 = vector.broadcast %cst_7 : f32 to vector<8x64xf32>
    %9 = arith.maximumf %7, %8 : vector<8x64xf32>
    %c0_8 = arith.constant 0 : index
    %c0_9 = arith.constant 0 : index
    %c0_10 = arith.constant 0 : index
    %10 = vector.load %arg2[%c0_8, %c0_9, %c0_10] : memref<4x64x16xf32, #tpu.memory_space<vmem>>, vector<1x64x16xf32>
    %11 = vector.shape_cast %10 : vector<1x64x16xf32> to vector<64x16xf32>
    %cst_11 = arith.constant dense<0.000000e+00> : vector<8x16xf32>
    %12 = tpu.matmul %9, %11, %cst_11 {dimension_numbers = #tpu.dot_dimension_numbers<[1], [0], [0], [1], [0, 0, 1, 1], [], []>} : vector<8x64xf32>, vector<64x16xf32>, vector<8x16xf32> -> vector<8x16xf32>
    %c1 = arith.constant 1 : index
    %c0_12 = arith.constant 0 : index
    %c0_13 = arith.constant 0 : index
    %13 = vector.load %arg2[%c1, %c0_12, %c0_13] : memref<4x64x16xf32, #tpu.memory_space<vmem>>, vector<1x64x16xf32>
    %14 = vector.shape_cast %13 : vector<1x64x16xf32> to vector<64x16xf32>
    %cst_14 = arith.constant dense<0.000000e+00> : vector<8x16xf32>
    %15 = tpu.matmul %9, %14, %cst_14 {dimension_numbers = #tpu.dot_dimension_numbers<[1], [0], [0], [1], [0, 0, 1, 1], [], []>} : vector<8x64xf32>, vector<64x16xf32>, vector<8x16xf32> -> vector<8x16xf32>
    %c2 = arith.constant 2 : index
    %c0_15 = arith.constant 0 : index
    %c0_16 = arith.constant 0 : index
    %16 = vector.load %arg2[%c2, %c0_15, %c0_16] : memref<4x64x16xf32, #tpu.memory_space<vmem>>, vector<1x64x16xf32>
    %17 = vector.shape_cast %16 : vector<1x64x16xf32> to vector<64x16xf32>
    %cst_17 = arith.constant dense<0.000000e+00> : vector<8x16xf32>
    %18 = tpu.matmul %9, %17, %cst_17 {dimension_numbers = #tpu.dot_dimension_numbers<[1], [0], [0], [1], [0, 0, 1, 1], [], []>} : vector<8x64xf32>, vector<64x16xf32>, vector<8x16xf32> -> vector<8x16xf32>
    %c3 = arith.constant 3 : index
    %c0_18 = arith.constant 0 : index
    %c0_19 = arith.constant 0 : index
    %19 = vector.load %arg2[%c3, %c0_18, %c0_19] : memref<4x64x16xf32, #tpu.memory_space<vmem>>, vector<1x64x16xf32>
    %20 = vector.shape_cast %19 : vector<1x64x16xf32> to vector<64x16xf32>
    %cst_20 = arith.constant dense<0.000000e+00> : vector<8x16xf32>
    %21 = tpu.matmul %9, %20, %cst_20 {dimension_numbers = #tpu.dot_dimension_numbers<[1], [0], [0], [1], [0, 0, 1, 1], [], []>} : vector<8x64xf32>, vector<64x16xf32>, vector<8x16xf32> -> vector<8x16xf32>
    %22 = tpu.concatenate %12, %15, %18, %21 in 0 : vector<8x16xf32>, vector<8x16xf32>, vector<8x16xf32>, vector<8x16xf32> -> vector<32x16xf32>
    %c0_21 = arith.constant 0 : index
    %c0_22 = arith.constant 0 : index
    %23 = vector.load %arg6[%c0_21, %c0_22] : memref<8x32xf32, #tpu.memory_space<vmem>>, vector<8x32xf32>
    %cst_23 = arith.constant dense<0.000000e+00> : vector<8x16xf32>
    %24 = tpu.matmul %23, %22, %cst_23 {dimension_numbers = #tpu.dot_dimension_numbers<[1], [0], [0], [1], [0, 0, 1, 1], [], []>} : vector<8x32xf32>, vector<32x16xf32>, vector<8x16xf32> -> vector<8x16xf32>
    %c1_24 = arith.constant 1 : index
    %c0_25 = arith.constant 0 : index
    %c0_26 = arith.constant 0 : index
    %25 = vector.load %arg9[%c1_24, %c0_25, %c0_26] : memref<4x8x1xf32, #tpu.memory_space<vmem>>, vector<1x8x1xf32>
    %26 = vector.shape_cast %25 : vector<1x8x1xf32> to vector<8x1xf32>
    %27 = vector.broadcast %26 : vector<8x1xf32> to vector<8x16xf32>
    %28 = arith.addf %24, %27 : vector<8x16xf32>
    %cst_27 = arith.constant 0.000000e+00 : f32
    %29 = vector.broadcast %cst_27 : f32 to vector<8x16xf32>
    %30 = arith.maximumf %28, %29 : vector<8x16xf32>
    %c0_28 = arith.constant 0 : index
    %c0_29 = arith.constant 0 : index
    %c0_30 = arith.constant 0 : index
    %31 = vector.load %arg3[%c0_28, %c0_29, %c0_30] : memref<4x16x4xf32, #tpu.memory_space<vmem>>, vector<1x16x4xf32>
    %32 = vector.shape_cast %31 : vector<1x16x4xf32> to vector<16x4xf32>
    %cst_31 = arith.constant dense<0.000000e+00> : vector<8x4xf32>
    %33 = tpu.matmul %30, %32, %cst_31 {dimension_numbers = #tpu.dot_dimension_numbers<[1], [0], [0], [1], [0, 0, 1, 1], [], []>} : vector<8x16xf32>, vector<16x4xf32>, vector<8x4xf32> -> vector<8x4xf32>
    %c1_32 = arith.constant 1 : index
    %c0_33 = arith.constant 0 : index
    %c0_34 = arith.constant 0 : index
    %34 = vector.load %arg3[%c1_32, %c0_33, %c0_34] : memref<4x16x4xf32, #tpu.memory_space<vmem>>, vector<1x16x4xf32>
    %35 = vector.shape_cast %34 : vector<1x16x4xf32> to vector<16x4xf32>
    %cst_35 = arith.constant dense<0.000000e+00> : vector<8x4xf32>
    %36 = tpu.matmul %30, %35, %cst_35 {dimension_numbers = #tpu.dot_dimension_numbers<[1], [0], [0], [1], [0, 0, 1, 1], [], []>} : vector<8x16xf32>, vector<16x4xf32>, vector<8x4xf32> -> vector<8x4xf32>
    %c2_36 = arith.constant 2 : index
    %c0_37 = arith.constant 0 : index
    %c0_38 = arith.constant 0 : index
    %37 = vector.load %arg3[%c2_36, %c0_37, %c0_38] : memref<4x16x4xf32, #tpu.memory_space<vmem>>, vector<1x16x4xf32>
    %38 = vector.shape_cast %37 : vector<1x16x4xf32> to vector<16x4xf32>
    %cst_39 = arith.constant dense<0.000000e+00> : vector<8x4xf32>
    %39 = tpu.matmul %30, %38, %cst_39 {dimension_numbers = #tpu.dot_dimension_numbers<[1], [0], [0], [1], [0, 0, 1, 1], [], []>} : vector<8x16xf32>, vector<16x4xf32>, vector<8x4xf32> -> vector<8x4xf32>
    %c3_40 = arith.constant 3 : index
    %c0_41 = arith.constant 0 : index
    %c0_42 = arith.constant 0 : index
    %40 = vector.load %arg3[%c3_40, %c0_41, %c0_42] : memref<4x16x4xf32, #tpu.memory_space<vmem>>, vector<1x16x4xf32>
    %41 = vector.shape_cast %40 : vector<1x16x4xf32> to vector<16x4xf32>
    %cst_43 = arith.constant dense<0.000000e+00> : vector<8x4xf32>
    %42 = tpu.matmul %30, %41, %cst_43 {dimension_numbers = #tpu.dot_dimension_numbers<[1], [0], [0], [1], [0, 0, 1, 1], [], []>} : vector<8x16xf32>, vector<16x4xf32>, vector<8x4xf32> -> vector<8x4xf32>
    %43 = tpu.concatenate %33, %36, %39, %42 in 0 : vector<8x4xf32>, vector<8x4xf32>, vector<8x4xf32>, vector<8x4xf32> -> vector<32x4xf32>
    %c0_44 = arith.constant 0 : index
    %c0_45 = arith.constant 0 : index
    %44 = vector.load %arg7[%c0_44, %c0_45] : memref<8x32xf32, #tpu.memory_space<vmem>>, vector<8x32xf32>
    %cst_46 = arith.constant dense<0.000000e+00> : vector<8x4xf32>
    %45 = tpu.matmul %44, %43, %cst_46 {dimension_numbers = #tpu.dot_dimension_numbers<[1], [0], [0], [1], [0, 0, 1, 1], [], []>} : vector<8x32xf32>, vector<32x4xf32>, vector<8x4xf32> -> vector<8x4xf32>
    %c2_47 = arith.constant 2 : index
    %c0_48 = arith.constant 0 : index
    %c0_49 = arith.constant 0 : index
    %46 = vector.load %arg9[%c2_47, %c0_48, %c0_49] : memref<4x8x1xf32, #tpu.memory_space<vmem>>, vector<1x8x1xf32>
    %47 = vector.shape_cast %46 : vector<1x8x1xf32> to vector<8x1xf32>
    %48 = vector.broadcast %47 : vector<8x1xf32> to vector<8x4xf32>
    %49 = arith.addf %45, %48 : vector<8x4xf32>
    %cst_50 = arith.constant 0.000000e+00 : f32
    %50 = vector.broadcast %cst_50 : f32 to vector<8x4xf32>
    %51 = arith.maximumf %49, %50 : vector<8x4xf32>
    %c0_51 = arith.constant 0 : index
    %c0_52 = arith.constant 0 : index
    %c0_53 = arith.constant 0 : index
    %52 = vector.load %arg4[%c0_51, %c0_52, %c0_53] : memref<4x4x1xf32, #tpu.memory_space<vmem>>, vector<1x4x1xf32>
    %53 = vector.shape_cast %52 : vector<1x4x1xf32> to vector<4x1xf32>
    %cst_54 = arith.constant dense<0.000000e+00> : vector<8x1xf32>
    %54 = tpu.matmul %51, %53, %cst_54 {dimension_numbers = #tpu.dot_dimension_numbers<[1], [0], [0], [1], [0, 0, 1, 1], [], []>} : vector<8x4xf32>, vector<4x1xf32>, vector<8x1xf32> -> vector<8x1xf32>
    %c1_55 = arith.constant 1 : index
    %c0_56 = arith.constant 0 : index
    %c0_57 = arith.constant 0 : index
    %55 = vector.load %arg4[%c1_55, %c0_56, %c0_57] : memref<4x4x1xf32, #tpu.memory_space<vmem>>, vector<1x4x1xf32>
    %56 = vector.shape_cast %55 : vector<1x4x1xf32> to vector<4x1xf32>
    %cst_58 = arith.constant dense<0.000000e+00> : vector<8x1xf32>
    %57 = tpu.matmul %51, %56, %cst_58 {dimension_numbers = #tpu.dot_dimension_numbers<[1], [0], [0], [1], [0, 0, 1, 1], [], []>} : vector<8x4xf32>, vector<4x1xf32>, vector<8x1xf32> -> vector<8x1xf32>
    %c2_59 = arith.constant 2 : index
    %c0_60 = arith.constant 0 : index
    %c0_61 = arith.constant 0 : index
    %58 = vector.load %arg4[%c2_59, %c0_60, %c0_61] : memref<4x4x1xf32, #tpu.memory_space<vmem>>, vector<1x4x1xf32>
    %59 = vector.shape_cast %58 : vector<1x4x1xf32> to vector<4x1xf32>
    %cst_62 = arith.constant dense<0.000000e+00> : vector<8x1xf32>
    %60 = tpu.matmul %51, %59, %cst_62 {dimension_numbers = #tpu.dot_dimension_numbers<[1], [0], [0], [1], [0, 0, 1, 1], [], []>} : vector<8x4xf32>, vector<4x1xf32>, vector<8x1xf32> -> vector<8x1xf32>
    %c3_63 = arith.constant 3 : index
    %c0_64 = arith.constant 0 : index
    %c0_65 = arith.constant 0 : index
    %61 = vector.load %arg4[%c3_63, %c0_64, %c0_65] : memref<4x4x1xf32, #tpu.memory_space<vmem>>, vector<1x4x1xf32>
    %62 = vector.shape_cast %61 : vector<1x4x1xf32> to vector<4x1xf32>
    %cst_66 = arith.constant dense<0.000000e+00> : vector<8x1xf32>
    %63 = tpu.matmul %51, %62, %cst_66 {dimension_numbers = #tpu.dot_dimension_numbers<[1], [0], [0], [1], [0, 0, 1, 1], [], []>} : vector<8x4xf32>, vector<4x1xf32>, vector<8x1xf32> -> vector<8x1xf32>
    %64 = tpu.concatenate %54, %57, %60, %63 in 0 : vector<8x1xf32>, vector<8x1xf32>, vector<8x1xf32>, vector<8x1xf32> -> vector<32x1xf32>
    %c0_67 = arith.constant 0 : index
    %c0_68 = arith.constant 0 : index
    %65 = vector.load %arg8[%c0_67, %c0_68] : memref<8x32xf32, #tpu.memory_space<vmem>>, vector<8x32xf32>
    %cst_69 = arith.constant dense<0.000000e+00> : vector<8x1xf32>
    %66 = tpu.matmul %65, %64, %cst_69 {dimension_numbers = #tpu.dot_dimension_numbers<[1], [0], [0], [1], [0, 0, 1, 1], [], []>} : vector<8x32xf32>, vector<32x1xf32>, vector<8x1xf32> -> vector<8x1xf32>
    %c3_70 = arith.constant 3 : index
    %c0_71 = arith.constant 0 : index
    %c0_72 = arith.constant 0 : index
    %67 = vector.load %arg9[%c3_70, %c0_71, %c0_72] : memref<4x8x1xf32, #tpu.memory_space<vmem>>, vector<1x8x1xf32>
    %68 = vector.shape_cast %67 : vector<1x8x1xf32> to vector<8x1xf32>
    %69 = arith.addf %66, %68 : vector<8x1xf32>
    %cst_73 = arith.constant 0.000000e+00 : f32
    %70 = vector.broadcast %cst_73 : f32 to vector<8x1xf32>
    %71 = arith.maximumf %69, %70 : vector<8x1xf32>
    %cst_74 = arith.constant dense<0.000000e+00> : vector<8xf32>
    %72 = vector.multi_reduction <add>, %71, %cst_74 [1] : vector<8x1xf32> to vector<8xf32>
    %73 = vector.shape_cast %72 : vector<8xf32> to vector<8x1xf32>
    %cst_75 = arith.constant 1.000000e+00 : f32
    %74 = vector.broadcast %cst_75 : f32 to vector<8x1xf32>
    %75 = arith.mulf %73, %74 : vector<8x1xf32>
    %c0_76 = arith.constant 0 : index
    %c0_77 = arith.constant 0 : index
    %c0_78 = arith.constant 0 : index
    %76 = vector.load %arg10[%c0_76, %c0_77, %c0_78] : memref<1x8x1xf32, #tpu.memory_space<vmem>>, vector<1x8x1xf32>
    %77 = vector.shape_cast %76 : vector<1x8x1xf32> to vector<8x1xf32>
    %78 = vector.shape_cast %75 : vector<8x1xf32> to vector<1x8x1xf32>
    tpu.vector_store %arg10[%c0_76, %c0_77, %c0_78], %78 {strides = array<i32>} : memref<1x8x1xf32, #tpu.memory_space<vmem>>, vector<1x8x1xf32>,
    return
  }
  func.func @transform_0(%arg0: i32) -> (i32, i32, i32) {
    %c0_i32 = arith.constant 0 : i32
    %c0_i32_0 = arith.constant 0 : i32
    %c0_i32_1 = arith.constant 0 : i32
    return %arg0, %c0_i32, %c0_i32_0 : i32, i32, i32
  }
  func.func @transform_1(%arg0: i32) -> (i32, i32, i32) {
    %c0_i32 = arith.constant 0 : i32
    %c0_i32_0 = arith.constant 0 : i32
    %c0_i32_1 = arith.constant 0 : i32
    %c0_i32_2 = arith.constant 0 : i32
    return %c0_i32, %c0_i32_0, %c0_i32_1 : i32, i32, i32
  }
  func.func @transform_2(%arg0: i32) -> (i32, i32, i32) {
    %c0_i32 = arith.constant 0 : i32
    %c0_i32_0 = arith.constant 0 : i32
    %c0_i32_1 = arith.constant 0 : i32
    %c0_i32_2 = arith.constant 0 : i32
    return %c0_i32, %c0_i32_0, %c0_i32_1 : i32, i32, i32
  }
  func.func @transform_3(%arg0: i32) -> (i32, i32, i32) {
    %c0_i32 = arith.constant 0 : i32
    %c0_i32_0 = arith.constant 0 : i32
    %c0_i32_1 = arith.constant 0 : i32
    %c0_i32_2 = arith.constant 0 : i32
    return %c0_i32, %c0_i32_0, %c0_i32_1 : i32, i32, i32
  }
  func.func @transform_4(%arg0: i32) -> (i32, i32) {
    %c0_i32 = arith.constant 0 : i32
    %c0_i32_0 = arith.constant 0 : i32
    %c0_i32_1 = arith.constant 0 : i32
    return %c0_i32, %c0_i32_0 : i32, i32
  }
  func.func @transform_5(%arg0: i32) -> (i32, i32) {
    %c0_i32 = arith.constant 0 : i32
    %c0_i32_0 = arith.constant 0 : i32
    %c0_i32_1 = arith.constant 0 : i32
    return %c0_i32, %c0_i32_0 : i32, i32
  }
  func.func @transform_6(%arg0: i32) -> (i32, i32) {
    %c0_i32 = arith.constant 0 : i32
    %c0_i32_0 = arith.constant 0 : i32
    %c0_i32_1 = arith.constant 0 : i32
    return %c0_i32, %c0_i32_0 : i32, i32
  }
  func.func @transform_7(%arg0: i32) -> (i32, i32) {
    %c0_i32 = arith.constant 0 : i32
    %c0_i32_0 = arith.constant 0 : i32
    %c0_i32_1 = arith.constant 0 : i32
    return %c0_i32, %c0_i32_0 : i32, i32
  }
  func.func @transform_8(%arg0: i32) -> (i32, i32, i32) {
    %c0_i32 = arith.constant 0 : i32
    %c0_i32_0 = arith.constant 0 : i32
    %c0_i32_1 = arith.constant 0 : i32
    %c0_i32_2 = arith.constant 0 : i32
    return %c0_i32, %c0_i32_0, %c0_i32_1 : i32, i32, i32
  }
  func.func @transform_9(%arg0: i32) -> (i32, i32, i32) {
    %c0_i32 = arith.constant 0 : i32
    %c0_i32_0 = arith.constant 0 : i32
    %c0_i32_1 = arith.constant 0 : i32
    return %arg0, %c0_i32, %c0_i32_0 : i32, i32, i32
  }
}

module attributes {stable_mosaic.version = 11 : i64} {
  func.func @_encoder_kernel(%arg0: i32, %arg1: memref<1x16x64xf32, #tpu.memory_space<vmem>>, %arg2: memref<4x64x16xf32, #tpu.memory_space<vmem>>, %arg3: memref<4x16x4xf32, #tpu.memory_space<vmem>>, %arg4: memref<4x4x1xf32, #tpu.memory_space<vmem>>, %arg5: memref<8x16xf32, #tpu.memory_space<vmem>>, %arg6: memref<8x32xf32, #tpu.memory_space<vmem>>, %arg7: memref<8x32xf32, #tpu.memory_space<vmem>>, %arg8: memref<8x32xf32, #tpu.memory_space<vmem>>, %arg9: memref<4x8x1xf32, #tpu.memory_space<vmem>>, %arg10: memref<1x8x1xf32, #tpu.memory_space<vmem>>) attributes {dimension_semantics = [#tpu.dimension_semantics<parallel>], iteration_bounds = array<i64: 2>, scalar_prefetch = 0 : i64, scratch_operands = 0 : i64, tpu.core_type = #tpu.core_type<tc>, window_params = [{transform_indices = @transform_0, window_bounds = array<i64: 1, 16, 64>}, {pipeline_mode = #tpu.pipeline_mode<synchronous>, transform_indices = @transform_1, window_bounds = array<i64: 4, 64, 16>}, {pipeline_mode = #tpu.pipeline_mode<synchronous>, transform_indices = @transform_2, window_bounds = array<i64: 4, 16, 4>}, {pipeline_mode = #tpu.pipeline_mode<synchronous>, transform_indices = @transform_3, window_bounds = array<i64: 4, 4, 1>}, {pipeline_mode = #tpu.pipeline_mode<synchronous>, transform_indices = @transform_4, window_bounds = array<i64: 8, 16>}, {pipeline_mode = #tpu.pipeline_mode<synchronous>, transform_indices = @transform_5, window_bounds = array<i64: 8, 32>}, {pipeline_mode = #tpu.pipeline_mode<synchronous>, transform_indices = @transform_6, window_bounds = array<i64: 8, 32>}, {pipeline_mode = #tpu.pipeline_mode<synchronous>, transform_indices = @transform_7, window_bounds = array<i64: 8, 32>}, {pipeline_mode = #tpu.pipeline_mode<synchronous>, transform_indices = @transform_8, window_bounds = array<i64: 4, 8, 1>}, {transform_indices = @transform_9, window_bounds = array<i64: 1, 8, 1>}]} {
    %c0 = arith.constant 0 : index
    %c0_0 = arith.constant 0 : index
    %c0_1 = arith.constant 0 : index
    %0 = vector.load %arg1[%c0, %c0_0, %c0_1] : memref<1x16x64xf32, #tpu.memory_space<vmem>>, vector<1x16x64xf32>
    %1 = vector.shape_cast %0 : vector<1x16x64xf32> to vector<16x64xf32>
    %c0_2 = arith.constant 0 : index
    %c0_3 = arith.constant 0 : index
    %2 = vector.load %arg5[%c0_2, %c0_3] : memref<8x16xf32, #tpu.memory_space<vmem>>, vector<8x16xf32>
    %cst = arith.constant dense<0.000000e+00> : vector<8x64xf32>
    %3 = tpu.matmul %2, %1, %cst {dimension_numbers = #tpu.dot_dimension_numbers<[1], [0], [0], [1], [0, 0, 1, 1], [], []>} : vector<8x16xf32>, vector<16x64xf32>, vector<8x64xf32> -> vector<8x64xf32>
    %c0_4 = arith.constant 0 : index
    %c0_5 = arith.constant 0 : index
    %c0_6 = arith.constant 0 : index
    %4 = vector.load %arg9[%c0_4, %c0_5, %c0_6] : memref<4x8x1xf32, #tpu.memory_space<vmem>>, vector<1x8x1xf32>
    %5 = vector.shape_cast %4 : vector<1x8x1xf32> to vector<8x1xf32>
    %6 = vector.broadcast %5 : vector<8x1xf32> to vector<8x64xf32>
    %7 = arith.addf %3, %6 : vector<8x64xf32>
    %cst_7 = arith.constant 0.000000e+00 : f32
    %8 = vector.broadcast %cst_7 : f32 to vector<8x64xf32>
    %9 = arith.maximumf %7, %8 : vector<8x64xf32>
    %c0_8 = arith.constant 0 : index
    %c0_9 = arith.constant 0 : index
    %c0_10 = arith.constant 0 : index
    %10 = vector.load %arg2[%c0_8, %c0_9, %c0_10] : memref<4x64x16xf32, #tpu.memory_space<vmem>>, vector<1x64x16xf32>
    %11 = vector.shape_cast %10 : vector<1x64x16xf32> to vector<64x16xf32>
    %cst_11 = arith.constant dense<0.000000e+00> : vector<8x16xf32>
    %12 = tpu.matmul %9, %11, %cst_11 {dimension_numbers = #tpu.dot_dimension_numbers<[1], [0], [0], [1], [0, 0, 1, 1], [], []>} : vector<8x64xf32>, vector<64x16xf32>, vector<8x16xf32> -> vector<8x16xf32>
    %c1 = arith.constant 1 : index
    %c0_12 = arith.constant 0 : index
    %c0_13 = arith.constant 0 : index
    %13 = vector.load %arg2[%c1, %c0_12, %c0_13] : memref<4x64x16xf32, #tpu.memory_space<vmem>>, vector<1x64x16xf32>
    %14 = vector.shape_cast %13 : vector<1x64x16xf32> to vector<64x16xf32>
    %cst_14 = arith.constant dense<0.000000e+00> : vector<8x16xf32>
    %15 = tpu.matmul %9, %14, %cst_14 {dimension_numbers = #tpu.dot_dimension_numbers<[1], [0], [0], [1], [0, 0, 1, 1], [], []>} : vector<8x64xf32>, vector<64x16xf32>, vector<8x16xf32> -> vector<8x16xf32>
    %c2 = arith.constant 2 : index
    %c0_15 = arith.constant 0 : index
    %c0_16 = arith.constant 0 : index
    %16 = vector.load %arg2[%c2, %c0_15, %c0_16] : memref<4x64x16xf32, #tpu.memory_space<vmem>>, vector<1x64x16xf32>
    %17 = vector.shape_cast %16 : vector<1x64x16xf32> to vector<64x16xf32>
    %cst_17 = arith.constant dense<0.000000e+00> : vector<8x16xf32>
    %18 = tpu.matmul %9, %17, %cst_17 {dimension_numbers = #tpu.dot_dimension_numbers<[1], [0], [0], [1], [0, 0, 1, 1], [], []>} : vector<8x64xf32>, vector<64x16xf32>, vector<8x16xf32> -> vector<8x16xf32>
    %c3 = arith.constant 3 : index
    %c0_18 = arith.constant 0 : index
    %c0_19 = arith.constant 0 : index
    %19 = vector.load %arg2[%c3, %c0_18, %c0_19] : memref<4x64x16xf32, #tpu.memory_space<vmem>>, vector<1x64x16xf32>
    %20 = vector.shape_cast %19 : vector<1x64x16xf32> to vector<64x16xf32>
    %cst_20 = arith.constant dense<0.000000e+00> : vector<8x16xf32>
    %21 = tpu.matmul %9, %20, %cst_20 {dimension_numbers = #tpu.dot_dimension_numbers<[1], [0], [0], [1], [0, 0, 1, 1], [], []>} : vector<8x64xf32>, vector<64x16xf32>, vector<8x16xf32> -> vector<8x16xf32>
    %22 = tpu.concatenate %12, %15, %18, %21 in 0 : vector<8x16xf32>, vector<8x16xf32>, vector<8x16xf32>, vector<8x16xf32> -> vector<32x16xf32>
    %c0_21 = arith.constant 0 : index
    %c0_22 = arith.constant 0 : index
    %23 = vector.load %arg6[%c0_21, %c0_22] : memref<8x32xf32, #tpu.memory_space<vmem>>, vector<8x32xf32>
    %cst_23 = arith.constant dense<0.000000e+00> : vector<8x16xf32>
    %24 = tpu.matmul %23, %22, %cst_23 {dimension_numbers = #tpu.dot_dimension_numbers<[1], [0], [0], [1], [0, 0, 1, 1], [], []>} : vector<8x32xf32>, vector<32x16xf32>, vector<8x16xf32> -> vector<8x16xf32>
    %c1_24 = arith.constant 1 : index
    %c0_25 = arith.constant 0 : index
    %c0_26 = arith.constant 0 : index
    %25 = vector.load %arg9[%c1_24, %c0_25, %c0_26] : memref<4x8x1xf32, #tpu.memory_space<vmem>>, vector<1x8x1xf32>
    %26 = vector.shape_cast %25 : vector<1x8x1xf32> to vector<8x1xf32>
    %27 = vector.broadcast %26 : vector<8x1xf32> to vector<8x16xf32>
    %28 = arith.addf %24, %27 : vector<8x16xf32>
    %cst_27 = arith.constant 0.000000e+00 : f32
    %29 = vector.broadcast %cst_27 : f32 to vector<8x16xf32>
    %30 = arith.maximumf %28, %29 : vector<8x16xf32>
    %c0_28 = arith.constant 0 : index
    %c0_29 = arith.constant 0 : index
    %c0_30 = arith.constant 0 : index
    %31 = vector.load %arg3[%c0_28, %c0_29, %c0_30] : memref<4x16x4xf32, #tpu.memory_space<vmem>>, vector<1x16x4xf32>
    %32 = vector.shape_cast %31 : vector<1x16x4xf32> to vector<16x4xf32>
    %cst_31 = arith.constant dense<0.000000e+00> : vector<8x4xf32>
    %33 = tpu.matmul %30, %32, %cst_31 {dimension_numbers = #tpu.dot_dimension_numbers<[1], [0], [0], [1], [0, 0, 1, 1], [], []>} : vector<8x16xf32>, vector<16x4xf32>, vector<8x4xf32> -> vector<8x4xf32>
    %c1_32 = arith.constant 1 : index
    %c0_33 = arith.constant 0 : index
    %c0_34 = arith.constant 0 : index
    %34 = vector.load %arg3[%c1_32, %c0_33, %c0_34] : memref<4x16x4xf32, #tpu.memory_space<vmem>>, vector<1x16x4xf32>
    %35 = vector.shape_cast %34 : vector<1x16x4xf32> to vector<16x4xf32>
    %cst_35 = arith.constant dense<0.000000e+00> : vector<8x4xf32>
    %36 = tpu.matmul %30, %35, %cst_35 {dimension_numbers = #tpu.dot_dimension_numbers<[1], [0], [0], [1], [0, 0, 1, 1], [], []>} : vector<8x16xf32>, vector<16x4xf32>, vector<8x4xf32> -> vector<8x4xf32>
    %c2_36 = arith.constant 2 : index
    %c0_37 = arith.constant 0 : index
    %c0_38 = arith.constant 0 : index
    %37 = vector.load %arg3[%c2_36, %c0_37, %c0_38] : memref<4x16x4xf32, #tpu.memory_space<vmem>>, vector<1x16x4xf32>
    %38 = vector.shape_cast %37 : vector<1x16x4xf32> to vector<16x4xf32>
    %cst_39 = arith.constant dense<0.000000e+00> : vector<8x4xf32>
    %39 = tpu.matmul %30, %38, %cst_39 {dimension_numbers = #tpu.dot_dimension_numbers<[1], [0], [0], [1], [0, 0, 1, 1], [], []>} : vector<8x16xf32>, vector<16x4xf32>, vector<8x4xf32> -> vector<8x4xf32>
    %c3_40 = arith.constant 3 : index
    %c0_41 = arith.constant 0 : index
    %c0_42 = arith.constant 0 : index
    %40 = vector.load %arg3[%c3_40, %c0_41, %c0_42] : memref<4x16x4xf32, #tpu.memory_space<vmem>>, vector<1x16x4xf32>
    %41 = vector.shape_cast %40 : vector<1x16x4xf32> to vector<16x4xf32>
    %cst_43 = arith.constant dense<0.000000e+00> : vector<8x4xf32>
    %42 = tpu.matmul %30, %41, %cst_43 {dimension_numbers = #tpu.dot_dimension_numbers<[1], [0], [0], [1], [0, 0, 1, 1], [], []>} : vector<8x16xf32>, vector<16x4xf32>, vector<8x4xf32> -> vector<8x4xf32>
    %43 = tpu.concatenate %33, %36, %39, %42 in 0 : vector<8x4xf32>, vector<8x4xf32>, vector<8x4xf32>, vector<8x4xf32> -> vector<32x4xf32>
    %c0_44 = arith.constant 0 : index
    %c0_45 = arith.constant 0 : index
    %44 = vector.load %arg7[%c0_44, %c0_45] : memref<8x32xf32, #tpu.memory_space<vmem>>, vector<8x32xf32>
    %cst_46 = arith.constant dense<0.000000e+00> : vector<8x4xf32>
    %45 = tpu.matmul %44, %43, %cst_46 {dimension_numbers = #tpu.dot_dimension_numbers<[1], [0], [0], [1], [0, 0, 1, 1], [], []>} : vector<8x32xf32>, vector<32x4xf32>, vector<8x4xf32> -> vector<8x4xf32>
    %c2_47 = arith.constant 2 : index
    %c0_48 = arith.constant 0 : index
    %c0_49 = arith.constant 0 : index
    %46 = vector.load %arg9[%c2_47, %c0_48, %c0_49] : memref<4x8x1xf32, #tpu.memory_space<vmem>>, vector<1x8x1xf32>
    %47 = vector.shape_cast %46 : vector<1x8x1xf32> to vector<8x1xf32>
    %48 = vector.broadcast %47 : vector<8x1xf32> to vector<8x4xf32>
    %49 = arith.addf %45, %48 : vector<8x4xf32>
    %cst_50 = arith.constant 0.000000e+00 : f32
    %50 = vector.broadcast %cst_50 : f32 to vector<8x4xf32>
    %51 = arith.maximumf %49, %50 : vector<8x4xf32>
    %c0_51 = arith.constant 0 : index
    %c0_52 = arith.constant 0 : index
    %c0_53 = arith.constant 0 : index
    %52 = vector.load %arg4[%c0_51, %c0_52, %c0_53] : memref<4x4x1xf32, #tpu.memory_space<vmem>>, vector<1x4x1xf32>
    %53 = vector.shape_cast %52 : vector<1x4x1xf32> to vector<4x1xf32>
    %cst_54 = arith.constant dense<0.000000e+00> : vector<8x1xf32>
    %54 = tpu.matmul %51, %53, %cst_54 {dimension_numbers = #tpu.dot_dimension_numbers<[1], [0], [0], [1], [0, 0, 1, 1], [], []>} : vector<8x4xf32>, vector<4x1xf32>, vector<8x1xf32> -> vector<8x1xf32>
    %c1_55 = arith.constant 1 : index
    %c0_56 = arith.constant 0 : index
    %c0_57 = arith.constant 0 : index
    %55 = vector.load %arg4[%c1_55, %c0_56, %c0_57] : memref<4x4x1xf32, #tpu.memory_space<vmem>>, vector<1x4x1xf32>
    %56 = vector.shape_cast %55 : vector<1x4x1xf32> to vector<4x1xf32>
    %cst_58 = arith.constant dense<0.000000e+00> : vector<8x1xf32>
    %57 = tpu.matmul %51, %56, %cst_58 {dimension_numbers = #tpu.dot_dimension_numbers<[1], [0], [0], [1], [0, 0, 1, 1], [], []>} : vector<8x4xf32>, vector<4x1xf32>, vector<8x1xf32> -> vector<8x1xf32>
    %c2_59 = arith.constant 2 : index
    %c0_60 = arith.constant 0 : index
    %c0_61 = arith.constant 0 : index
    %58 = vector.load %arg4[%c2_59, %c0_60, %c0_61] : memref<4x4x1xf32, #tpu.memory_space<vmem>>, vector<1x4x1xf32>
    %59 = vector.shape_cast %58 : vector<1x4x1xf32> to vector<4x1xf32>
    %cst_62 = arith.constant dense<0.000000e+00> : vector<8x1xf32>
    %60 = tpu.matmul %51, %59, %cst_62 {dimension_numbers = #tpu.dot_dimension_numbers<[1], [0], [0], [1], [0, 0, 1, 1], [], []>} : vector<8x4xf32>, vector<4x1xf32>, vector<8x1xf32> -> vector<8x1xf32>
    %c3_63 = arith.constant 3 : index
    %c0_64 = arith.constant 0 : index
    %c0_65 = arith.constant 0 : index
    %61 = vector.load %arg4[%c3_63, %c0_64, %c0_65] : memref<4x4x1xf32, #tpu.memory_space<vmem>>, vector<1x4x1xf32>
    %62 = vector.shape_cast %61 : vector<1x4x1xf32> to vector<4x1xf32>
    %cst_66 = arith.constant dense<0.000000e+00> : vector<8x1xf32>
    %63 = tpu.matmul %51, %62, %cst_66 {dimension_numbers = #tpu.dot_dimension_numbers<[1], [0], [0], [1], [0, 0, 1, 1], [], []>} : vector<8x4xf32>, vector<4x1xf32>, vector<8x1xf32> -> vector<8x1xf32>
    %64 = tpu.concatenate %54, %57, %60, %63 in 0 : vector<8x1xf32>, vector<8x1xf32>, vector<8x1xf32>, vector<8x1xf32> -> vector<32x1xf32>
    %c0_67 = arith.constant 0 : index
    %c0_68 = arith.constant 0 : index
    %65 = vector.load %arg8[%c0_67, %c0_68] : memref<8x32xf32, #tpu.memory_space<vmem>>, vector<8x32xf32>
    %cst_69 = arith.constant dense<0.000000e+00> : vector<8x1xf32>
    %66 = tpu.matmul %65, %64, %cst_69 {dimension_numbers = #tpu.dot_dimension_numbers<[1], [0], [0], [1], [0, 0, 1, 1], [], []>} : vector<8x32xf32>, vector<32x1xf32>, vector<8x1xf32> -> vector<8x1xf32>
    %c3_70 = arith.constant 3 : index
    %c0_71 = arith.constant 0 : index
    %c0_72 = arith.constant 0 : index
    %67 = vector.load %arg9[%c3_70, %c0_71, %c0_72] : memref<4x8x1xf32, #tpu.memory_space<vmem>>, vector<1x8x1xf32>
    %68 = vector.shape_cast %67 : vector<1x8x1xf32> to vector<8x1xf32>
    %69 = arith.addf %66, %68 : vector<8x1xf32>
    %cst_73 = arith.constant 0.000000e+00 : f32
    %70 = vector.broadcast %cst_73 : f32 to vector<8x1xf32>
    %71 = arith.maximumf %69, %70 : vector<8x1xf32>
    %cst_74 = arith.constant dense<0.000000e+00> : vector<8xf32>
    %72 = vector.multi_reduction <add>, %71, %cst_74 [1] : vector<8x1xf32> to vector<8xf32>
    %73 = vector.shape_cast %72 : vector<8xf32> to vector<8x1xf32>
    %cst_75 = arith.constant 1.000000e+00 : f32
    %74 = vector.broadcast %cst_75 : f32 to vector<8x1xf32>
    %75 = arith.mulf %73, %74 : vector<8x1xf32>
    %c0_76 = arith.constant 0 : index
    %c0_77 = arith.constant 0 : index
    %c0_78 = arith.constant 0 : index
    %76 = vector.load %arg10[%c0_76, %c0_77, %c0_78] : memref<1x8x1xf32, #tpu.memory_space<vmem>>, vector<1x8x1xf32>
    %77 = vector.shape_cast %76 : vector<1x8x1xf32> to vector<8x1xf32>
    %78 = vector.shape_cast %75 : vector<8x1xf32> to vector<1x8x1xf32>
    tpu.vector_store %arg10[%c0_76, %c0_77, %c0_78], %78 {strides = array<i32>} : memref<1x8x1xf32, #tpu.memory_space<vmem>>, vector<1x8x1xf32>,
    return
  }
  func.func @transform_0(%arg0: i32) -> (i32, i32, i32) {
    %c0_i32 = arith.constant 0 : i32
    %c0_i32_0 = arith.constant 0 : i32
    %c0_i32_1 = arith.constant 0 : i32
    return %arg0, %c0_i32, %c0_i32_0 : i32, i32, i32
  }
  func.func @transform_1(%arg0: i32) -> (i32, i32, i32) {
    %c0_i32 = arith.constant 0 : i32
    %c0_i32_0 = arith.constant 0 : i32
    %c0_i32_1 = arith.constant 0 : i32
    %c0_i32_2 = arith.constant 0 : i32
    return %c0_i32, %c0_i32_0, %c0_i32_1 : i32, i32, i32
  }
  func.func @transform_2(%arg0: i32) -> (i32, i32, i32) {
    %c0_i32 = arith.constant 0 : i32
    %c0_i32_0 = arith.constant 0 : i32
    %c0_i32_1 = arith.constant 0 : i32
    %c0_i32_2 = arith.constant 0 : i32
    return %c0_i32, %c0_i32_0, %c0_i32_1 : i32, i32, i32
  }
  func.func @transform_3(%arg0: i32) -> (i32, i32, i32) {
    %c0_i32 = arith.constant 0 : i32
    %c0_i32_0 = arith.constant 0 : i32
    %c0_i32_1 = arith.constant 0 : i32
    %c0_i32_2 = arith.constant 0 : i32
    return %c0_i32, %c0_i32_0, %c0_i32_1 : i32, i32, i32
  }
  func.func @transform_4(%arg0: i32) -> (i32, i32) {
    %c0_i32 = arith.constant 0 : i32
    %c0_i32_0 = arith.constant 0 : i32
    %c0_i32_1 = arith.constant 0 : i32
    return %c0_i32, %c0_i32_0 : i32, i32
  }
  func.func @transform_5(%arg0: i32) -> (i32, i32) {
    %c0_i32 = arith.constant 0 : i32
    %c0_i32_0 = arith.constant 0 : i32
    %c0_i32_1 = arith.constant 0 : i32
    return %c0_i32, %c0_i32_0 : i32, i32
  }
  func.func @transform_6(%arg0: i32) -> (i32, i32) {
    %c0_i32 = arith.constant 0 : i32
    %c0_i32_0 = arith.constant 0 : i32
    %c0_i32_1 = arith.constant 0 : i32
    return %c0_i32, %c0_i32_0 : i32, i32
  }
  func.func @transform_7(%arg0: i32) -> (i32, i32) {
    %c0_i32 = arith.constant 0 : i32
    %c0_i32_0 = arith.constant 0 : i32
    %c0_i32_1 = arith.constant 0 : i32
    return %c0_i32, %c0_i32_0 : i32, i32
  }
  func.func @transform_8(%arg0: i32) -> (i32, i32, i32) {
    %c0_i32 = arith.constant 0 : i32
    %c0_i32_0 = arith.constant 0 : i32
    %c0_i32_1 = arith.constant 0 : i32
    %c0_i32_2 = arith.constant 0 : i32
    return %c0_i32, %c0_i32_0, %c0_i32_1 : i32, i32, i32
  }
  func.func @transform_9(%arg0: i32) -> (i32, i32, i32) {
    %c0_i32 = arith.constant 0 : i32
    %c0_i32_0 = arith.constant 0 : i32
    %c0_i32_1 = arith.constant 0 : i32
    return %arg0, %c0_i32, %c0_i32_0 : i32, i32, i32
  }
}

</mosaic_0001>

<llo_original>
// kernel: _lambda_.1
$region0: #{_lambda_.1}
  #allocation0 [shape = 'u32[]', space=smem, size = 0x4, offset = 0x4, fixed_abs, tag = 'smem constant byte address 0x4 - core index']
  #allocation1 [shape = 'u32[144,128]{1,0:T(1,128)}', space=vmem, size = 0x12000, scoped, tag = 'internal scratch']
  %s0 = inlined_call_operand.vmem [shape: f32[2,16,64], index: 0, kind: input, shape index: {}]
  %s1 = inlined_call_operand.vmem [shape: f32[4,64,16], index: 1, kind: input, shape index: {}]
  %s2 = inlined_call_operand.vmem [shape: f32[4,16,4], index: 2, kind: input, shape index: {}]
  %s3 = inlined_call_operand.vmem [shape: f32[4,4,1], index: 3, kind: input, shape index: {}]
  %s4 = inlined_call_operand.vmem [shape: f32[8,16], index: 4, kind: input, shape index: {}]
  %s5 = inlined_call_operand.vmem [shape: f32[8,32], index: 5, kind: input, shape index: {}]
  %s6 = inlined_call_operand.vmem [shape: f32[8,32], index: 6, kind: input, shape index: {}]
  %s7 = inlined_call_operand.vmem [shape: f32[8,32], index: 7, kind: input, shape index: {}]
  %s8 = inlined_call_operand.vmem [shape: f32[4,8,1], index: 8, kind: input, shape index: {}]
  %s9 = inlined_call_operand.vmem [shape: f32[2,8,1], index: 9, kind: output, shape index: {}]
  %s10 = sld [smem:[#allocation0]]
  $region69: #{_lambda_.1} parent=0
    _
  %s12 = ssub.s32 1, %s10
  %s13 = scalar_select 0, %s12, %s10
  loop: start=0, step=1, limit=4
  $region2: #{_lambda_.1} parent=0 // loop_pre_header
    _
  $region3: #{_lambda_.1} parent=0 // loop_header
    %s15 = sphi 0, %s19
    %p16 = scmp.ge.s32.totalorder %s15, 4
    %s25 = sphi 0, %s27
    %s28 = sphi 0, %s25
    %s29 = sphi 0, %s28
    %s45 = sphi 0, %s29
    %s49 = sphi 0, %s49
    %s51 = sphi 0, %s49
    %s52 = sphi 0, %s51
    %s66 = sphi 0, %s52
    %s70 = sphi 0, %s70
    %s72 = sphi 0, %s70
    %s73 = sphi 0, %s72
    %s87 = sphi 0, %s73
    %s91 = sphi 0, %s91
    %s93 = sphi 0, %s91
    %s94 = sphi 0, %s93
    %s108 = sphi 0, %s94
    %s112 = sphi 0, %s112
    %s114 = sphi 0, %s112
    %s115 = sphi 0, %s114
    %s129 = sphi 0, %s115
    %s133 = sphi 0, %s133
    %s135 = sphi 0, %s133
    %s136 = sphi 0, %s135
    %s150 = sphi 0, %s136
    %s154 = sphi 0, %s154
    %s156 = sphi 0, %s154
    %s157 = sphi 0, %s156
    %s171 = sphi 0, %s157
    %s175 = sphi 0, %s175
    %s177 = sphi 0, %s175
    %s178 = sphi 0, %s177
    %s192 = sphi 0, %s178
    %s196 = sphi 0, %s196
    %s198 = sphi 0, %s196
    %s199 = sphi 0, %s198
    %s213 = sphi 0, %s199
    %s219 = sphi 0, %s221
    %s222 = sphi 0, %s219
    %s223 = sphi 0, %s222
    %s239 = sphi 0, %s223
  $region4: #{_lambda_.1} parent=0 // loop_header_branch
    %18 = sbr.rel (%p16) target = $region8
  $region5: #{_lambda_.1} parent=0 // loop_body
    %s20 = ssub.s32 %s15, 1
    %s21 = ssub.s32 %s15, 2
    %s22 = sadd.s32 %s15, 1
    %s23 = ssub.s32 %s15, %s22
    %p24 = scmp.eq.s32.totalorder %s23, 0
    %s26 = sadd.s32 %s25, 1
    %s27 = scalar_select %p24, %s25, %s26
    %p30 = pneg %p24
    %p31 = scmp.eq.s32.totalorder %s15, 1
    %p32 = por %p30, %p31
    %p33 = scmp.ne.s32.totalorder %s25, %s28
    %p34 = scmp.eq.s32.totalorder %s15, 0
    %p35 = por %p33, %p34
    %p36 = scmp.ne.s32.totalorder %s25, %s28
    %p37 = scmp.eq.s32.totalorder %s20, 1
    %p38 = por %p36, %p37
    %p39 = scmp.ne.s32.totalorder %s28, %s29
    %p40 = scmp.eq.s32.totalorder %s20, 0
    %p41 = por %p39, %p40
    %p42 = scmp.ne.s32.totalorder %s28, %s29
    %p43 = scmp.eq.s32.totalorder %s21, 1
    %p44 = por %p42, %p43
    %p46 = scmp.ne.s32.totalorder %s29, %s45
    %p47 = scmp.eq.s32.totalorder %s21, 0
    %p48 = por %p46, %p47
    %s50 = sadd.s32 %s49, 1
    %p53 = scmp.eq.s32.totalorder %s15, 1
    %p54 = scmp.ne.s32.totalorder %s49, %s51
    %p55 = scmp.eq.s32.totalorder %s15, 0
    %p56 = por %p54, %p55
    %p57 = scmp.ne.s32.totalorder %s49, %s51
    %p58 = scmp.eq.s32.totalorder %s20, 1
    %p59 = por %p57, %p58
    %p60 = scmp.ne.s32.totalorder %s51, %s52
    %p61 = scmp.eq.s32.totalorder %s20, 0
    %p62 = por %p60, %p61
    %p63 = scmp.ne.s32.totalorder %s51, %s52
    %p64 = scmp.eq.s32.totalorder %s21, 1
    %p65 = por %p63, %p64
    %p67 = scmp.ne.s32.totalorder %s52, %s66
    %p68 = scmp.eq.s32.totalorder %s21, 0
    %p69 = por %p67, %p68
    %s71 = sadd.s32 %s70, 1
    %p74 = scmp.eq.s32.totalorder %s15, 1
    %p75 = scmp.ne.s32.totalorder %s70, %s72
    %p76 = scmp.eq.s32.totalorder %s15, 0
    %p77 = por %p75, %p76
    %p78 = scmp.ne.s32.totalorder %s70, %s72
    %p79 = scmp.eq.s32.totalorder %s20, 1
    %p80 = por %p78, %p79
    %p81 = scmp.ne.s32.totalorder %s72, %s73
    %p82 = scmp.eq.s32.totalorder %s20, 0
    %p83 = por %p81, %p82
    %p84 = scmp.ne.s32.totalorder %s72, %s73
    %p85 = scmp.eq.s32.totalorder %s21, 1
    %p86 = por %p84, %p85
    %p88 = scmp.ne.s32.totalorder %s73, %s87
    %p89 = scmp.eq.s32.totalorder %s21, 0
    %p90 = por %p88, %p89
    %s92 = sadd.s32 %s91, 1
    %p95 = scmp.eq.s32.totalorder %s15, 1
    %p96 = scmp.ne.s32.totalorder %s91, %s93
    %p97 = scmp.eq.s32.totalorder %s15, 0
    %p98 = por %p96, %p97
    %p99 = scmp.ne.s32.totalorder %s91, %s93
    %p100 = scmp.eq.s32.totalorder %s20, 1
    %p101 = por %p99, %p100
    %p102 = scmp.ne.s32.totalorder %s93, %s94
    %p103 = scmp.eq.s32.totalorder %s20, 0
    %p104 = por %p102, %p103
    %p105 = scmp.ne.s32.totalorder %s93, %s94
    %p106 = scmp.eq.s32.totalorder %s21, 1
    %p107 = por %p105, %p106
    %p109 = scmp.ne.s32.totalorder %s94, %s108
    %p110 = scmp.eq.s32.totalorder %s21, 0
    %p111 = por %p109, %p110
    %s113 = sadd.s32 %s112, 1
    %p116 = scmp.eq.s32.totalorder %s15, 1
    %p117 = scmp.ne.s32.totalorder %s112, %s114
    %p118 = scmp.eq.s32.totalorder %s15, 0
    %p119 = por %p117, %p118
    %p120 = scmp.ne.s32.totalorder %s112, %s114
    %p121 = scmp.eq.s32.totalorder %s20, 1
    %p122 = por %p120, %p121
    %p123 = scmp.ne.s32.totalorder %s114, %s115
    %p124 = scmp.eq.s32.totalorder %s20, 0
    %p125 = por %p123, %p124
    %p126 = scmp.ne.s32.totalorder %s114, %s115
    %p127 = scmp.eq.s32.totalorder %s21, 1
    %p128 = por %p126, %p127
    %p130 = scmp.ne.s32.totalorder %s115, %s129
    %p131 = scmp.eq.s32.totalorder %s21, 0
    %p132 = por %p130, %p131
    %s134 = sadd.s32 %s133, 1
    %p137 = scmp.eq.s32.totalorder %s15, 1
    %p138 = scmp.ne.s32.totalorder %s133, %s135
    %p139 = scmp.eq.s32.totalorder %s15, 0
    %p140 = por %p138, %p139
    %p141 = scmp.ne.s32.totalorder %s133, %s135
    %p142 = scmp.eq.s32.totalorder %s20, 1
    %p143 = por %p141, %p142
    %p144 = scmp.ne.s32.totalorder %s135, %s136
    %p145 = scmp.eq.s32.totalorder %s20, 0
    %p146 = por %p144, %p145
    %p147 = scmp.ne.s32.totalorder %s135, %s136
    %p148 = scmp.eq.s32.totalorder %s21, 1
    %p149 = por %p147, %p148
    %p151 = scmp.ne.s32.totalorder %s136, %s150
    %p152 = scmp.eq.s32.totalorder %s21, 0
    %p153 = por %p151, %p152
    %s155 = sadd.s32 %s154, 1
    %p158 = scmp.eq.s32.totalorder %s15, 1
    %p159 = scmp.ne.s32.totalorder %s154, %s156
    %p160 = scmp.eq.s32.totalorder %s15, 0
    %p161 = por %p159, %p160
    %p162 = scmp.ne.s32.totalorder %s154, %s156
    %p163 = scmp.eq.s32.totalorder %s20, 1
    %p164 = por %p162, %p163
    %p165 = scmp.ne.s32.totalorder %s156, %s157
    %p166 = scmp.eq.s32.totalorder %s20, 0
    %p167 = por %p165, %p166
    %p168 = scmp.ne.s32.totalorder %s156, %s157
    %p169 = scmp.eq.s32.totalorder %s21, 1
    %p170 = por %p168, %p169
    %p172 = scmp.ne.s32.totalorder %s157, %s171
    %p173 = scmp.eq.s32.totalorder %s21, 0
    %p174 = por %p172, %p173
    %s176 = sadd.s32 %s175, 1
    %p179 = scmp.eq.s32.totalorder %s15, 1
    %p180 = scmp.ne.s32.totalorder %s175, %s177
    %p181 = scmp.eq.s32.totalorder %s15, 0
    %p182 = por %p180, %p181
    %p183 = scmp.ne.s32.totalorder %s175, %s177
    %p184 = scmp.eq.s32.totalorder %s20, 1
    %p185 = por %p183, %p184
    %p186 = scmp.ne.s32.totalorder %s177, %s178
    %p187 = scmp.eq.s32.totalorder %s20, 0
    %p188 = por %p186, %p187
    %p189 = scmp.ne.s32.totalorder %s177, %s178
    %p190 = scmp.eq.s32.totalorder %s21, 1
    %p191 = por %p189, %p190
    %p193 = scmp.ne.s32.totalorder %s178, %s192
    %p194 = scmp.eq.s32.totalorder %s21, 0
    %p195 = por %p193, %p194
    %s197 = sadd.s32 %s196, 1
    %p200 = scmp.eq.s32.totalorder %s15, 1
    %p201 = scmp.ne.s32.totalorder %s196, %s198
    %p202 = scmp.eq.s32.totalorder %s15, 0
    %p203 = por %p201, %p202
    %p204 = scmp.ne.s32.totalorder %s196, %s198
    %p205 = scmp.eq.s32.totalorder %s20, 1
    %p206 = por %p204, %p205
    %p207 = scmp.ne.s32.totalorder %s198, %s199
    %p208 = scmp.eq.s32.totalorder %s20, 0
    %p209 = por %p207, %p208
    %p210 = scmp.ne.s32.totalorder %s198, %s199
    %p211 = scmp.eq.s32.totalorder %s21, 1
    %p212 = por %p210, %p211
    %p214 = scmp.ne.s32.totalorder %s199, %s213
    %p215 = scmp.eq.s32.totalorder %s21, 0
    %p216 = por %p214, %p215
    %s217 = ssub.s32 %s15, %s22
    %p218 = scmp.eq.s32.totalorder %s217, 0
    %s220 = sadd.s32 %s219, 1
    %s221 = scalar_select %p218, %s219, %s220
    %p224 = pneg %p218
    %p225 = scmp.eq.s32.totalorder %s15, 1
    %p226 = por %p224, %p225
    %p227 = scmp.ne.s32.totalorder %s219, %s222
    %p228 = scmp.eq.s32.totalorder %s15, 0
    %p229 = por %p227, %p228
    %p230 = scmp.ne.s32.totalorder %s219, %s222
    %p231 = scmp.eq.s32.totalorder %s20, 1
    %p232 = por %p230, %p231
    %p233 = scmp.ne.s32.totalorder %s222, %s223
    %p234 = scmp.eq.s32.totalorder %s20, 0
    %p235 = por %p233, %p234
    %p236 = scmp.ne.s32.totalorder %s222, %s223
    %p237 = scmp.eq.s32.totalorder %s21, 1
    %p238 = por %p236, %p237
    %p240 = scmp.ne.s32.totalorder %s223, %s239
    %p241 = scmp.eq.s32.totalorder %s21, 0
    %p242 = por %p240, %p241
    %p243 = scmp.le.s32.totalorder 1, %s15
    %p244 = scmp.lt.s32.totalorder %s15, 3
    %p245 = pnand %p243, %p244
    %p246 = pneg %p245
    // Predicated region
    $region9: #{_lambda_.1} parent=5 // pred_check
      _
    $region10: #{_lambda_.1} parent=5 // pred_check_branch
      %248 = sbr.rel (%p245) target = $region12
    $region11: #{_lambda_.1} parent=5 // pred_region
      %s249 = ssub.s32 %s15, 1
      // Predicated region
      $region13: #{_lambda_.1} parent=11 // pred_check
        %p250 = pneg %p62
      $region14: #{_lambda_.1} parent=11 // pred_check_branch
        %252 = sbr.rel (%p250) target = $region16
      $region15: #{_lambda_.1} parent=11 // pred_region
        _
      $region16: #{_lambda_.1} parent=11 // pred_fallthru
        _
      // Predicated region
      $region17: #{_lambda_.1} parent=11 // pred_check
        %p253 = pneg %p83
      $region18: #{_lambda_.1} parent=11 // pred_check_branch
        %255 = sbr.rel (%p253) target = $region20
      $region19: #{_lambda_.1} parent=11 // pred_region
        _
      $region20: #{_lambda_.1} parent=11 // pred_fallthru
        _
      // Predicated region
      $region21: #{_lambda_.1} parent=11 // pred_check
        %p256 = pneg %p104
      $region22: #{_lambda_.1} parent=11 // pred_check_branch
        %258 = sbr.rel (%p256) target = $region24
      $region23: #{_lambda_.1} parent=11 // pred_region
        _
      $region24: #{_lambda_.1} parent=11 // pred_fallthru
        _
      // Predicated region
      $region25: #{_lambda_.1} parent=11 // pred_check
        %p259 = pneg %p125
      $region26: #{_lambda_.1} parent=11 // pred_check_branch
        %261 = sbr.rel (%p259) target = $region28
      $region27: #{_lambda_.1} parent=11 // pred_region
        _
      $region28: #{_lambda_.1} parent=11 // pred_fallthru
        _
      // Predicated region
      $region29: #{_lambda_.1} parent=11 // pred_check
        %p262 = pneg %p146
      $region30: #{_lambda_.1} parent=11 // pred_check_branch
        %264 = sbr.rel (%p262) target = $region32
      $region31: #{_lambda_.1} parent=11 // pred_region
        _
      $region32: #{_lambda_.1} parent=11 // pred_fallthru
        _
      // Predicated region
      $region33: #{_lambda_.1} parent=11 // pred_check
        %p265 = pneg %p167
      $region34: #{_lambda_.1} parent=11 // pred_check_branch
        %267 = sbr.rel (%p265) target = $region36
      $region35: #{_lambda_.1} parent=11 // pred_region
        _
      $region36: #{_lambda_.1} parent=11 // pred_fallthru
        _
      // Predicated region
      $region37: #{_lambda_.1} parent=11 // pred_check
        %p268 = pneg %p188
      $region38: #{_lambda_.1} parent=11 // pred_check_branch
        %270 = sbr.rel (%p268) target = $region40
      $region39: #{_lambda_.1} parent=11 // pred_region
        _
      $region40: #{_lambda_.1} parent=11 // pred_fallthru
        _
      // Predicated region
      $region41: #{_lambda_.1} parent=11 // pred_check
        %p271 = pneg %p209
      $region42: #{_lambda_.1} parent=11 // pred_check_branch
        %273 = sbr.rel (%p271) target = $region44
      $region43: #{_lambda_.1} parent=11 // pred_region
        _
      $region44: #{_lambda_.1} parent=11 // pred_fallthru
        _
    $region12: #{_lambda_.1} parent=5 // pred_fallthru
      _
    %p274 = scmp.lt.s32.totalorder %s15, 2
    // Predicated region
    $region45: #{_lambda_.1} parent=5 // pred_check
      %p275 = pneg %p274
    $region46: #{_lambda_.1} parent=5 // pred_check_branch
      %277 = sbr.rel (%p275) target = $region48
    $region47: #{_lambda_.1} parent=5 // pred_region
      // Predicated region
      $region49: #{_lambda_.1} parent=47 // pred_check
        %p278 = pneg %p35
      $region50: #{_lambda_.1} parent=47 // pred_check_branch
        %280 = sbr.rel (%p278) target = $region52
      $region51: #{_lambda_.1} parent=47 // pred_region
        %p281 = scmp.lt.s32.totalorder %s15, 1
        %s282 = scalar_select %p281, %s15, 1
        %s283 = smul.addr %s282, 2
        %s284 = smul.addr %s283, 8
        %s285 = scalar_lea.vmem %s0, %s284
      $region52: #{_lambda_.1} parent=47 // pred_fallthru
        _
    $region48: #{_lambda_.1} parent=5 // pred_fallthru
      _
    %p286 = scmp.le.s32.totalorder 1, %s15
    %p287 = scmp.lt.s32.totalorder %s15, 3
    %p288 = pnand %p286, %p287
    %p289 = pneg %p288
    // Predicated region
    $region53: #{_lambda_.1} parent=5 // pred_check
      _
    $region54: #{_lambda_.1} parent=5 // pred_check_branch
      %291 = sbr.rel (%p288) target = $region56
    $region55: #{_lambda_.1} parent=5 // pred_region
      %s292 = ssub.s32 %s15, 1
      %p293 = scmp.lt.s32.totalorder %s20, 1
      %s294 = scalar_select %p293, %s20, 1
      %s295 = smul.addr %s294, 2
      %s296 = smul.addr %s295, 8
      %s297 = scalar_lea.vmem %s0, %s296
      %p298 = pneg %p41
      %p299 = pneg %p38
      %p300 = pneg %p62
      %p301 = pneg %p59
      %p302 = pneg %p83
      %p303 = pneg %p80
      %p304 = pneg %p104
      %p305 = pneg %p101
      %p306 = pneg %p125
      %p307 = pneg %p122
      %p308 = pneg %p146
      %p309 = pneg %p143
      %p310 = pneg %p167
      %p311 = pneg %p164
      %p312 = pneg %p188
      %p313 = pneg %p185
      %p314 = pneg %p209
      %p315 = pneg %p206
      %p316 = pneg %p235
      %p317 = pneg %p232
      %p318 = scmp.lt.s32.totalorder %s20, 1
      %s319 = scalar_select %p318, %s20, 1
      %s320 = smul.addr %s319, 8
      %s321 = scalar_lea.vmem %s9, %s320
      %p322 = scmp.lt.s32.totalorder %s20, 1
      %s323 = scalar_select %p322, %s20, 1
      %s324 = smul.addr %s323, 2
      %s325 = smul.addr %s324, 8
      %s326 = scalar_lea.vmem %s0, %s325
      %p327 = scmp.lt.s32.totalorder %s20, 1
      %s328 = scalar_select %p327, %s20, 1
      %s329 = smul.addr %s328, 8
      %s330 = scalar_lea.vmem %s9, %s329
      %v331 = vld [vmem:[%s326] sm:$0xff]
      %v332 = vld [vmem:[%s326 + $0x8] sm:$0xff]
      %v333 = vld [vmem:[%s4] sm:$0xff]
      %v334 = vld [vmem:[%s8] sm:$0xff]
      %336 = vset.pattern.permute.xlu0 0
      %337 = vperm.xlu0 %336, %v334
      %v338 = vpop.permute.xlu0 %337
      %vm340 = vcmask 130048
      %v342 = vsel %vm340, %v333, 0
      %344 = vmatprep.subr.mxu0 0.0
      %345 = vmatpush1.msra.mxu0 %v331
      %346 = vmatprep.subr.mxu0 0.0
      %347 = vmatpush1.msra.mxu0 %v332
      %348 = vmatprep.subr.mxu0 0.0
      %349 = vmatpush1.msra.mxu0 0.0
      %350 = vmatprep.subr.mxu0 0.0
      %351 = vmatpush1.msra.mxu0 0.0
      %352 = vmatprep.subr.mxu0 0.0
      %353 = vmatpush1.msra.mxu0 0.0
      %354 = vmatprep.subr.mxu0 0.0
      %355 = vmatpush1.msra.mxu0 0.0
      %356 = vmatprep.subr.mxu0 0.0
      %357 = vmatpush1.msra.mxu0 0.0
      %358 = vmatprep.subr.mxu0 0.0
      %359 = vmatpush1.msra.mxu0 0.0
      %360 = vmatprep.subr.mxu0 0.0
      %361 = vmatpush1.msra.mxu0 0.0
      %362 = vmatprep.subr.mxu0 0.0
      %363 = vmatpush1.msra.mxu0 0.0
      %364 = vmatprep.subr.mxu0 0.0
      %365 = vmatpush1.msra.mxu0 0.0
      %366 = vmatprep.subr.mxu0 0.0
      %367 = vmatpush1.msra.mxu0 0.0
      %368 = vmatprep.subr.mxu0 0.0
      %369 = vmatpush1.msra.mxu0 0.0
      %370 = vmatprep.subr.mxu0 0.0
      %371 = vmatpush1.msra.mxu0 0.0
      %372 = vmatprep.subr.mxu0 0.0
      %373 = vmatpush1.msra.mxu0 0.0
      %374 = vmatprep.subr.mxu0 0.0
      %375 = vmatpush1.msra.mxu0 0.0
      %376 = vmatprep.subr.mxu0 0.0
      %377 = vmatpush1.msra.mxu0 0.0
      %378 = vmatprep.subr.mxu0 0.0
      %379 = vmatpush1.msra.mxu0 0.0
      %380 = vmatprep.subr.mxu0 0.0
      %381 = vmatpush1.msra.mxu0 0.0
      %382 = vmatprep.subr.mxu0 0.0
      %383 = vmatpush1.msra.mxu0 0.0
      %384 = vmatprep.subr.mxu0 0.0
      %385 = vmatpush1.msra.mxu0 0.0
      %386 = vmatprep.subr.mxu0 0.0
      %387 = vmatpush1.msra.mxu0 0.0
      %388 = vmatprep.subr.mxu0 0.0
      %389 = vmatpush1.msra.mxu0 0.0
      %390 = vmatprep.subr.mxu0 0.0
      %391 = vmatpush1.msra.mxu0 0.0
      %392 = vmatprep.subr.mxu0 0.0
      %393 = vmatpush1.msra.mxu0 0.0
      %394 = vmatprep.subr.mxu0 0.0
      %395 = vmatpush1.msra.mxu0 0.0
      %396 = vmatprep.subr.mxu0 0.0
      %397 = vmatpush1.msra.mxu0 0.0
      %398 = vmatprep.subr.mxu0 0.0
      %399 = vmatpush1.msra.mxu0 0.0
      %400 = vmatprep.subr.mxu0 0.0
      %401 = vmatpush1.msra.mxu0 0.0
      %402 = vmatprep.subr.mxu0 0.0
      %403 = vmatpush1.msra.mxu0 0.0
      %404 = vmatprep.subr.mxu0 0.0
      %405 = vmatpush1.msra.mxu0 0.0
      %406 = vmatprep.subr.mxu0 0.0
      %407 = vmatpush1.msra.mxu0 0.0
      %408 = vmatprep.mubr.f32.mxu0 0.0
      %409 = vmatmul.mubr.f32.gmra.mrb[0].mxu0 %v342
      %v410 = vpop.f32.mrb[0].mxu0
      %v411 = vadd.f32 %v338, %v410
      %v412 = vpop.f32.mrb[0].mxu0
      %413 = vdwg.mxu0
      %v414 = vmax.f32 %v411, 0.0
      %v415 = vld [vmem:[%s1] sm:$0xff]
      %v416 = vld [vmem:[%s1 + $0x8] sm:$0xff]
      %v417 = vld [vmem:[%s1 + $0x10] sm:$0xff]
      %v418 = vld [vmem:[%s1 + $0x18] sm:$0xff]
      %v419 = vld [vmem:[%s1 + $0x20] sm:$0xff]
      %v420 = vld [vmem:[%s1 + $0x28] sm:$0xff]
      %v421 = vld [vmem:[%s1 + $0x30] sm:$0xff]
      %v422 = vld [vmem:[%s1 + $0x38] sm:$0xff]
      %vm423 = vcmask 523264
      %v425 = vsel %vm423, %v414, 0
      %427 = vmatprep.subr.mxu0 0.0
      %428 = vmatpush1.msra.mxu0 %v415
      %429 = vmatprep.subr.mxu0 0.0
      %430 = vmatpush1.msra.mxu0 %v416
      %431 = vmatprep.subr.mxu0 0.0
      %432 = vmatpush1.msra.mxu0 %v417
      %433 = vmatprep.subr.mxu0 0.0
      %434 = vmatpush1.msra.mxu0 %v418
      %435 = vmatprep.subr.mxu0 0.0
      %436 = vmatpush1.msra.mxu0 %v419
      %437 = vmatprep.subr.mxu0 0.0
      %438 = vmatpush1.msra.mxu0 %v420
      %439 = vmatprep.subr.mxu0 0.0
      %440 = vmatpush1.msra.mxu0 %v421
      %441 = vmatprep.subr.mxu0 0.0
      %442 = vmatpush1.msra.mxu0 %v422
      %443 = vmatprep.subr.mxu0 0.0
      %444 = vmatpush1.msra.mxu0 0.0
      %445 = vmatprep.subr.mxu0 0.0
      %446 = vmatpush1.msra.mxu0 0.0
      %447 = vmatprep.subr.mxu0 0.0
      %448 = vmatpush1.msra.mxu0 0.0
      %449 = vmatprep.subr.mxu0 0.0
      %450 = vmatpush1.msra.mxu0 0.0
      %451 = vmatprep.subr.mxu0 0.0
      %452 = vmatpush1.msra.mxu0 0.0
      %453 = vmatprep.subr.mxu0 0.0
      %454 = vmatpush1.msra.mxu0 0.0
      %455 = vmatprep.subr.mxu0 0.0
      %456 = vmatpush1.msra.mxu0 0.0
      %457 = vmatprep.subr.mxu0 0.0
      %458 = vmatpush1.msra.mxu0 0.0
      %459 = vmatprep.subr.mxu0 0.0
      %460 = vmatpush1.msra.mxu0 0.0
      %461 = vmatprep.subr.mxu0 0.0
      %462 = vmatpush1.msra.mxu0 0.0
      %463 = vmatprep.subr.mxu0 0.0
      %464 = vmatpush1.msra.mxu0 0.0
      %465 = vmatprep.subr.mxu0 0.0
      %466 = vmatpush1.msra.mxu0 0.0
      %467 = vmatprep.subr.mxu0 0.0
      %468 = vmatpush1.msra.mxu0 0.0
      %469 = vmatprep.subr.mxu0 0.0
      %470 = vmatpush1.msra.mxu0 0.0
      %471 = vmatprep.subr.mxu0 0.0
      %472 = vmatpush1.msra.mxu0 0.0
      %473 = vmatprep.subr.mxu0 0.0
      %474 = vmatpush1.msra.mxu0 0.0
      %475 = vmatprep.subr.mxu0 0.0
      %476 = vmatpush1.msra.mxu0 0.0
      %477 = vmatprep.subr.mxu0 0.0
      %478 = vmatpush1.msra.mxu0 0.0
      %479 = vmatprep.subr.mxu0 0.0
      %480 = vmatpush1.msra.mxu0 0.0
      %481 = vmatprep.subr.mxu0 0.0
      %482 = vmatpush1.msra.mxu0 0.0
      %483 = vmatprep.subr.mxu0 0.0
      %484 = vmatpush1.msra.mxu0 0.0
      %485 = vmatprep.subr.mxu0 0.0
      %486 = vmatpush1.msra.mxu0 0.0
      %487 = vmatprep.subr.mxu0 0.0
      %488 = vmatpush1.msra.mxu0 0.0
      %489 = vmatprep.subr.mxu0 0.0
      %490 = vmatpush1.msra.mxu0 0.0
      %491 = vmatprep.mubr.f32.mxu0 0.0
      %492 = vmatmul.mubr.f32.gmra.mrb[0].mxu0 %v425
      %v493 = vpop.f32.mrb[0].mxu0
      %v494 = vadd.f32 0.0, %v493
      %v495 = vpop.f32.mrb[0].mxu0
      %496 = vdwg.mxu0
      %s497 = scalar_lea.vmem %s1, 64
      %v498 = vld [vmem:[%s497] sm:$0xff]
      %v499 = vld [vmem:[%s497 + $0x8] sm:$0xff]
      %v500 = vld [vmem:[%s497 + $0x10] sm:$0xff]
      %v501 = vld [vmem:[%s497 + $0x18] sm:$0xff]
      %v502 = vld [vmem:[%s497 + $0x20] sm:$0xff]
      %v503 = vld [vmem:[%s497 + $0x28] sm:$0xff]
      %v504 = vld [vmem:[%s497 + $0x30] sm:$0xff]
      %v505 = vld [vmem:[%s497 + $0x38] sm:$0xff]
      %506 = vmatprep.subr.mxu0 0.0
      %507 = vmatpush1.msra.mxu0 %v498
      %508 = vmatprep.subr.mxu0 0.0
      %509 = vmatpush1.msra.mxu0 %v499
      %510 = vmatprep.subr.mxu0 0.0
      %511 = vmatpush1.msra.mxu0 %v500
      %512 = vmatprep.subr.mxu0 0.0
      %513 = vmatpush1.msra.mxu0 %v501
      %514 = vmatprep.subr.mxu0 0.0
      %515 = vmatpush1.msra.mxu0 %v502
      %516 = vmatprep.subr.mxu0 0.0
      %517 = vmatpush1.msra.mxu0 %v503
      %518 = vmatprep.subr.mxu0 0.0
      %519 = vmatpush1.msra.mxu0 %v504
      %520 = vmatprep.subr.mxu0 0.0
      %521 = vmatpush1.msra.mxu0 %v505
      %522 = vmatprep.subr.mxu0 0.0
      %523 = vmatpush1.msra.mxu0 0.0
      %524 = vmatprep.subr.mxu0 0.0
      %525 = vmatpush1.msra.mxu0 0.0
      %526 = vmatprep.subr.mxu0 0.0
      %527 = vmatpush1.msra.mxu0 0.0
      %528 = vmatprep.subr.mxu0 0.0
      %529 = vmatpush1.msra.mxu0 0.0
      %530 = vmatprep.subr.mxu0 0.0
      %531 = vmatpush1.msra.mxu0 0.0
      %532 = vmatprep.subr.mxu0 0.0
      %533 = vmatpush1.msra.mxu0 0.0
      %534 = vmatprep.subr.mxu0 0.0
      %535 = vmatpush1.msra.mxu0 0.0
      %536 = vmatprep.subr.mxu0 0.0
      %537 = vmatpush1.msra.mxu0 0.0
      %538 = vmatprep.subr.mxu0 0.0
      %539 = vmatpush1.msra.mxu0 0.0
      %540 = vmatprep.subr.mxu0 0.0
      %541 = vmatpush1.msra.mxu0 0.0
      %542 = vmatprep.subr.mxu0 0.0
      %543 = vmatpush1.msra.mxu0 0.0
      %544 = vmatprep.subr.mxu0 0.0
      %545 = vmatpush1.msra.mxu0 0.0
      %546 = vmatprep.subr.mxu0 0.0
      %547 = vmatpush1.msra.mxu0 0.0
      %548 = vmatprep.subr.mxu0 0.0
      %549 = vmatpush1.msra.mxu0 0.0
      %550 = vmatprep.subr.mxu0 0.0
      %551 = vmatpush1.msra.mxu0 0.0
      %552 = vmatprep.subr.mxu0 0.0
      %553 = vmatpush1.msra.mxu0 0.0
      %554 = vmatprep.subr.mxu0 0.0
      %555 = vmatpush1.msra.mxu0 0.0
      %556 = vmatprep.subr.mxu0 0.0
      %557 = vmatpush1.msra.mxu0 0.0
      %558 = vmatprep.subr.mxu0 0.0
      %559 = vmatpush1.msra.mxu0 0.0
      %560 = vmatprep.subr.mxu0 0.0
      %561 = vmatpush1.msra.mxu0 0.0
      %562 = vmatprep.subr.mxu0 0.0
      %563 = vmatpush1.msra.mxu0 0.0
      %564 = vmatprep.subr.mxu0 0.0
      %565 = vmatpush1.msra.mxu0 0.0
      %566 = vmatprep.subr.mxu0 0.0
      %567 = vmatpush1.msra.mxu0 0.0
      %568 = vmatprep.subr.mxu0 0.0
      %569 = vmatpush1.msra.mxu0 0.0
      %570 = vmatprep.mubr.f32.mxu0 0.0
      %571 = vmatmul.mubr.f32.gmra.mrb[0].mxu0 %v425
      %v572 = vpop.f32.mrb[0].mxu0
      %v573 = vadd.f32 0.0, %v572
      %v574 = vpop.f32.mrb[0].mxu0
      %575 = vdwg.mxu0
      %s576 = scalar_lea.vmem %s1, 128
      %v577 = vld [vmem:[%s576] sm:$0xff]
      %v578 = vld [vmem:[%s576 + $0x8] sm:$0xff]
      %v579 = vld [vmem:[%s576 + $0x10] sm:$0xff]
      %v580 = vld [vmem:[%s576 + $0x18] sm:$0xff]
      %v581 = vld [vmem:[%s576 + $0x20] sm:$0xff]
      %v582 = vld [vmem:[%s576 + $0x28] sm:$0xff]
      %v583 = vld [vmem:[%s576 + $0x30] sm:$0xff]
      %v584 = vld [vmem:[%s576 + $0x38] sm:$0xff]
      %585 = vmatprep.subr.mxu0 0.0
      %586 = vmatpush1.msra.mxu0 %v577
      %587 = vmatprep.subr.mxu0 0.0
      %588 = vmatpush1.msra.mxu0 %v578
      %589 = vmatprep.subr.mxu0 0.0
      %590 = vmatpush1.msra.mxu0 %v579
      %591 = vmatprep.subr.mxu0 0.0
      %592 = vmatpush1.msra.mxu0 %v580
      %593 = vmatprep.subr.mxu0 0.0
      %594 = vmatpush1.msra.mxu0 %v581
      %595 = vmatprep.subr.mxu0 0.0
      %596 = vmatpush1.msra.mxu0 %v582
      %597 = vmatprep.subr.mxu0 0.0
      %598 = vmatpush1.msra.mxu0 %v583
      %599 = vmatprep.subr.mxu0 0.0
      %600 = vmatpush1.msra.mxu0 %v584
      %601 = vmatprep.subr.mxu0 0.0
      %602 = vmatpush1.msra.mxu0 0.0
      %603 = vmatprep.subr.mxu0 0.0
      %604 = vmatpush1.msra.mxu0 0.0
      %605 = vmatprep.subr.mxu0 0.0
      %606 = vmatpush1.msra.mxu0 0.0
      %607 = vmatprep.subr.mxu0 0.0
      %608 = vmatpush1.msra.mxu0 0.0
      %609 = vmatprep.subr.mxu0 0.0
      %610 = vmatpush1.msra.mxu0 0.0
      %611 = vmatprep.subr.mxu0 0.0
      %612 = vmatpush1.msra.mxu0 0.0
      %613 = vmatprep.subr.mxu0 0.0
      %614 = vmatpush1.msra.mxu0 0.0
      %615 = vmatprep.subr.mxu0 0.0
      %616 = vmatpush1.msra.mxu0 0.0
      %617 = vmatprep.subr.mxu0 0.0
      %618 = vmatpush1.msra.mxu0 0.0
      %619 = vmatprep.subr.mxu0 0.0
      %620 = vmatpush1.msra.mxu0 0.0
      %621 = vmatprep.subr.mxu0 0.0
      %622 = vmatpush1.msra.mxu0 0.0
      %623 = vmatprep.subr.mxu0 0.0
      %624 = vmatpush1.msra.mxu0 0.0
      %625 = vmatprep.subr.mxu0 0.0
      %626 = vmatpush1.msra.mxu0 0.0
      %627 = vmatprep.subr.mxu0 0.0
      %628 = vmatpush1.msra.mxu0 0.0
      %629 = vmatprep.subr.mxu0 0.0
      %630 = vmatpush1.msra.mxu0 0.0
      %631 = vmatprep.subr.mxu0 0.0
      %632 = vmatpush1.msra.mxu0 0.0
      %633 = vmatprep.subr.mxu0 0.0
      %634 = vmatpush1.msra.mxu0 0.0
      %635 = vmatprep.subr.mxu0 0.0
      %636 = vmatpush1.msra.mxu0 0.0
      %637 = vmatprep.subr.mxu0 0.0
      %638 = vmatpush1.msra.mxu0 0.0
      %639 = vmatprep.subr.mxu0 0.0
      %640 = vmatpush1.msra.mxu0 0.0
      %641 = vmatprep.subr.mxu0 0.0
      %642 = vmatpush1.msra.mxu0 0.0
      %643 = vmatprep.subr.mxu0 0.0
      %644 = vmatpush1.msra.mxu0 0.0
      %645 = vmatprep.subr.mxu0 0.0
      %646 = vmatpush1.msra.mxu0 0.0
      %647 = vmatprep.subr.mxu0 0.0
      %648 = vmatpush1.msra.mxu0 0.0
      %649 = vmatprep.mubr.f32.mxu0 0.0
      %650 = vmatmul.mubr.f32.gmra.mrb[0].mxu0 %v425
      %v651 = vpop.f32.mrb[0].mxu0
      %v652 = vadd.f32 0.0, %v651
      %v653 = vpop.f32.mrb[0].mxu0
      %654 = vdwg.mxu0
      %s655 = scalar_lea.vmem %s1, 192
      %v656 = vld [vmem:[%s655] sm:$0xff]
      %v657 = vld [vmem:[%s655 + $0x8] sm:$0xff]
      %v658 = vld [vmem:[%s655 + $0x10] sm:$0xff]
      %v659 = vld [vmem:[%s655 + $0x18] sm:$0xff]
      %v660 = vld [vmem:[%s655 + $0x20] sm:$0xff]
      %v661 = vld [vmem:[%s655 + $0x28] sm:$0xff]
      %v662 = vld [vmem:[%s655 + $0x30] sm:$0xff]
      %v663 = vld [vmem:[%s655 + $0x38] sm:$0xff]
      %664 = vmatprep.subr.mxu0 0.0
      %665 = vmatpush1.msra.mxu0 %v656
      %666 = vmatprep.subr.mxu0 0.0
      %667 = vmatpush1.msra.mxu0 %v657
      %668 = vmatprep.subr.mxu0 0.0
      %669 = vmatpush1.msra.mxu0 %v658
      %670 = vmatprep.subr.mxu0 0.0
      %671 = vmatpush1.msra.mxu0 %v659
      %672 = vmatprep.subr.mxu0 0.0
      %673 = vmatpush1.msra.mxu0 %v660
      %674 = vmatprep.subr.mxu0 0.0
      %675 = vmatpush1.msra.mxu0 %v661
      %676 = vmatprep.subr.mxu0 0.0
      %677 = vmatpush1.msra.mxu0 %v662
      %678 = vmatprep.subr.mxu0 0.0
      %679 = vmatpush1.msra.mxu0 %v663
      %680 = vmatprep.subr.mxu0 0.0
      %681 = vmatpush1.msra.mxu0 0.0
      %682 = vmatprep.subr.mxu0 0.0
      %683 = vmatpush1.msra.mxu0 0.0
      %684 = vmatprep.subr.mxu0 0.0
      %685 = vmatpush1.msra.mxu0 0.0
      %686 = vmatprep.subr.mxu0 0.0
      %687 = vmatpush1.msra.mxu0 0.0
      %688 = vmatprep.subr.mxu0 0.0
      %689 = vmatpush1.msra.mxu0 0.0
      %690 = vmatprep.subr.mxu0 0.0
      %691 = vmatpush1.msra.mxu0 0.0
      %692 = vmatprep.subr.mxu0 0.0
      %693 = vmatpush1.msra.mxu0 0.0
      %694 = vmatprep.subr.mxu0 0.0
      %695 = vmatpush1.msra.mxu0 0.0
      %696 = vmatprep.subr.mxu0 0.0
      %697 = vmatpush1.msra.mxu0 0.0
      %698 = vmatprep.subr.mxu0 0.0
      %699 = vmatpush1.msra.mxu0 0.0
      %700 = vmatprep.subr.mxu0 0.0
      %701 = vmatpush1.msra.mxu0 0.0
      %702 = vmatprep.subr.mxu0 0.0
      %703 = vmatpush1.msra.mxu0 0.0
      %704 = vmatprep.subr.mxu0 0.0
      %705 = vmatpush1.msra.mxu0 0.0
      %706 = vmatprep.subr.mxu0 0.0
      %707 = vmatpush1.msra.mxu0 0.0
      %708 = vmatprep.subr.mxu0 0.0
      %709 = vmatpush1.msra.mxu0 0.0
      %710 = vmatprep.subr.mxu0 0.0
      %711 = vmatpush1.msra.mxu0 0.0
      %712 = vmatprep.subr.mxu0 0.0
      %713 = vmatpush1.msra.mxu0 0.0
      %714 = vmatprep.subr.mxu0 0.0
      %715 = vmatpush1.msra.mxu0 0.0
      %716 = vmatprep.subr.mxu0 0.0
      %717 = vmatpush1.msra.mxu0 0.0
      %718 = vmatprep.subr.mxu0 0.0
      %719 = vmatpush1.msra.mxu0 0.0
      %720 = vmatprep.subr.mxu0 0.0
      %721 = vmatpush1.msra.mxu0 0.0
      %722 = vmatprep.subr.mxu0 0.0
      %723 = vmatpush1.msra.mxu0 0.0
      %724 = vmatprep.subr.mxu0 0.0
      %725 = vmatpush1.msra.mxu0 0.0
      %726 = vmatprep.subr.mxu0 0.0
      %727 = vmatpush1.msra.mxu0 0.0
      %728 = vmatprep.mubr.f32.mxu0 0.0
      %729 = vmatmul.mubr.f32.gmra.mrb[0].mxu0 %v425
      %v730 = vpop.f32.mrb[0].mxu0
      %v731 = vadd.f32 0.0, %v730
      %v732 = vpop.f32.mrb[0].mxu0
      %733 = vdwg.mxu0
      %v734 = vld [vmem:[%s5] sm:$0xff]
      %s735 = scalar_lea.vmem %s8, 8
      %v736 = vld [vmem:[%s735] sm:$0xff]
      %738 = vset.pattern.permute.xlu0 0
      %739 = vperm.xlu0 %738, %v736
      %v740 = vpop.permute.xlu0 %739
      %vm742 = vcmask 261120
      %v744 = vsel %vm742, %v734, 0
      %746 = vmatprep.subr.mxu0 0.0
      %747 = vmatpush1.msra.mxu0 %v494
      %748 = vmatprep.subr.mxu0 0.0
      %749 = vmatpush1.msra.mxu0 %v573
      %750 = vmatprep.subr.mxu0 0.0
      %751 = vmatpush1.msra.mxu0 %v652
      %752 = vmatprep.subr.mxu0 0.0
      %753 = vmatpush1.msra.mxu0 %v731
      %754 = vmatprep.subr.mxu0 0.0
      %755 = vmatpush1.msra.mxu0 0.0
      %756 = vmatprep.subr.mxu0 0.0
      %757 = vmatpush1.msra.mxu0 0.0
      %758 = vmatprep.subr.mxu0 0.0
      %759 = vmatpush1.msra.mxu0 0.0
      %760 = vmatprep.subr.mxu0 0.0
      %761 = vmatpush1.msra.mxu0 0.0
      %762 = vmatprep.subr.mxu0 0.0
      %763 = vmatpush1.msra.mxu0 0.0
      %764 = vmatprep.subr.mxu0 0.0
      %765 = vmatpush1.msra.mxu0 0.0
      %766 = vmatprep.subr.mxu0 0.0
      %767 = vmatpush1.msra.mxu0 0.0
      %768 = vmatprep.subr.mxu0 0.0
      %769 = vmatpush1.msra.mxu0 0.0
      %770 = vmatprep.subr.mxu0 0.0
      %771 = vmatpush1.msra.mxu0 0.0
      %772 = vmatprep.subr.mxu0 0.0
      %773 = vmatpush1.msra.mxu0 0.0
      %774 = vmatprep.subr.mxu0 0.0
      %775 = vmatpush1.msra.mxu0 0.0
      %776 = vmatprep.subr.mxu0 0.0
      %777 = vmatpush1.msra.mxu0 0.0
      %778 = vmatprep.subr.mxu0 0.0
      %779 = vmatpush1.msra.mxu0 0.0
      %780 = vmatprep.subr.mxu0 0.0
      %781 = vmatpush1.msra.mxu0 0.0
      %782 = vmatprep.subr.mxu0 0.0
      %783 = vmatpush1.msra.mxu0 0.0
      %784 = vmatprep.subr.mxu0 0.0
      %785 = vmatpush1.msra.mxu0 0.0
      %786 = vmatprep.subr.mxu0 0.0
      %787 = vmatpush1.msra.mxu0 0.0
      %788 = vmatprep.subr.mxu0 0.0
      %789 = vmatpush1.msra.mxu0 0.0
      %790 = vmatprep.subr.mxu0 0.0
      %791 = vmatpush1.msra.mxu0 0.0
      %792 = vmatprep.subr.mxu0 0.0
      %793 = vmatpush1.msra.mxu0 0.0
      %794 = vmatprep.subr.mxu0 0.0
      %795 = vmatpush1.msra.mxu0 0.0
      %796 = vmatprep.subr.mxu0 0.0
      %797 = vmatpush1.msra.mxu0 0.0
      %798 = vmatprep.subr.mxu0 0.0
      %799 = vmatpush1.msra.mxu0 0.0
      %800 = vmatprep.subr.mxu0 0.0
      %801 = vmatpush1.msra.mxu0 0.0
      %802 = vmatprep.subr.mxu0 0.0
      %803 = vmatpush1.msra.mxu0 0.0
      %804 = vmatprep.subr.mxu0 0.0
      %805 = vmatpush1.msra.mxu0 0.0
      %806 = vmatprep.subr.mxu0 0.0
      %807 = vmatpush1.msra.mxu0 0.0
      %808 = vmatprep.subr.mxu0 0.0
      %809 = vmatpush1.msra.mxu0 0.0
      %810 = vmatprep.mubr.f32.mxu0 0.0
      %811 = vmatmul.mubr.f32.gmra.mrb[0].mxu0 %v744
      %v812 = vpop.f32.mrb[0].mxu0
      %v813 = vadd.f32 %v740, %v812
      %v814 = vpop.f32.mrb[0].mxu0
      %815 = vdwg.mxu0
      %v816 = vmax.f32 %v813, 0.0
      %v817 = vld [vmem:[%s2] sm:$0xff]
      %v818 = vld [vmem:[%s2 + $0x8] sm:$0xff]
      %v820 = vsel %vm340, %v816, 0
      %822 = vmatprep.subr.mxu0 0.0
      %823 = vmatpush1.msra.mxu0 %v817
      %824 = vmatprep.subr.mxu0 0.0
      %825 = vmatpush1.msra.mxu0 %v818
      %826 = vmatprep.subr.mxu0 0.0
      %827 = vmatpush1.msra.mxu0 0.0
      %828 = vmatprep.subr.mxu0 0.0
      %829 = vmatpush1.msra.mxu0 0.0
      %830 = vmatprep.subr.mxu0 0.0
      %831 = vmatpush1.msra.mxu0 0.0
      %832 = vmatprep.subr.mxu0 0.0
      %833 = vmatpush1.msra.mxu0 0.0
      %834 = vmatprep.subr.mxu0 0.0
      %835 = vmatpush1.msra.mxu0 0.0
      %836 = vmatprep.subr.mxu0 0.0
      %837 = vmatpush1.msra.mxu0 0.0
      %838 = vmatprep.subr.mxu0 0.0
      %839 = vmatpush1.msra.mxu0 0.0
      %840 = vmatprep.subr.mxu0 0.0
      %841 = vmatpush1.msra.mxu0 0.0
      %842 = vmatprep.subr.mxu0 0.0
      %843 = vmatpush1.msra.mxu0 0.0
      %844 = vmatprep.subr.mxu0 0.0
      %845 = vmatpush1.msra.mxu0 0.0
      %846 = vmatprep.subr.mxu0 0.0
      %847 = vmatpush1.msra.mxu0 0.0
      %848 = vmatprep.subr.mxu0 0.0
      %849 = vmatpush1.msra.mxu0 0.0
      %850 = vmatprep.subr.mxu0 0.0
      %851 = vmatpush1.msra.mxu0 0.0
      %852 = vmatprep.subr.mxu0 0.0
      %853 = vmatpush1.msra.mxu0 0.0
      %854 = vmatprep.subr.mxu0 0.0
      %855 = vmatpush1.msra.mxu0 0.0
      %856 = vmatprep.subr.mxu0 0.0
      %857 = vmatpush1.msra.mxu0 0.0
      %858 = vmatprep.subr.mxu0 0.0
      %859 = vmatpush1.msra.mxu0 0.0
      %860 = vmatprep.subr.mxu0 0.0
      %861 = vmatpush1.msra.mxu0 0.0
      %862 = vmatprep.subr.mxu0 0.0
      %863 = vmatpush1.msra.mxu0 0.0
      %864 = vmatprep.subr.mxu0 0.0
      %865 = vmatpush1.msra.mxu0 0.0
      %866 = vmatprep.subr.mxu0 0.0
      %867 = vmatpush1.msra.mxu0 0.0
      %868 = vmatprep.subr.mxu0 0.0
      %869 = vmatpush1.msra.mxu0 0.0
      %870 = vmatprep.subr.mxu0 0.0
      %871 = vmatpush1.msra.mxu0 0.0
      %872 = vmatprep.subr.mxu0 0.0
      %873 = vmatpush1.msra.mxu0 0.0
      %874 = vmatprep.subr.mxu0 0.0
      %875 = vmatpush1.msra.mxu0 0.0
      %876 = vmatprep.subr.mxu0 0.0
      %877 = vmatpush1.msra.mxu0 0.0
      %878 = vmatprep.subr.mxu0 0.0
      %879 = vmatpush1.msra.mxu0 0.0
      %880 = vmatprep.subr.mxu0 0.0
      %881 = vmatpush1.msra.mxu0 0.0
      %882 = vmatprep.subr.mxu0 0.0
      %883 = vmatpush1.msra.mxu0 0.0
      %884 = vmatprep.subr.mxu0 0.0
      %885 = vmatpush1.msra.mxu0 0.0
      %886 = vmatprep.mubr.f32.mxu0 0.0
      %887 = vmatmul.mubr.f32.gmra.mrb[0].mxu0 %v820
      %v888 = vpop.f32.mrb[0].mxu0
      %v889 = vadd.f32 0.0, %v888
      %v890 = vpop.f32.mrb[0].mxu0
      %891 = vdwg.mxu0
      %s892 = scalar_lea.vmem %s2, 16
      %v893 = vld [vmem:[%s892] sm:$0xff]
      %v894 = vld [vmem:[%s892 + $0x8] sm:$0xff]
      %895 = vmatprep.subr.mxu0 0.0
      %896 = vmatpush1.msra.mxu0 %v893
      %897 = vmatprep.subr.mxu0 0.0
      %898 = vmatpush1.msra.mxu0 %v894
      %899 = vmatprep.subr.mxu0 0.0
      %900 = vmatpush1.msra.mxu0 0.0
      %901 = vmatprep.subr.mxu0 0.0
      %902 = vmatpush1.msra.mxu0 0.0
      %903 = vmatprep.subr.mxu0 0.0
      %904 = vmatpush1.msra.mxu0 0.0
      %905 = vmatprep.subr.mxu0 0.0
      %906 = vmatpush1.msra.mxu0 0.0
      %907 = vmatprep.subr.mxu0 0.0
      %908 = vmatpush1.msra.mxu0 0.0
      %909 = vmatprep.subr.mxu0 0.0
      %910 = vmatpush1.msra.mxu0 0.0
      %911 = vmatprep.subr.mxu0 0.0
      %912 = vmatpush1.msra.mxu0 0.0
      %913 = vmatprep.subr.mxu0 0.0
      %914 = vmatpush1.msra.mxu0 0.0
      %915 = vmatprep.subr.mxu0 0.0
      %916 = vmatpush1.msra.mxu0 0.0
      %917 = vmatprep.subr.mxu0 0.0
      %918 = vmatpush1.msra.mxu0 0.0
      %919 = vmatprep.subr.mxu0 0.0
      %920 = vmatpush1.msra.mxu0 0.0
      %921 = vmatprep.subr.mxu0 0.0
      %922 = vmatpush1.msra.mxu0 0.0
      %923 = vmatprep.subr.mxu0 0.0
      %924 = vmatpush1.msra.mxu0 0.0
      %925 = vmatprep.subr.mxu0 0.0
      %926 = vmatpush1.msra.mxu0 0.0
      %927 = vmatprep.subr.mxu0 0.0
      %928 = vmatpush1.msra.mxu0 0.0
      %929 = vmatprep.subr.mxu0 0.0
      %930 = vmatpush1.msra.mxu0 0.0
      %931 = vmatprep.subr.mxu0 0.0
      %932 = vmatpush1.msra.mxu0 0.0
      %933 = vmatprep.subr.mxu0 0.0
      %934 = vmatpush1.msra.mxu0 0.0
      %935 = vmatprep.subr.mxu0 0.0
      %936 = vmatpush1.msra.mxu0 0.0
      %937 = vmatprep.subr.mxu0 0.0
      %938 = vmatpush1.msra.mxu0 0.0
      %939 = vmatprep.subr.mxu0 0.0
      %940 = vmatpush1.msra.mxu0 0.0
      %941 = vmatprep.subr.mxu0 0.0
      %942 = vmatpush1.msra.mxu0 0.0
      %943 = vmatprep.subr.mxu0 0.0
      %944 = vmatpush1.msra.mxu0 0.0
      %945 = vmatprep.subr.mxu0 0.0
      %946 = vmatpush1.msra.mxu0 0.0
      %947 = vmatprep.subr.mxu0 0.0
      %948 = vmatpush1.msra.mxu0 0.0
      %949 = vmatprep.subr.mxu0 0.0
      %950 = vmatpush1.msra.mxu0 0.0
      %951 = vmatprep.subr.mxu0 0.0
      %952 = vmatpush1.msra.mxu0 0.0
      %953 = vmatprep.subr.mxu0 0.0
      %954 = vmatpush1.msra.mxu0 0.0
      %955 = vmatprep.subr.mxu0 0.0
      %956 = vmatpush1.msra.mxu0 0.0
      %957 = vmatprep.subr.mxu0 0.0
      %958 = vmatpush1.msra.mxu0 0.0
      %959 = vmatprep.mubr.f32.mxu0 0.0
      %960 = vmatmul.mubr.f32.gmra.mrb[0].mxu0 %v820
      %v961 = vpop.f32.mrb[0].mxu0
      %v962 = vadd.f32 0.0, %v961
      %v963 = vpop.f32.mrb[0].mxu0
      %964 = vdwg.mxu0
      %s965 = scalar_lea.vmem %s2, 32
      %v966 = vld [vmem:[%s965] sm:$0xff]
      %v967 = vld [vmem:[%s965 + $0x8] sm:$0xff]
      %968 = vmatprep.subr.mxu0 0.0
      %969 = vmatpush1.msra.mxu0 %v966
      %970 = vmatprep.subr.mxu0 0.0
      %971 = vmatpush1.msra.mxu0 %v967
      %972 = vmatprep.subr.mxu0 0.0
      %973 = vmatpush1.msra.mxu0 0.0
      %974 = vmatprep.subr.mxu0 0.0
      %975 = vmatpush1.msra.mxu0 0.0
      %976 = vmatprep.subr.mxu0 0.0
      %977 = vmatpush1.msra.mxu0 0.0
      %978 = vmatprep.subr.mxu0 0.0
      %979 = vmatpush1.msra.mxu0 0.0
      %980 = vmatprep.subr.mxu0 0.0
      %981 = vmatpush1.msra.mxu0 0.0
      %982 = vmatprep.subr.mxu0 0.0
      %983 = vmatpush1.msra.mxu0 0.0
      %984 = vmatprep.subr.mxu0 0.0
      %985 = vmatpush1.msra.mxu0 0.0
      %986 = vmatprep.subr.mxu0 0.0
      %987 = vmatpush1.msra.mxu0 0.0
      %988 = vmatprep.subr.mxu0 0.0
      %989 = vmatpush1.msra.mxu0 0.0
      %990 = vmatprep.subr.mxu0 0.0
      %991 = vmatpush1.msra.mxu0 0.0
      %992 = vmatprep.subr.mxu0 0.0
      %993 = vmatpush1.msra.mxu0 0.0
      %994 = vmatprep.subr.mxu0 0.0
      %995 = vmatpush1.msra.mxu0 0.0
      %996 = vmatprep.subr.mxu0 0.0
      %997 = vmatpush1.msra.mxu0 0.0
      %998 = vmatprep.subr.mxu0 0.0
      %999 = vmatpush1.msra.mxu0 0.0
      %1000 = vmatprep.subr.mxu0 0.0
      %1001 = vmatpush1.msra.mxu0 0.0
      %1002 = vmatprep.subr.mxu0 0.0
      %1003 = vmatpush1.msra.mxu0 0.0
      %1004 = vmatprep.subr.mxu0 0.0
      %1005 = vmatpush1.msra.mxu0 0.0
      %1006 = vmatprep.subr.mxu0 0.0
      %1007 = vmatpush1.msra.mxu0 0.0
      %1008 = vmatprep.subr.mxu0 0.0
      %1009 = vmatpush1.msra.mxu0 0.0
      %1010 = vmatprep.subr.mxu0 0.0
      %1011 = vmatpush1.msra.mxu0 0.0
      %1012 = vmatprep.subr.mxu0 0.0
      %1013 = vmatpush1.msra.mxu0 0.0
      %1014 = vmatprep.subr.mxu0 0.0
      %1015 = vmatpush1.msra.mxu0 0.0
      %1016 = vmatprep.subr.mxu0 0.0
      %1017 = vmatpush1.msra.mxu0 0.0
      %1018 = vmatprep.subr.mxu0 0.0
      %1019 = vmatpush1.msra.mxu0 0.0
      %1020 = vmatprep.subr.mxu0 0.0
      %1021 = vmatpush1.msra.mxu0 0.0
      %1022 = vmatprep.subr.mxu0 0.0
      %1023 = vmatpush1.msra.mxu0 0.0
      %1024 = vmatprep.subr.mxu0 0.0
      %1025 = vmatpush1.msra.mxu0 0.0
      %1026 = vmatprep.subr.mxu0 0.0
      %1027 = vmatpush1.msra.mxu0 0.0
      %1028 = vmatprep.subr.mxu0 0.0
      %1029 = vmatpush1.msra.mxu0 0.0
      %1030 = vmatprep.subr.mxu0 0.0
      %1031 = vmatpush1.msra.mxu0 0.0
      %1032 = vmatprep.mubr.f32.mxu0 0.0
      %1033 = vmatmul.mubr.f32.gmra.mrb[0].mxu0 %v820
      %v1034 = vpop.f32.mrb[0].mxu0
      %v1035 = vadd.f32 0.0, %v1034
      %v1036 = vpop.f32.mrb[0].mxu0
      %1037 = vdwg.mxu0
      %s1038 = scalar_lea.vmem %s2, 48
      %v1039 = vld [vmem:[%s1038] sm:$0xff]
      %v1040 = vld [vmem:[%s1038 + $0x8] sm:$0xff]
      %1041 = vmatprep.subr.mxu0 0.0
      %1042 = vmatpush1.msra.mxu0 %v1039
      %1043 = vmatprep.subr.mxu0 0.0
      %1044 = vmatpush1.msra.mxu0 %v1040
      %1045 = vmatprep.subr.mxu0 0.0
      %1046 = vmatpush1.msra.mxu0 0.0
      %1047 = vmatprep.subr.mxu0 0.0
      %1048 = vmatpush1.msra.mxu0 0.0
      %1049 = vmatprep.subr.mxu0 0.0
      %1050 = vmatpush1.msra.mxu0 0.0
      %1051 = vmatprep.subr.mxu0 0.0
      %1052 = vmatpush1.msra.mxu0 0.0
      %1053 = vmatprep.subr.mxu0 0.0
      %1054 = vmatpush1.msra.mxu0 0.0
      %1055 = vmatprep.subr.mxu0 0.0
      %1056 = vmatpush1.msra.mxu0 0.0
      %1057 = vmatprep.subr.mxu0 0.0
      %1058 = vmatpush1.msra.mxu0 0.0
      %1059 = vmatprep.subr.mxu0 0.0
      %1060 = vmatpush1.msra.mxu0 0.0
      %1061 = vmatprep.subr.mxu0 0.0
      %1062 = vmatpush1.msra.mxu0 0.0
      %1063 = vmatprep.subr.mxu0 0.0
      %1064 = vmatpush1.msra.mxu0 0.0
      %1065 = vmatprep.subr.mxu0 0.0
      %1066 = vmatpush1.msra.mxu0 0.0
      %1067 = vmatprep.subr.mxu0 0.0
      %1068 = vmatpush1.msra.mxu0 0.0
      %1069 = vmatprep.subr.mxu0 0.0
      %1070 = vmatpush1.msra.mxu0 0.0
      %1071 = vmatprep.subr.mxu0 0.0
      %1072 = vmatpush1.msra.mxu0 0.0
      %1073 = vmatprep.subr.mxu0 0.0
      %1074 = vmatpush1.msra.mxu0 0.0
      %1075 = vmatprep.subr.mxu0 0.0
      %1076 = vmatpush1.msra.mxu0 0.0
      %1077 = vmatprep.subr.mxu0 0.0
      %1078 = vmatpush1.msra.mxu0 0.0
      %1079 = vmatprep.subr.mxu0 0.0
      %1080 = vmatpush1.msra.mxu0 0.0
      %1081 = vmatprep.subr.mxu0 0.0
      %1082 = vmatpush1.msra.mxu0 0.0
      %1083 = vmatprep.subr.mxu0 0.0
      %1084 = vmatpush1.msra.mxu0 0.0
      %1085 = vmatprep.subr.mxu0 0.0
      %1086 = vmatpush1.msra.mxu0 0.0
      %1087 = vmatprep.subr.mxu0 0.0
      %1088 = vmatpush1.msra.mxu0 0.0
      %1089 = vmatprep.subr.mxu0 0.0
      %1090 = vmatpush1.msra.mxu0 0.0
      %1091 = vmatprep.subr.mxu0 0.0
      %1092 = vmatpush1.msra.mxu0 0.0
      %1093 = vmatprep.subr.mxu0 0.0
      %1094 = vmatpush1.msra.mxu0 0.0
      %1095 = vmatprep.subr.mxu0 0.0
      %1096 = vmatpush1.msra.mxu0 0.0
      %1097 = vmatprep.subr.mxu0 0.0
      %1098 = vmatpush1.msra.mxu0 0.0
      %1099 = vmatprep.subr.mxu0 0.0
      %1100 = vmatpush1.msra.mxu0 0.0
      %1101 = vmatprep.subr.mxu0 0.0
      %1102 = vmatpush1.msra.mxu0 0.0
      %1103 = vmatprep.subr.mxu0 0.0
      %1104 = vmatpush1.msra.mxu0 0.0
      %1105 = vmatprep.mubr.f32.mxu0 0.0
      %1106 = vmatmul.mubr.f32.gmra.mrb[0].mxu0 %v820
      %v1107 = vpop.f32.mrb[0].mxu0
      %v1108 = vadd.f32 0.0, %v1107
      %v1109 = vpop.f32.mrb[0].mxu0
      %1110 = vdwg.mxu0
      %v1111 = vld [vmem:[%s6] sm:$0xff]
      %s1112 = scalar_lea.vmem %s8, 16
      %v1113 = vld [vmem:[%s1112] sm:$0xff]
      %1115 = vset.pattern.permute.xlu0 0
      %1116 = vperm.xlu0 %1115, %v1113
      %v1117 = vpop.permute.xlu0 %1116
      %v1120 = vsel %vm742, %v1111, 0
      %1122 = vmatprep.subr.mxu0 0.0
      %1123 = vmatpush1.msra.mxu0 %v889
      %1124 = vmatprep.subr.mxu0 0.0
      %1125 = vmatpush1.msra.mxu0 %v962
      %1126 = vmatprep.subr.mxu0 0.0
      %1127 = vmatpush1.msra.mxu0 %v1035
      %1128 = vmatprep.subr.mxu0 0.0
      %1129 = vmatpush1.msra.mxu0 %v1108
      %1130 = vmatprep.subr.mxu0 0.0
      %1131 = vmatpush1.msra.mxu0 0.0
      %1132 = vmatprep.subr.mxu0 0.0
      %1133 = vmatpush1.msra.mxu0 0.0
      %1134 = vmatprep.subr.mxu0 0.0
      %1135 = vmatpush1.msra.mxu0 0.0
      %1136 = vmatprep.subr.mxu0 0.0
      %1137 = vmatpush1.msra.mxu0 0.0
      %1138 = vmatprep.subr.mxu0 0.0
      %1139 = vmatpush1.msra.mxu0 0.0
      %1140 = vmatprep.subr.mxu0 0.0
      %1141 = vmatpush1.msra.mxu0 0.0
      %1142 = vmatprep.subr.mxu0 0.0
      %1143 = vmatpush1.msra.mxu0 0.0
      %1144 = vmatprep.subr.mxu0 0.0
      %1145 = vmatpush1.msra.mxu0 0.0
      %1146 = vmatprep.subr.mxu0 0.0
      %1147 = vmatpush1.msra.mxu0 0.0
      %1148 = vmatprep.subr.mxu0 0.0
      %1149 = vmatpush1.msra.mxu0 0.0
      %1150 = vmatprep.subr.mxu0 0.0
      %1151 = vmatpush1.msra.mxu0 0.0
      %1152 = vmatprep.subr.mxu0 0.0
      %1153 = vmatpush1.msra.mxu0 0.0
      %1154 = vmatprep.subr.mxu0 0.0
      %1155 = vmatpush1.msra.mxu0 0.0
      %1156 = vmatprep.subr.mxu0 0.0
      %1157 = vmatpush1.msra.mxu0 0.0
      %1158 = vmatprep.subr.mxu0 0.0
      %1159 = vmatpush1.msra.mxu0 0.0
      %1160 = vmatprep.subr.mxu0 0.0
      %1161 = vmatpush1.msra.mxu0 0.0
      %1162 = vmatprep.subr.mxu0 0.0
      %1163 = vmatpush1.msra.mxu0 0.0
      %1164 = vmatprep.subr.mxu0 0.0
      %1165 = vmatpush1.msra.mxu0 0.0
      %1166 = vmatprep.subr.mxu0 0.0
      %1167 = vmatpush1.msra.mxu0 0.0
      %1168 = vmatprep.subr.mxu0 0.0
      %1169 = vmatpush1.msra.mxu0 0.0
      %1170 = vmatprep.subr.mxu0 0.0
      %1171 = vmatpush1.msra.mxu0 0.0
      %1172 = vmatprep.subr.mxu0 0.0
      %1173 = vmatpush1.msra.mxu0 0.0
      %1174 = vmatprep.subr.mxu0 0.0
      %1175 = vmatpush1.msra.mxu0 0.0
      %1176 = vmatprep.subr.mxu0 0.0
      %1177 = vmatpush1.msra.mxu0 0.0
      %1178 = vmatprep.subr.mxu0 0.0
      %1179 = vmatpush1.msra.mxu0 0.0
      %1180 = vmatprep.subr.mxu0 0.0
      %1181 = vmatpush1.msra.mxu0 0.0
      %1182 = vmatprep.subr.mxu0 0.0
      %1183 = vmatpush1.msra.mxu0 0.0
      %1184 = vmatprep.subr.mxu0 0.0
      %1185 = vmatpush1.msra.mxu0 0.0
      %1186 = vmatprep.mubr.f32.mxu0 0.0
      %1187 = vmatmul.mubr.f32.gmra.mrb[0].mxu0 %v1120
      %v1188 = vpop.f32.mrb[0].mxu0
      %v1189 = vadd.f32 %v1117, %v1188
      %v1190 = vpop.f32.mrb[0].mxu0
      %1191 = vdwg.mxu0
      %v1192 = vmax.f32 %v1189, 0.0
      %v1193 = vld [vmem:[%s3] sm:$0xf]
      %vm1194 = vcmask 31744
      %v1196 = vsel %vm1194, %v1192, 0
      %vm1198 = vcmask 1043456
      %v1200 = vsel %vm1198, %v1193, 0
      %1202 = vmatprep.subr.mxu0 0.0
      %1203 = vmatpush1.msra.mxu0 %v1200
      %1204 = vmatprep.subr.mxu0 0.0
      %1205 = vmatpush1.msra.mxu0 0.0
      %1206 = vmatprep.subr.mxu0 0.0
      %1207 = vmatpush1.msra.mxu0 0.0
      %1208 = vmatprep.subr.mxu0 0.0
      %1209 = vmatpush1.msra.mxu0 0.0
      %1210 = vmatprep.subr.mxu0 0.0
      %1211 = vmatpush1.msra.mxu0 0.0
      %1212 = vmatprep.subr.mxu0 0.0
      %1213 = vmatpush1.msra.mxu0 0.0
      %1214 = vmatprep.subr.mxu0 0.0
      %1215 = vmatpush1.msra.mxu0 0.0
      %1216 = vmatprep.subr.mxu0 0.0
      %1217 = vmatpush1.msra.mxu0 0.0
      %1218 = vmatprep.subr.mxu0 0.0
      %1219 = vmatpush1.msra.mxu0 0.0
      %1220 = vmatprep.subr.mxu0 0.0
      %1221 = vmatpush1.msra.mxu0 0.0
      %1222 = vmatprep.subr.mxu0 0.0
      %1223 = vmatpush1.msra.mxu0 0.0
      %1224 = vmatprep.subr.mxu0 0.0
      %1225 = vmatpush1.msra.mxu0 0.0
      %1226 = vmatprep.subr.mxu0 0.0
      %1227 = vmatpush1.msra.mxu0 0.0
      %1228 = vmatprep.subr.mxu0 0.0
      %1229 = vmatpush1.msra.mxu0 0.0
      %1230 = vmatprep.subr.mxu0 0.0
      %1231 = vmatpush1.msra.mxu0 0.0
      %1232 = vmatprep.subr.mxu0 0.0
      %1233 = vmatpush1.msra.mxu0 0.0
      %1234 = vmatprep.subr.mxu0 0.0
      %1235 = vmatpush1.msra.mxu0 0.0
      %1236 = vmatprep.subr.mxu0 0.0
      %1237 = vmatpush1.msra.mxu0 0.0
      %1238 = vmatprep.subr.mxu0 0.0
      %1239 = vmatpush1.msra.mxu0 0.0
      %1240 = vmatprep.subr.mxu0 0.0
      %1241 = vmatpush1.msra.mxu0 0.0
      %1242 = vmatprep.subr.mxu0 0.0
      %1243 = vmatpush1.msra.mxu0 0.0
      %1244 = vmatprep.subr.mxu0 0.0
      %1245 = vmatpush1.msra.mxu0 0.0
      %1246 = vmatprep.subr.mxu0 0.0
      %1247 = vmatpush1.msra.mxu0 0.0
      %1248 = vmatprep.subr.mxu0 0.0
      %1249 = vmatpush1.msra.mxu0 0.0
      %1250 = vmatprep.subr.mxu0 0.0
      %1251 = vmatpush1.msra.mxu0 0.0
      %1252 = vmatprep.subr.mxu0 0.0
      %1253 = vmatpush1.msra.mxu0 0.0
      %1254 = vmatprep.subr.mxu0 0.0
      %1255 = vmatpush1.msra.mxu0 0.0
      %1256 = vmatprep.subr.mxu0 0.0
      %1257 = vmatpush1.msra.mxu0 0.0
      %1258 = vmatprep.subr.mxu0 0.0
      %1259 = vmatpush1.msra.mxu0 0.0
      %1260 = vmatprep.subr.mxu0 0.0
      %1261 = vmatpush1.msra.mxu0 0.0
      %1262 = vmatprep.subr.mxu0 0.0
      %1263 = vmatpush1.msra.mxu0 0.0
      %1264 = vmatprep.subr.mxu0 0.0
      %1265 = vmatpush1.msra.mxu0 0.0
      %1266 = vmatprep.mubr.f32.mxu0 0.0
      %1267 = vmatmul.mubr.f32.gmra.mrb[0].mxu0 %v1196
      %v1268 = vpop.f32.mrb[0].mxu0
      %v1269 = vadd.f32 0.0, %v1268
      %v1270 = vpop.f32.mrb[0].mxu0
      %1271 = vdwg.mxu0
      %s1272 = scalar_lea.vmem %s3, 4
      %v1273 = vld [vmem:[%s1272] sm:$0xf]
      %v1275 = vsel %vm1198, %v1273, 0
      %1277 = vmatprep.subr.mxu0 0.0
      %1278 = vmatpush1.msra.mxu0 %v1275
      %1279 = vmatprep.subr.mxu0 0.0
      %1280 = vmatpush1.msra.mxu0 0.0
      %1281 = vmatprep.subr.mxu0 0.0
      %1282 = vmatpush1.msra.mxu0 0.0
      %1283 = vmatprep.subr.mxu0 0.0
      %1284 = vmatpush1.msra.mxu0 0.0
      %1285 = vmatprep.subr.mxu0 0.0
      %1286 = vmatpush1.msra.mxu0 0.0
      %1287 = vmatprep.subr.mxu0 0.0
      %1288 = vmatpush1.msra.mxu0 0.0
      %1289 = vmatprep.subr.mxu0 0.0
      %1290 = vmatpush1.msra.mxu0 0.0
      %1291 = vmatprep.subr.mxu0 0.0
      %1292 = vmatpush1.msra.mxu0 0.0
      %1293 = vmatprep.subr.mxu0 0.0
      %1294 = vmatpush1.msra.mxu0 0.0
      %1295 = vmatprep.subr.mxu0 0.0
      %1296 = vmatpush1.msra.mxu0 0.0
      %1297 = vmatprep.subr.mxu0 0.0
      %1298 = vmatpush1.msra.mxu0 0.0
      %1299 = vmatprep.subr.mxu0 0.0
      %1300 = vmatpush1.msra.mxu0 0.0
      %1301 = vmatprep.subr.mxu0 0.0
      %1302 = vmatpush1.msra.mxu0 0.0
      %1303 = vmatprep.subr.mxu0 0.0
      %1304 = vmatpush1.msra.mxu0 0.0
      %1305 = vmatprep.subr.mxu0 0.0
      %1306 = vmatpush1.msra.mxu0 0.0
      %1307 = vmatprep.subr.mxu0 0.0
      %1308 = vmatpush1.msra.mxu0 0.0
      %1309 = vmatprep.subr.mxu0 0.0
      %1310 = vmatpush1.msra.mxu0 0.0
      %1311 = vmatprep.subr.mxu0 0.0
      %1312 = vmatpush1.msra.mxu0 0.0
      %1313 = vmatprep.subr.mxu0 0.0
      %1314 = vmatpush1.msra.mxu0 0.0
      %1315 = vmatprep.subr.mxu0 0.0
      %1316 = vmatpush1.msra.mxu0 0.0
      %1317 = vmatprep.subr.mxu0 0.0
      %1318 = vmatpush1.msra.mxu0 0.0
      %1319 = vmatprep.subr.mxu0 0.0
      %1320 = vmatpush1.msra.mxu0 0.0
      %1321 = vmatprep.subr.mxu0 0.0
      %1322 = vmatpush1.msra.mxu0 0.0
      %1323 = vmatprep.subr.mxu0 0.0
      %1324 = vmatpush1.msra.mxu0 0.0
      %1325 = vmatprep.subr.mxu0 0.0
      %1326 = vmatpush1.msra.mxu0 0.0
      %1327 = vmatprep.subr.mxu0 0.0
      %1328 = vmatpush1.msra.mxu0 0.0
      %1329 = vmatprep.subr.mxu0 0.0
      %1330 = vmatpush1.msra.mxu0 0.0
      %1331 = vmatprep.subr.mxu0 0.0
      %1332 = vmatpush1.msra.mxu0 0.0
      %1333 = vmatprep.subr.mxu0 0.0
      %1334 = vmatpush1.msra.mxu0 0.0
      %1335 = vmatprep.subr.mxu0 0.0
      %1336 = vmatpush1.msra.mxu0 0.0
      %1337 = vmatprep.subr.mxu0 0.0
      %1338 = vmatpush1.msra.mxu0 0.0
      %1339 = vmatprep.subr.mxu0 0.0
      %1340 = vmatpush1.msra.mxu0 0.0
      %1341 = vmatprep.mubr.f32.mxu0 0.0
      %1342 = vmatmul.mubr.f32.gmra.mrb[0].mxu0 %v1196
      %v1343 = vpop.f32.mrb[0].mxu0
      %v1344 = vadd.f32 0.0, %v1343
      %v1345 = vpop.f32.mrb[0].mxu0
      %1346 = vdwg.mxu0
      %s1347 = scalar_lea.vmem %s3, 8
      %v1348 = vld [vmem:[%s1347] sm:$0xf]
      %v1350 = vsel %vm1198, %v1348, 0
      %1352 = vmatprep.subr.mxu0 0.0
      %1353 = vmatpush1.msra.mxu0 %v1350
      %1354 = vmatprep.subr.mxu0 0.0
      %1355 = vmatpush1.msra.mxu0 0.0
      %1356 = vmatprep.subr.mxu0 0.0
      %1357 = vmatpush1.msra.mxu0 0.0
      %1358 = vmatprep.subr.mxu0 0.0
      %1359 = vmatpush1.msra.mxu0 0.0
      %1360 = vmatprep.subr.mxu0 0.0
      %1361 = vmatpush1.msra.mxu0 0.0
      %1362 = vmatprep.subr.mxu0 0.0
      %1363 = vmatpush1.msra.mxu0 0.0
      %1364 = vmatprep.subr.mxu0 0.0
      %1365 = vmatpush1.msra.mxu0 0.0
      %1366 = vmatprep.subr.mxu0 0.0
      %1367 = vmatpush1.msra.mxu0 0.0
      %1368 = vmatprep.subr.mxu0 0.0
      %1369 = vmatpush1.msra.mxu0 0.0
      %1370 = vmatprep.subr.mxu0 0.0
      %1371 = vmatpush1.msra.mxu0 0.0
      %1372 = vmatprep.subr.mxu0 0.0
      %1373 = vmatpush1.msra.mxu0 0.0
      %1374 = vmatprep.subr.mxu0 0.0
      %1375 = vmatpush1.msra.mxu0 0.0
      %1376 = vmatprep.subr.mxu0 0.0
      %1377 = vmatpush1.msra.mxu0 0.0
      %1378 = vmatprep.subr.mxu0 0.0
      %1379 = vmatpush1.msra.mxu0 0.0
      %1380 = vmatprep.subr.mxu0 0.0
      %1381 = vmatpush1.msra.mxu0 0.0
      %1382 = vmatprep.subr.mxu0 0.0
      %1383 = vmatpush1.msra.mxu0 0.0
      %1384 = vmatprep.subr.mxu0 0.0
      %1385 = vmatpush1.msra.mxu0 0.0
      %1386 = vmatprep.subr.mxu0 0.0
      %1387 = vmatpush1.msra.mxu0 0.0
      %1388 = vmatprep.subr.mxu0 0.0
      %1389 = vmatpush1.msra.mxu0 0.0
      %1390 = vmatprep.subr.mxu0 0.0
      %1391 = vmatpush1.msra.mxu0 0.0
      %1392 = vmatprep.subr.mxu0 0.0
      %1393 = vmatpush1.msra.mxu0 0.0
      %1394 = vmatprep.subr.mxu0 0.0
      %1395 = vmatpush1.msra.mxu0 0.0
      %1396 = vmatprep.subr.mxu0 0.0
      %1397 = vmatpush1.msra.mxu0 0.0
      %1398 = vmatprep.subr.mxu0 0.0
      %1399 = vmatpush1.msra.mxu0 0.0
      %1400 = vmatprep.subr.mxu0 0.0
      %1401 = vmatpush1.msra.mxu0 0.0
      %1402 = vmatprep.subr.mxu0 0.0
      %1403 = vmatpush1.msra.mxu0 0.0
      %1404 = vmatprep.subr.mxu0 0.0
      %1405 = vmatpush1.msra.mxu0 0.0
      %1406 = vmatprep.subr.mxu0 0.0
      %1407 = vmatpush1.msra.mxu0 0.0
      %1408 = vmatprep.subr.mxu0 0.0
      %1409 = vmatpush1.msra.mxu0 0.0
      %1410 = vmatprep.subr.mxu0 0.0
      %1411 = vmatpush1.msra.mxu0 0.0
      %1412 = vmatprep.subr.mxu0 0.0
      %1413 = vmatpush1.msra.mxu0 0.0
      %1414 = vmatprep.subr.mxu0 0.0
      %1415 = vmatpush1.msra.mxu0 0.0
      %1416 = vmatprep.mubr.f32.mxu0 0.0
      %1417 = vmatmul.mubr.f32.gmra.mrb[0].mxu0 %v1196
      %v1418 = vpop.f32.mrb[0].mxu0
      %v1419 = vadd.f32 0.0, %v1418
      %v1420 = vpop.f32.mrb[0].mxu0
      %1421 = vdwg.mxu0
      %s1422 = scalar_lea.vmem %s3, 12
      %v1423 = vld [vmem:[%s1422] sm:$0xf]
      %v1425 = vsel %vm1198, %v1423, 0
      %1427 = vmatprep.subr.mxu0 0.0
      %1428 = vmatpush1.msra.mxu0 %v1425
      %1429 = vmatprep.subr.mxu0 0.0
      %1430 = vmatpush1.msra.mxu0 0.0
      %1431 = vmatprep.subr.mxu0 0.0
      %1432 = vmatpush1.msra.mxu0 0.0
      %1433 = vmatprep.subr.mxu0 0.0
      %1434 = vmatpush1.msra.mxu0 0.0
      %1435 = vmatprep.subr.mxu0 0.0
      %1436 = vmatpush1.msra.mxu0 0.0
      %1437 = vmatprep.subr.mxu0 0.0
      %1438 = vmatpush1.msra.mxu0 0.0
      %1439 = vmatprep.subr.mxu0 0.0
      %1440 = vmatpush1.msra.mxu0 0.0
      %1441 = vmatprep.subr.mxu0 0.0
      %1442 = vmatpush1.msra.mxu0 0.0
      %1443 = vmatprep.subr.mxu0 0.0
      %1444 = vmatpush1.msra.mxu0 0.0
      %1445 = vmatprep.subr.mxu0 0.0
      %1446 = vmatpush1.msra.mxu0 0.0
      %1447 = vmatprep.subr.mxu0 0.0
      %1448 = vmatpush1.msra.mxu0 0.0
      %1449 = vmatprep.subr.mxu0 0.0
      %1450 = vmatpush1.msra.mxu0 0.0
      %1451 = vmatprep.subr.mxu0 0.0
      %1452 = vmatpush1.msra.mxu0 0.0
      %1453 = vmatprep.subr.mxu0 0.0
      %1454 = vmatpush1.msra.mxu0 0.0
      %1455 = vmatprep.subr.mxu0 0.0
      %1456 = vmatpush1.msra.mxu0 0.0
      %1457 = vmatprep.subr.mxu0 0.0
      %1458 = vmatpush1.msra.mxu0 0.0
      %1459 = vmatprep.subr.mxu0 0.0
      %1460 = vmatpush1.msra.mxu0 0.0
      %1461 = vmatprep.subr.mxu0 0.0
      %1462 = vmatpush1.msra.mxu0 0.0
      %1463 = vmatprep.subr.mxu0 0.0
      %1464 = vmatpush1.msra.mxu0 0.0
      %1465 = vmatprep.subr.mxu0 0.0
      %1466 = vmatpush1.msra.mxu0 0.0
      %1467 = vmatprep.subr.mxu0 0.0
      %1468 = vmatpush1.msra.mxu0 0.0
      %1469 = vmatprep.subr.mxu0 0.0
      %1470 = vmatpush1.msra.mxu0 0.0
      %1471 = vmatprep.subr.mxu0 0.0
      %1472 = vmatpush1.msra.mxu0 0.0
      %1473 = vmatprep.subr.mxu0 0.0
      %1474 = vmatpush1.msra.mxu0 0.0
      %1475 = vmatprep.subr.mxu0 0.0
      %1476 = vmatpush1.msra.mxu0 0.0
      %1477 = vmatprep.subr.mxu0 0.0
      %1478 = vmatpush1.msra.mxu0 0.0
      %1479 = vmatprep.subr.mxu0 0.0
      %1480 = vmatpush1.msra.mxu0 0.0
      %1481 = vmatprep.subr.mxu0 0.0
      %1482 = vmatpush1.msra.mxu0 0.0
      %1483 = vmatprep.subr.mxu0 0.0
      %1484 = vmatpush1.msra.mxu0 0.0
      %1485 = vmatprep.subr.mxu0 0.0
      %1486 = vmatpush1.msra.mxu0 0.0
      %1487 = vmatprep.subr.mxu0 0.0
      %1488 = vmatpush1.msra.mxu0 0.0
      %1489 = vmatprep.subr.mxu0 0.0
      %1490 = vmatpush1.msra.mxu0 0.0
      %1491 = vmatprep.mubr.f32.mxu0 0.0
      %1492 = vmatmul.mubr.f32.gmra.mrb[0].mxu0 %v1196
      %v1493 = vpop.f32.mrb[0].mxu0
      %v1494 = vadd.f32 0.0, %v1493
      %v1495 = vpop.f32.mrb[0].mxu0
      %1496 = vdwg.mxu0
      %v1497 = vld [vmem:[%s7] sm:$0xff]
      %s1498 = scalar_lea.vmem %s8, 24
      %v1499 = vld [vmem:[%s1498] sm:$0xff]
      %v1501 = vsel %vm742, %v1497, 0
      %1503 = vmatprep.subr.mxu0 0.0
      %1504 = vmatpush1.msra.mxu0 %v1269
      %1505 = vmatprep.subr.mxu0 0.0
      %1506 = vmatpush1.msra.mxu0 %v1344
      %1507 = vmatprep.subr.mxu0 0.0
      %1508 = vmatpush1.msra.mxu0 %v1419
      %1509 = vmatprep.subr.mxu0 0.0
      %1510 = vmatpush1.msra.mxu0 %v1494
      %1511 = vmatprep.subr.mxu0 0.0
      %1512 = vmatpush1.msra.mxu0 0.0
      %1513 = vmatprep.subr.mxu0 0.0
      %1514 = vmatpush1.msra.mxu0 0.0
      %1515 = vmatprep.subr.mxu0 0.0
      %1516 = vmatpush1.msra.mxu0 0.0
      %1517 = vmatprep.subr.mxu0 0.0
      %1518 = vmatpush1.msra.mxu0 0.0
      %1519 = vmatprep.subr.mxu0 0.0
      %1520 = vmatpush1.msra.mxu0 0.0
      %1521 = vmatprep.subr.mxu0 0.0
      %1522 = vmatpush1.msra.mxu0 0.0
      %1523 = vmatprep.subr.mxu0 0.0
      %1524 = vmatpush1.msra.mxu0 0.0
      %1525 = vmatprep.subr.mxu0 0.0
      %1526 = vmatpush1.msra.mxu0 0.0
      %1527 = vmatprep.subr.mxu0 0.0
      %1528 = vmatpush1.msra.mxu0 0.0
      %1529 = vmatprep.subr.mxu0 0.0
      %1530 = vmatpush1.msra.mxu0 0.0
      %1531 = vmatprep.subr.mxu0 0.0
      %1532 = vmatpush1.msra.mxu0 0.0
      %1533 = vmatprep.subr.mxu0 0.0
      %1534 = vmatpush1.msra.mxu0 0.0
      %1535 = vmatprep.subr.mxu0 0.0
      %1536 = vmatpush1.msra.mxu0 0.0
      %1537 = vmatprep.subr.mxu0 0.0
      %1538 = vmatpush1.msra.mxu0 0.0
      %1539 = vmatprep.subr.mxu0 0.0
      %1540 = vmatpush1.msra.mxu0 0.0
      %1541 = vmatprep.subr.mxu0 0.0
      %1542 = vmatpush1.msra.mxu0 0.0
      %1543 = vmatprep.subr.mxu0 0.0
      %1544 = vmatpush1.msra.mxu0 0.0
      %1545 = vmatprep.subr.mxu0 0.0
      %1546 = vmatpush1.msra.mxu0 0.0
      %1547 = vmatprep.subr.mxu0 0.0
      %1548 = vmatpush1.msra.mxu0 0.0
      %1549 = vmatprep.subr.mxu0 0.0
      %1550 = vmatpush1.msra.mxu0 0.0
      %1551 = vmatprep.subr.mxu0 0.0
      %1552 = vmatpush1.msra.mxu0 0.0
      %1553 = vmatprep.subr.mxu0 0.0
      %1554 = vmatpush1.msra.mxu0 0.0
      %1555 = vmatprep.subr.mxu0 0.0
      %1556 = vmatpush1.msra.mxu0 0.0
      %1557 = vmatprep.subr.mxu0 0.0
      %1558 = vmatpush1.msra.mxu0 0.0
      %1559 = vmatprep.subr.mxu0 0.0
      %1560 = vmatpush1.msra.mxu0 0.0
      %1561 = vmatprep.subr.mxu0 0.0
      %1562 = vmatpush1.msra.mxu0 0.0
      %1563 = vmatprep.subr.mxu0 0.0
      %1564 = vmatpush1.msra.mxu0 0.0
      %1565 = vmatprep.subr.mxu0 0.0
      %1566 = vmatpush1.msra.mxu0 0.0
      %1567 = vmatprep.mubr.f32.mxu0 0.0
      %1568 = vmatmul.mubr.f32.gmra.mrb[0].mxu0 %v1501
      %v1569 = vpop.f32.mrb[0].mxu0
      %v1570 = vadd.f32 %v1499, %v1569
      %v1571 = vpop.f32.mrb[0].mxu0
      %1572 = vdwg.mxu0
      %v1573 = vmax.f32 %v1570, 0.0
      %v1574 = vadd.f32 %v1573, 0.0
      %vm1575 = vcmask 7168
      %1576 = vst.msk [vmem:[%s330] sm:$0xff] %vm1575, %v1574
      %p1577 = scmp.lt.s32.totalorder %s20, 1
      %s1578 = scalar_select %p1577, %s20, 1
      %s1579 = smul.addr %s1578, 8
      %s1580 = scalar_lea.vmem %s9, %s1579
      // Predicated region
      $region57: #{_lambda_.1} parent=55 // pred_check
        %p1581 = pneg %p232
      $region58: #{_lambda_.1} parent=55 // pred_check_branch
        %1583 = sbr.rel (%p1581) target = $region60
      $region59: #{_lambda_.1} parent=55 // pred_region
        _
      $region60: #{_lambda_.1} parent=55 // pred_fallthru
        _
    $region56: #{_lambda_.1} parent=5 // pred_fallthru
      _
    %p1584 = scmp.le.s32.totalorder 2, %s15
    // Predicated region
    $region61: #{_lambda_.1} parent=5 // pred_check
      %p1585 = pneg %p1584
    $region62: #{_lambda_.1} parent=5 // pred_check_branch
      %1587 = sbr.rel (%p1585) target = $region64
    $region63: #{_lambda_.1} parent=5 // pred_region
      %s1588 = ssub.s32 %s15, 2
      // Predicated region
      $region65: #{_lambda_.1} parent=63 // pred_check
        %p1589 = pneg %p238
      $region66: #{_lambda_.1} parent=63 // pred_check_branch
        %1591 = sbr.rel (%p1589) target = $region68
      $region67: #{_lambda_.1} parent=63 // pred_region
        %p1592 = scmp.lt.s32.totalorder %s21, 1
        %s1593 = scalar_select %p1592, %s21, 1
        %s1594 = smul.addr %s1593, 8
        %s1595 = scalar_lea.vmem %s9, %s1594
      $region68: #{_lambda_.1} parent=63 // pred_fallthru
        _
    $region64: #{_lambda_.1} parent=5 // pred_fallthru
      _
  $region6: #{_lambda_.1} parent=0 // loop_footer
    %s19 = sadd.s32 1, %s15
  $region7: #{_lambda_.1} parent=0 // loop_footer_branch
    %14 = sbr.rel target = $region3
  $region8: #{_lambda_.1} parent=0 // loop_exit
    _

// kernel: _lambda_.1
$region0: #{_lambda_.1}
  #allocation0 [shape = 'u32[]', space=smem, size = 0x4, offset = 0x4, fixed_abs, tag = 'smem constant byte address 0x4 - core index']
  #allocation1 [shape = 'u32[144,128]{1,0:T(1,128)}', space=vmem, size = 0x12000, scoped, tag = 'internal scratch']
  %s0 = inlined_call_operand.vmem [shape: f32[2,16,64], index: 0, kind: input, shape index: {}]
  %s1 = inlined_call_operand.vmem [shape: f32[4,64,16], index: 1, kind: input, shape index: {}]
  %s2 = inlined_call_operand.vmem [shape: f32[4,16,4], index: 2, kind: input, shape index: {}]
  %s3 = inlined_call_operand.vmem [shape: f32[4,4,1], index: 3, kind: input, shape index: {}]
  %s4 = inlined_call_operand.vmem [shape: f32[8,16], index: 4, kind: input, shape index: {}]
  %s5 = inlined_call_operand.vmem [shape: f32[8,32], index: 5, kind: input, shape index: {}]
  %s6 = inlined_call_operand.vmem [shape: f32[8,32], index: 6, kind: input, shape index: {}]
  %s7 = inlined_call_operand.vmem [shape: f32[8,32], index: 7, kind: input, shape index: {}]
  %s8 = inlined_call_operand.vmem [shape: f32[4,8,1], index: 8, kind: input, shape index: {}]
  %s9 = inlined_call_operand.vmem [shape: f32[2,8,1], index: 9, kind: output, shape index: {}]
  %s10 = sld [smem:[#allocation0]]
  $region69: #{_lambda_.1} parent=0
    _
  %s12 = ssub.s32 1, %s10
  %s13 = scalar_select 0, %s12, %s10
  loop: start=0, step=1, limit=4
  $region2: #{_lambda_.1} parent=0 // loop_pre_header
    _
  $region3: #{_lambda_.1} parent=0 // loop_header
    %s15 = sphi 0, %s19
    %p16 = scmp.ge.s32.totalorder %s15, 4
    %s25 = sphi 0, %s27
    %s28 = sphi 0, %s25
    %s29 = sphi 0, %s28
    %s45 = sphi 0, %s29
    %s49 = sphi 0, %s49
    %s51 = sphi 0, %s49
    %s52 = sphi 0, %s51
    %s66 = sphi 0, %s52
    %s70 = sphi 0, %s70
    %s72 = sphi 0, %s70
    %s73 = sphi 0, %s72
    %s87 = sphi 0, %s73
    %s91 = sphi 0, %s91
    %s93 = sphi 0, %s91
    %s94 = sphi 0, %s93
    %s108 = sphi 0, %s94
    %s112 = sphi 0, %s112
    %s114 = sphi 0, %s112
    %s115 = sphi 0, %s114
    %s129 = sphi 0, %s115
    %s133 = sphi 0, %s133
    %s135 = sphi 0, %s133
    %s136 = sphi 0, %s135
    %s150 = sphi 0, %s136
    %s154 = sphi 0, %s154
    %s156 = sphi 0, %s154
    %s157 = sphi 0, %s156
    %s171 = sphi 0, %s157
    %s175 = sphi 0, %s175
    %s177 = sphi 0, %s175
    %s178 = sphi 0, %s177
    %s192 = sphi 0, %s178
    %s196 = sphi 0, %s196
    %s198 = sphi 0, %s196
    %s199 = sphi 0, %s198
    %s213 = sphi 0, %s199
    %s219 = sphi 0, %s221
    %s222 = sphi 0, %s219
    %s223 = sphi 0, %s222
    %s239 = sphi 0, %s223
  $region4: #{_lambda_.1} parent=0 // loop_header_branch
    %18 = sbr.rel (%p16) target = $region8
  $region5: #{_lambda_.1} parent=0 // loop_body
    %s20 = ssub.s32 %s15, 1
    %s21 = ssub.s32 %s15, 2
    %s22 = sadd.s32 %s15, 1
    %s23 = ssub.s32 %s15, %s22
    %p24 = scmp.eq.s32.totalorder %s23, 0
    %s26 = sadd.s32 %s25, 1
    %s27 = scalar_select %p24, %s25, %s26
    %p30 = pneg %p24
    %p31 = scmp.eq.s32.totalorder %s15, 1
    %p32 = por %p30, %p31
    %p33 = scmp.ne.s32.totalorder %s25, %s28
    %p34 = scmp.eq.s32.totalorder %s15, 0
    %p35 = por %p33, %p34
    %p36 = scmp.ne.s32.totalorder %s25, %s28
    %p37 = scmp.eq.s32.totalorder %s20, 1
    %p38 = por %p36, %p37
    %p39 = scmp.ne.s32.totalorder %s28, %s29
    %p40 = scmp.eq.s32.totalorder %s20, 0
    %p41 = por %p39, %p40
    %p42 = scmp.ne.s32.totalorder %s28, %s29
    %p43 = scmp.eq.s32.totalorder %s21, 1
    %p44 = por %p42, %p43
    %p46 = scmp.ne.s32.totalorder %s29, %s45
    %p47 = scmp.eq.s32.totalorder %s21, 0
    %p48 = por %p46, %p47
    %s50 = sadd.s32 %s49, 1
    %p53 = scmp.eq.s32.totalorder %s15, 1
    %p54 = scmp.ne.s32.totalorder %s49, %s51
    %p55 = scmp.eq.s32.totalorder %s15, 0
    %p56 = por %p54, %p55
    %p57 = scmp.ne.s32.totalorder %s49, %s51
    %p58 = scmp.eq.s32.totalorder %s20, 1
    %p59 = por %p57, %p58
    %p60 = scmp.ne.s32.totalorder %s51, %s52
    %p61 = scmp.eq.s32.totalorder %s20, 0
    %p62 = por %p60, %p61
    %p63 = scmp.ne.s32.totalorder %s51, %s52
    %p64 = scmp.eq.s32.totalorder %s21, 1
    %p65 = por %p63, %p64
    %p67 = scmp.ne.s32.totalorder %s52, %s66
    %p68 = scmp.eq.s32.totalorder %s21, 0
    %p69 = por %p67, %p68
    %s71 = sadd.s32 %s70, 1
    %p74 = scmp.eq.s32.totalorder %s15, 1
    %p75 = scmp.ne.s32.totalorder %s70, %s72
    %p76 = scmp.eq.s32.totalorder %s15, 0
    %p77 = por %p75, %p76
    %p78 = scmp.ne.s32.totalorder %s70, %s72
    %p79 = scmp.eq.s32.totalorder %s20, 1
    %p80 = por %p78, %p79
    %p81 = scmp.ne.s32.totalorder %s72, %s73
    %p82 = scmp.eq.s32.totalorder %s20, 0
    %p83 = por %p81, %p82
    %p84 = scmp.ne.s32.totalorder %s72, %s73
    %p85 = scmp.eq.s32.totalorder %s21, 1
    %p86 = por %p84, %p85
    %p88 = scmp.ne.s32.totalorder %s73, %s87
    %p89 = scmp.eq.s32.totalorder %s21, 0
    %p90 = por %p88, %p89
    %s92 = sadd.s32 %s91, 1
    %p95 = scmp.eq.s32.totalorder %s15, 1
    %p96 = scmp.ne.s32.totalorder %s91, %s93
    %p97 = scmp.eq.s32.totalorder %s15, 0
    %p98 = por %p96, %p97
    %p99 = scmp.ne.s32.totalorder %s91, %s93
    %p100 = scmp.eq.s32.totalorder %s20, 1
    %p101 = por %p99, %p100
    %p102 = scmp.ne.s32.totalorder %s93, %s94
    %p103 = scmp.eq.s32.totalorder %s20, 0
    %p104 = por %p102, %p103
    %p105 = scmp.ne.s32.totalorder %s93, %s94
    %p106 = scmp.eq.s32.totalorder %s21, 1
    %p107 = por %p105, %p106
    %p109 = scmp.ne.s32.totalorder %s94, %s108
    %p110 = scmp.eq.s32.totalorder %s21, 0
    %p111 = por %p109, %p110
    %s113 = sadd.s32 %s112, 1
    %p116 = scmp.eq.s32.totalorder %s15, 1
    %p117 = scmp.ne.s32.totalorder %s112, %s114
    %p118 = scmp.eq.s32.totalorder %s15, 0
    %p119 = por %p117, %p118
    %p120 = scmp.ne.s32.totalorder %s112, %s114
    %p121 = scmp.eq.s32.totalorder %s20, 1
    %p122 = por %p120, %p121
    %p123 = scmp.ne.s32.totalorder %s114, %s115
    %p124 = scmp.eq.s32.totalorder %s20, 0
    %p125 = por %p123, %p124
    %p126 = scmp.ne.s32.totalorder %s114, %s115
    %p127 = scmp.eq.s32.totalorder %s21, 1
    %p128 = por %p126, %p127
    %p130 = scmp.ne.s32.totalorder %s115, %s129
    %p131 = scmp.eq.s32.totalorder %s21, 0
    %p132 = por %p130, %p131
    %s134 = sadd.s32 %s133, 1
    %p137 = scmp.eq.s32.totalorder %s15, 1
    %p138 = scmp.ne.s32.totalorder %s133, %s135
    %p139 = scmp.eq.s32.totalorder %s15, 0
    %p140 = por %p138, %p139
    %p141 = scmp.ne.s32.totalorder %s133, %s135
    %p142 = scmp.eq.s32.totalorder %s20, 1
    %p143 = por %p141, %p142
    %p144 = scmp.ne.s32.totalorder %s135, %s136
    %p145 = scmp.eq.s32.totalorder %s20, 0
    %p146 = por %p144, %p145
    %p147 = scmp.ne.s32.totalorder %s135, %s136
    %p148 = scmp.eq.s32.totalorder %s21, 1
    %p149 = por %p147, %p148
    %p151 = scmp.ne.s32.totalorder %s136, %s150
    %p152 = scmp.eq.s32.totalorder %s21, 0
    %p153 = por %p151, %p152
    %s155 = sadd.s32 %s154, 1
    %p158 = scmp.eq.s32.totalorder %s15, 1
    %p159 = scmp.ne.s32.totalorder %s154, %s156
    %p160 = scmp.eq.s32.totalorder %s15, 0
    %p161 = por %p159, %p160
    %p162 = scmp.ne.s32.totalorder %s154, %s156
    %p163 = scmp.eq.s32.totalorder %s20, 1
    %p164 = por %p162, %p163
    %p165 = scmp.ne.s32.totalorder %s156, %s157
    %p166 = scmp.eq.s32.totalorder %s20, 0
    %p167 = por %p165, %p166
    %p168 = scmp.ne.s32.totalorder %s156, %s157
    %p169 = scmp.eq.s32.totalorder %s21, 1
    %p170 = por %p168, %p169
    %p172 = scmp.ne.s32.totalorder %s157, %s171
    %p173 = scmp.eq.s32.totalorder %s21, 0
    %p174 = por %p172, %p173
    %s176 = sadd.s32 %s175, 1
    %p179 = scmp.eq.s32.totalorder %s15, 1
    %p180 = scmp.ne.s32.totalorder %s175, %s177
    %p181 = scmp.eq.s32.totalorder %s15, 0
    %p182 = por %p180, %p181
    %p183 = scmp.ne.s32.totalorder %s175, %s177
    %p184 = scmp.eq.s32.totalorder %s20, 1
    %p185 = por %p183, %p184
    %p186 = scmp.ne.s32.totalorder %s177, %s178
    %p187 = scmp.eq.s32.totalorder %s20, 0
    %p188 = por %p186, %p187
    %p189 = scmp.ne.s32.totalorder %s177, %s178
    %p190 = scmp.eq.s32.totalorder %s21, 1
    %p191 = por %p189, %p190
    %p193 = scmp.ne.s32.totalorder %s178, %s192
    %p194 = scmp.eq.s32.totalorder %s21, 0
    %p195 = por %p193, %p194
    %s197 = sadd.s32 %s196, 1
    %p200 = scmp.eq.s32.totalorder %s15, 1
    %p201 = scmp.ne.s32.totalorder %s196, %s198
    %p202 = scmp.eq.s32.totalorder %s15, 0
    %p203 = por %p201, %p202
    %p204 = scmp.ne.s32.totalorder %s196, %s198
    %p205 = scmp.eq.s32.totalorder %s20, 1
    %p206 = por %p204, %p205
    %p207 = scmp.ne.s32.totalorder %s198, %s199
    %p208 = scmp.eq.s32.totalorder %s20, 0
    %p209 = por %p207, %p208
    %p210 = scmp.ne.s32.totalorder %s198, %s199
    %p211 = scmp.eq.s32.totalorder %s21, 1
    %p212 = por %p210, %p211
    %p214 = scmp.ne.s32.totalorder %s199, %s213
    %p215 = scmp.eq.s32.totalorder %s21, 0
    %p216 = por %p214, %p215
    %s217 = ssub.s32 %s15, %s22
    %p218 = scmp.eq.s32.totalorder %s217, 0
    %s220 = sadd.s32 %s219, 1
    %s221 = scalar_select %p218, %s219, %s220
    %p224 = pneg %p218
    %p225 = scmp.eq.s32.totalorder %s15, 1
    %p226 = por %p224, %p225
    %p227 = scmp.ne.s32.totalorder %s219, %s222
    %p228 = scmp.eq.s32.totalorder %s15, 0
    %p229 = por %p227, %p228
    %p230 = scmp.ne.s32.totalorder %s219, %s222
    %p231 = scmp.eq.s32.totalorder %s20, 1
    %p232 = por %p230, %p231
    %p233 = scmp.ne.s32.totalorder %s222, %s223
    %p234 = scmp.eq.s32.totalorder %s20, 0
    %p235 = por %p233, %p234
    %p236 = scmp.ne.s32.totalorder %s222, %s223
    %p237 = scmp.eq.s32.totalorder %s21, 1
    %p238 = por %p236, %p237
    %p240 = scmp.ne.s32.totalorder %s223, %s239
    %p241 = scmp.eq.s32.totalorder %s21, 0
    %p242 = por %p240, %p241
    %p243 = scmp.le.s32.totalorder 1, %s15
    %p244 = scmp.lt.s32.totalorder %s15, 3
    %p245 = pnand %p243, %p244
    %p246 = pneg %p245
    // Predicated region
    $region9: #{_lambda_.1} parent=5 // pred_check
      _
    $region10: #{_lambda_.1} parent=5 // pred_check_branch
      %248 = sbr.rel (%p245) target = $region12
    $region11: #{_lambda_.1} parent=5 // pred_region
      %s249 = ssub.s32 %s15, 1
      // Predicated region
      $region13: #{_lambda_.1} parent=11 // pred_check
        %p250 = pneg %p62
      $region14: #{_lambda_.1} parent=11 // pred_check_branch
        %252 = sbr.rel (%p250) target = $region16
      $region15: #{_lambda_.1} parent=11 // pred_region
        _
      $region16: #{_lambda_.1} parent=11 // pred_fallthru
        _
      // Predicated region
      $region17: #{_lambda_.1} parent=11 // pred_check
        %p253 = pneg %p83
      $region18: #{_lambda_.1} parent=11 // pred_check_branch
        %255 = sbr.rel (%p253) target = $region20
      $region19: #{_lambda_.1} parent=11 // pred_region
        _
      $region20: #{_lambda_.1} parent=11 // pred_fallthru
        _
      // Predicated region
      $region21: #{_lambda_.1} parent=11 // pred_check
        %p256 = pneg %p104
      $region22: #{_lambda_.1} parent=11 // pred_check_branch
        %258 = sbr.rel (%p256) target = $region24
      $region23: #{_lambda_.1} parent=11 // pred_region
        _
      $region24: #{_lambda_.1} parent=11 // pred_fallthru
        _
      // Predicated region
      $region25: #{_lambda_.1} parent=11 // pred_check
        %p259 = pneg %p125
      $region26: #{_lambda_.1} parent=11 // pred_check_branch
        %261 = sbr.rel (%p259) target = $region28
      $region27: #{_lambda_.1} parent=11 // pred_region
        _
      $region28: #{_lambda_.1} parent=11 // pred_fallthru
        _
      // Predicated region
      $region29: #{_lambda_.1} parent=11 // pred_check
        %p262 = pneg %p146
      $region30: #{_lambda_.1} parent=11 // pred_check_branch
        %264 = sbr.rel (%p262) target = $region32
      $region31: #{_lambda_.1} parent=11 // pred_region
        _
      $region32: #{_lambda_.1} parent=11 // pred_fallthru
        _
      // Predicated region
      $region33: #{_lambda_.1} parent=11 // pred_check
        %p265 = pneg %p167
      $region34: #{_lambda_.1} parent=11 // pred_check_branch
        %267 = sbr.rel (%p265) target = $region36
      $region35: #{_lambda_.1} parent=11 // pred_region
        _
      $region36: #{_lambda_.1} parent=11 // pred_fallthru
        _
      // Predicated region
      $region37: #{_lambda_.1} parent=11 // pred_check
        %p268 = pneg %p188
      $region38: #{_lambda_.1} parent=11 // pred_check_branch
        %270 = sbr.rel (%p268) target = $region40
      $region39: #{_lambda_.1} parent=11 // pred_region
        _
      $region40: #{_lambda_.1} parent=11 // pred_fallthru
        _
      // Predicated region
      $region41: #{_lambda_.1} parent=11 // pred_check
        %p271 = pneg %p209
      $region42: #{_lambda_.1} parent=11 // pred_check_branch
        %273 = sbr.rel (%p271) target = $region44
      $region43: #{_lambda_.1} parent=11 // pred_region
        _
      $region44: #{_lambda_.1} parent=11 // pred_fallthru
        _
    $region12: #{_lambda_.1} parent=5 // pred_fallthru
      _
    %p274 = scmp.lt.s32.totalorder %s15, 2
    // Predicated region
    $region45: #{_lambda_.1} parent=5 // pred_check
      %p275 = pneg %p274
    $region46: #{_lambda_.1} parent=5 // pred_check_branch
      %277 = sbr.rel (%p275) target = $region48
    $region47: #{_lambda_.1} parent=5 // pred_region
      // Predicated region
      $region49: #{_lambda_.1} parent=47 // pred_check
        %p278 = pneg %p35
      $region50: #{_lambda_.1} parent=47 // pred_check_branch
        %280 = sbr.rel (%p278) target = $region52
      $region51: #{_lambda_.1} parent=47 // pred_region
        %p281 = scmp.lt.s32.totalorder %s15, 1
        %s282 = scalar_select %p281, %s15, 1
        %s283 = smul.addr %s282, 2
        %s284 = smul.addr %s283, 8
        %s285 = scalar_lea.vmem %s0, %s284
      $region52: #{_lambda_.1} parent=47 // pred_fallthru
        _
    $region48: #{_lambda_.1} parent=5 // pred_fallthru
      _
    %p286 = scmp.le.s32.totalorder 1, %s15
    %p287 = scmp.lt.s32.totalorder %s15, 3
    %p288 = pnand %p286, %p287
    %p289 = pneg %p288
    // Predicated region
    $region53: #{_lambda_.1} parent=5 // pred_check
      _
    $region54: #{_lambda_.1} parent=5 // pred_check_branch
      %291 = sbr.rel (%p288) target = $region56
    $region55: #{_lambda_.1} parent=5 // pred_region
      %s292 = ssub.s32 %s15, 1
      %p293 = scmp.lt.s32.totalorder %s20, 1
      %s294 = scalar_select %p293, %s20, 1
      %s295 = smul.addr %s294, 2
      %s296 = smul.addr %s295, 8
      %s297 = scalar_lea.vmem %s0, %s296
      %p298 = pneg %p41
      %p299 = pneg %p38
      %p300 = pneg %p62
      %p301 = pneg %p59
      %p302 = pneg %p83
      %p303 = pneg %p80
      %p304 = pneg %p104
      %p305 = pneg %p101
      %p306 = pneg %p125
      %p307 = pneg %p122
      %p308 = pneg %p146
      %p309 = pneg %p143
      %p310 = pneg %p167
      %p311 = pneg %p164
      %p312 = pneg %p188
      %p313 = pneg %p185
      %p314 = pneg %p209
      %p315 = pneg %p206
      %p316 = pneg %p235
      %p317 = pneg %p232
      %p318 = scmp.lt.s32.totalorder %s20, 1
      %s319 = scalar_select %p318, %s20, 1
      %s320 = smul.addr %s319, 8
      %s321 = scalar_lea.vmem %s9, %s320
      %p322 = scmp.lt.s32.totalorder %s20, 1
      %s323 = scalar_select %p322, %s20, 1
      %s324 = smul.addr %s323, 2
      %s325 = smul.addr %s324, 8
      %s326 = scalar_lea.vmem %s0, %s325
      %p327 = scmp.lt.s32.totalorder %s20, 1
      %s328 = scalar_select %p327, %s20, 1
      %s329 = smul.addr %s328, 8
      %s330 = scalar_lea.vmem %s9, %s329
      %v331 = vld [vmem:[%s326] sm:$0xff]
      %v332 = vld [vmem:[%s326 + $0x8] sm:$0xff]
      %v333 = vld [vmem:[%s4] sm:$0xff]
      %v334 = vld [vmem:[%s8] sm:$0xff]
      %336 = vset.pattern.permute.xlu0 0
      %337 = vperm.xlu0 %336, %v334
      %v338 = vpop.permute.xlu0 %337
      %vm340 = vcmask 130048
      %v342 = vsel %vm340, %v333, 0
      %344 = vmatprep.subr.mxu0 0.0
      %345 = vmatpush1.msra.mxu0 %v331
      %346 = vmatprep.subr.mxu0 0.0
      %347 = vmatpush1.msra.mxu0 %v332
      %348 = vmatprep.subr.mxu0 0.0
      %349 = vmatpush1.msra.mxu0 0.0
      %350 = vmatprep.subr.mxu0 0.0
      %351 = vmatpush1.msra.mxu0 0.0
      %352 = vmatprep.subr.mxu0 0.0
      %353 = vmatpush1.msra.mxu0 0.0
      %354 = vmatprep.subr.mxu0 0.0
      %355 = vmatpush1.msra.mxu0 0.0
      %356 = vmatprep.subr.mxu0 0.0
      %357 = vmatpush1.msra.mxu0 0.0
      %358 = vmatprep.subr.mxu0 0.0
      %359 = vmatpush1.msra.mxu0 0.0
      %360 = vmatprep.subr.mxu0 0.0
      %361 = vmatpush1.msra.mxu0 0.0
      %362 = vmatprep.subr.mxu0 0.0
      %363 = vmatpush1.msra.mxu0 0.0
      %364 = vmatprep.subr.mxu0 0.0
      %365 = vmatpush1.msra.mxu0 0.0
      %366 = vmatprep.subr.mxu0 0.0
      %367 = vmatpush1.msra.mxu0 0.0
      %368 = vmatprep.subr.mxu0 0.0
      %369 = vmatpush1.msra.mxu0 0.0
      %370 = vmatprep.subr.mxu0 0.0
      %371 = vmatpush1.msra.mxu0 0.0
      %372 = vmatprep.subr.mxu0 0.0
      %373 = vmatpush1.msra.mxu0 0.0
      %374 = vmatprep.subr.mxu0 0.0
      %375 = vmatpush1.msra.mxu0 0.0
      %376 = vmatprep.subr.mxu0 0.0
      %377 = vmatpush1.msra.mxu0 0.0
      %378 = vmatprep.subr.mxu0 0.0
      %379 = vmatpush1.msra.mxu0 0.0
      %380 = vmatprep.subr.mxu0 0.0
      %381 = vmatpush1.msra.mxu0 0.0
      %382 = vmatprep.subr.mxu0 0.0
      %383 = vmatpush1.msra.mxu0 0.0
      %384 = vmatprep.subr.mxu0 0.0
      %385 = vmatpush1.msra.mxu0 0.0
      %386 = vmatprep.subr.mxu0 0.0
      %387 = vmatpush1.msra.mxu0 0.0
      %388 = vmatprep.subr.mxu0 0.0
      %389 = vmatpush1.msra.mxu0 0.0
      %390 = vmatprep.subr.mxu0 0.0
      %391 = vmatpush1.msra.mxu0 0.0
      %392 = vmatprep.subr.mxu0 0.0
      %393 = vmatpush1.msra.mxu0 0.0
      %394 = vmatprep.subr.mxu0 0.0
      %395 = vmatpush1.msra.mxu0 0.0
      %396 = vmatprep.subr.mxu0 0.0
      %397 = vmatpush1.msra.mxu0 0.0
      %398 = vmatprep.subr.mxu0 0.0
      %399 = vmatpush1.msra.mxu0 0.0
      %400 = vmatprep.subr.mxu0 0.0
      %401 = vmatpush1.msra.mxu0 0.0
      %402 = vmatprep.subr.mxu0 0.0
      %403 = vmatpush1.msra.mxu0 0.0
      %404 = vmatprep.subr.mxu0 0.0
      %405 = vmatpush1.msra.mxu0 0.0
      %406 = vmatprep.subr.mxu0 0.0
      %407 = vmatpush1.msra.mxu0 0.0
      %408 = vmatprep.mubr.f32.mxu0 0.0
      %409 = vmatmul.mubr.f32.gmra.mrb[0].mxu0 %v342
      %v410 = vpop.f32.mrb[0].mxu0
      %v411 = vadd.f32 %v338, %v410
      %v412 = vpop.f32.mrb[0].mxu0
      %413 = vdwg.mxu0
      %v414 = vmax.f32 %v411, 0.0
      %v415 = vld [vmem:[%s1] sm:$0xff]
      %v416 = vld [vmem:[%s1 + $0x8] sm:$0xff]
      %v417 = vld [vmem:[%s1 + $0x10] sm:$0xff]
      %v418 = vld [vmem:[%s1 + $0x18] sm:$0xff]
      %v419 = vld [vmem:[%s1 + $0x20] sm:$0xff]
      %v420 = vld [vmem:[%s1 + $0x28] sm:$0xff]
      %v421 = vld [vmem:[%s1 + $0x30] sm:$0xff]
      %v422 = vld [vmem:[%s1 + $0x38] sm:$0xff]
      %vm423 = vcmask 523264
      %v425 = vsel %vm423, %v414, 0
      %427 = vmatprep.subr.mxu0 0.0
      %428 = vmatpush1.msra.mxu0 %v415
      %429 = vmatprep.subr.mxu0 0.0
      %430 = vmatpush1.msra.mxu0 %v416
      %431 = vmatprep.subr.mxu0 0.0
      %432 = vmatpush1.msra.mxu0 %v417
      %433 = vmatprep.subr.mxu0 0.0
      %434 = vmatpush1.msra.mxu0 %v418
      %435 = vmatprep.subr.mxu0 0.0
      %436 = vmatpush1.msra.mxu0 %v419
      %437 = vmatprep.subr.mxu0 0.0
      %438 = vmatpush1.msra.mxu0 %v420
      %439 = vmatprep.subr.mxu0 0.0
      %440 = vmatpush1.msra.mxu0 %v421
      %441 = vmatprep.subr.mxu0 0.0
      %442 = vmatpush1.msra.mxu0 %v422
      %443 = vmatprep.subr.mxu0 0.0
      %444 = vmatpush1.msra.mxu0 0.0
      %445 = vmatprep.subr.mxu0 0.0
      %446 = vmatpush1.msra.mxu0 0.0
      %447 = vmatprep.subr.mxu0 0.0
      %448 = vmatpush1.msra.mxu0 0.0
      %449 = vmatprep.subr.mxu0 0.0
      %450 = vmatpush1.msra.mxu0 0.0
      %451 = vmatprep.subr.mxu0 0.0
      %452 = vmatpush1.msra.mxu0 0.0
      %453 = vmatprep.subr.mxu0 0.0
      %454 = vmatpush1.msra.mxu0 0.0
      %455 = vmatprep.subr.mxu0 0.0
      %456 = vmatpush1.msra.mxu0 0.0
      %457 = vmatprep.subr.mxu0 0.0
      %458 = vmatpush1.msra.mxu0 0.0
      %459 = vmatprep.subr.mxu0 0.0
      %460 = vmatpush1.msra.mxu0 0.0
      %461 = vmatprep.subr.mxu0 0.0
      %462 = vmatpush1.msra.mxu0 0.0
      %463 = vmatprep.subr.mxu0 0.0
      %464 = vmatpush1.msra.mxu0 0.0
      %465 = vmatprep.subr.mxu0 0.0
      %466 = vmatpush1.msra.mxu0 0.0
      %467 = vmatprep.subr.mxu0 0.0
      %468 = vmatpush1.msra.mxu0 0.0
      %469 = vmatprep.subr.mxu0 0.0
      %470 = vmatpush1.msra.mxu0 0.0
      %471 = vmatprep.subr.mxu0 0.0
      %472 = vmatpush1.msra.mxu0 0.0
      %473 = vmatprep.subr.mxu0 0.0
      %474 = vmatpush1.msra.mxu0 0.0
      %475 = vmatprep.subr.mxu0 0.0
      %476 = vmatpush1.msra.mxu0 0.0
      %477 = vmatprep.subr.mxu0 0.0
      %478 = vmatpush1.msra.mxu0 0.0
      %479 = vmatprep.subr.mxu0 0.0
      %480 = vmatpush1.msra.mxu0 0.0
      %481 = vmatprep.subr.mxu0 0.0
      %482 = vmatpush1.msra.mxu0 0.0
      %483 = vmatprep.subr.mxu0 0.0
      %484 = vmatpush1.msra.mxu0 0.0
      %485 = vmatprep.subr.mxu0 0.0
      %486 = vmatpush1.msra.mxu0 0.0
      %487 = vmatprep.subr.mxu0 0.0
      %488 = vmatpush1.msra.mxu0 0.0
      %489 = vmatprep.subr.mxu0 0.0
      %490 = vmatpush1.msra.mxu0 0.0
      %491 = vmatprep.mubr.f32.mxu0 0.0
      %492 = vmatmul.mubr.f32.gmra.mrb[0].mxu0 %v425
      %v493 = vpop.f32.mrb[0].mxu0
      %v494 = vadd.f32 0.0, %v493
      %v495 = vpop.f32.mrb[0].mxu0
      %496 = vdwg.mxu0
      %s497 = scalar_lea.vmem %s1, 64
      %v498 = vld [vmem:[%s497] sm:$0xff]
      %v499 = vld [vmem:[%s497 + $0x8] sm:$0xff]
      %v500 = vld [vmem:[%s497 + $0x10] sm:$0xff]
      %v501 = vld [vmem:[%s497 + $0x18] sm:$0xff]
      %v502 = vld [vmem:[%s497 + $0x20] sm:$0xff]
      %v503 = vld [vmem:[%s497 + $0x28] sm:$0xff]
      %v504 = vld [vmem:[%s497 + $0x30] sm:$0xff]
      %v505 = vld [vmem:[%s497 + $0x38] sm:$0xff]
      %506 = vmatprep.subr.mxu0 0.0
      %507 = vmatpush1.msra.mxu0 %v498
      %508 = vmatprep.subr.mxu0 0.0
      %509 = vmatpush1.msra.mxu0 %v499
      %510 = vmatprep.subr.mxu0 0.0
      %511 = vmatpush1.msra.mxu0 %v500
      %512 = vmatprep.subr.mxu0 0.0
      %513 = vmatpush1.msra.mxu0 %v501
      %514 = vmatprep.subr.mxu0 0.0
      %515 = vmatpush1.msra.mxu0 %v502
      %516 = vmatprep.subr.mxu0 0.0
      %517 = vmatpush1.msra.mxu0 %v503
      %518 = vmatprep.subr.mxu0 0.0
      %519 = vmatpush1.msra.mxu0 %v504
      %520 = vmatprep.subr.mxu0 0.0
      %521 = vmatpush1.msra.mxu0 %v505
      %522 = vmatprep.subr.mxu0 0.0
      %523 = vmatpush1.msra.mxu0 0.0
      %524 = vmatprep.subr.mxu0 0.0
      %525 = vmatpush1.msra.mxu0 0.0
      %526 = vmatprep.subr.mxu0 0.0
      %527 = vmatpush1.msra.mxu0 0.0
      %528 = vmatprep.subr.mxu0 0.0
      %529 = vmatpush1.msra.mxu0 0.0
      %530 = vmatprep.subr.mxu0 0.0
      %531 = vmatpush1.msra.mxu0 0.0
      %532 = vmatprep.subr.mxu0 0.0
      %533 = vmatpush1.msra.mxu0 0.0
      %534 = vmatprep.subr.mxu0 0.0
      %535 = vmatpush1.msra.mxu0 0.0
      %536 = vmatprep.subr.mxu0 0.0
      %537 = vmatpush1.msra.mxu0 0.0
      %538 = vmatprep.subr.mxu0 0.0
      %539 = vmatpush1.msra.mxu0 0.0
      %540 = vmatprep.subr.mxu0 0.0
      %541 = vmatpush1.msra.mxu0 0.0
      %542 = vmatprep.subr.mxu0 0.0
      %543 = vmatpush1.msra.mxu0 0.0
      %544 = vmatprep.subr.mxu0 0.0
      %545 = vmatpush1.msra.mxu0 0.0
      %546 = vmatprep.subr.mxu0 0.0
      %547 = vmatpush1.msra.mxu0 0.0
      %548 = vmatprep.subr.mxu0 0.0
      %549 = vmatpush1.msra.mxu0 0.0
      %550 = vmatprep.subr.mxu0 0.0
      %551 = vmatpush1.msra.mxu0 0.0
      %552 = vmatprep.subr.mxu0 0.0
      %553 = vmatpush1.msra.mxu0 0.0
      %554 = vmatprep.subr.mxu0 0.0
      %555 = vmatpush1.msra.mxu0 0.0
      %556 = vmatprep.subr.mxu0 0.0
      %557 = vmatpush1.msra.mxu0 0.0
      %558 = vmatprep.subr.mxu0 0.0
      %559 = vmatpush1.msra.mxu0 0.0
      %560 = vmatprep.subr.mxu0 0.0
      %561 = vmatpush1.msra.mxu0 0.0
      %562 = vmatprep.subr.mxu0 0.0
      %563 = vmatpush1.msra.mxu0 0.0
      %564 = vmatprep.subr.mxu0 0.0
      %565 = vmatpush1.msra.mxu0 0.0
      %566 = vmatprep.subr.mxu0 0.0
      %567 = vmatpush1.msra.mxu0 0.0
      %568 = vmatprep.subr.mxu0 0.0
      %569 = vmatpush1.msra.mxu0 0.0
      %570 = vmatprep.mubr.f32.mxu0 0.0
      %571 = vmatmul.mubr.f32.gmra.mrb[0].mxu0 %v425
      %v572 = vpop.f32.mrb[0].mxu0
      %v573 = vadd.f32 0.0, %v572
      %v574 = vpop.f32.mrb[0].mxu0
      %575 = vdwg.mxu0
      %s576 = scalar_lea.vmem %s1, 128
      %v577 = vld [vmem:[%s576] sm:$0xff]
      %v578 = vld [vmem:[%s576 + $0x8] sm:$0xff]
      %v579 = vld [vmem:[%s576 + $0x10] sm:$0xff]
      %v580 = vld [vmem:[%s576 + $0x18] sm:$0xff]
      %v581 = vld [vmem:[%s576 + $0x20] sm:$0xff]
      %v582 = vld [vmem:[%s576 + $0x28] sm:$0xff]
      %v583 = vld [vmem:[%s576 + $0x30] sm:$0xff]
      %v584 = vld [vmem:[%s576 + $0x38] sm:$0xff]
      %585 = vmatprep.subr.mxu0 0.0
      %586 = vmatpush1.msra.mxu0 %v577
      %587 = vmatprep.subr.mxu0 0.0
      %588 = vmatpush1.msra.mxu0 %v578
      %589 = vmatprep.subr.mxu0 0.0
      %590 = vmatpush1.msra.mxu0 %v579
      %591 = vmatprep.subr.mxu0 0.0
      %592 = vmatpush1.msra.mxu0 %v580
      %593 = vmatprep.subr.mxu0 0.0
      %594 = vmatpush1.msra.mxu0 %v581
      %595 = vmatprep.subr.mxu0 0.0
      %596 = vmatpush1.msra.mxu0 %v582
      %597 = vmatprep.subr.mxu0 0.0
      %598 = vmatpush1.msra.mxu0 %v583
      %599 = vmatprep.subr.mxu0 0.0
      %600 = vmatpush1.msra.mxu0 %v584
      %601 = vmatprep.subr.mxu0 0.0
      %602 = vmatpush1.msra.mxu0 0.0
      %603 = vmatprep.subr.mxu0 0.0
      %604 = vmatpush1.msra.mxu0 0.0
      %605 = vmatprep.subr.mxu0 0.0
      %606 = vmatpush1.msra.mxu0 0.0
      %607 = vmatprep.subr.mxu0 0.0
      %608 = vmatpush1.msra.mxu0 0.0
      %609 = vmatprep.subr.mxu0 0.0
      %610 = vmatpush1.msra.mxu0 0.0
      %611 = vmatprep.subr.mxu0 0.0
      %612 = vmatpush1.msra.mxu0 0.0
      %613 = vmatprep.subr.mxu0 0.0
      %614 = vmatpush1.msra.mxu0 0.0
      %615 = vmatprep.subr.mxu0 0.0
      %616 = vmatpush1.msra.mxu0 0.0
      %617 = vmatprep.subr.mxu0 0.0
      %618 = vmatpush1.msra.mxu0 0.0
      %619 = vmatprep.subr.mxu0 0.0
      %620 = vmatpush1.msra.mxu0 0.0
      %621 = vmatprep.subr.mxu0 0.0
      %622 = vmatpush1.msra.mxu0 0.0
      %623 = vmatprep.subr.mxu0 0.0
      %624 = vmatpush1.msra.mxu0 0.0
      %625 = vmatprep.subr.mxu0 0.0
      %626 = vmatpush1.msra.mxu0 0.0
      %627 = vmatprep.subr.mxu0 0.0
      %628 = vmatpush1.msra.mxu0 0.0
      %629 = vmatprep.subr.mxu0 0.0
      %630 = vmatpush1.msra.mxu0 0.0
      %631 = vmatprep.subr.mxu0 0.0
      %632 = vmatpush1.msra.mxu0 0.0
      %633 = vmatprep.subr.mxu0 0.0
      %634 = vmatpush1.msra.mxu0 0.0
      %635 = vmatprep.subr.mxu0 0.0
      %636 = vmatpush1.msra.mxu0 0.0
      %637 = vmatprep.subr.mxu0 0.0
      %638 = vmatpush1.msra.mxu0 0.0
      %639 = vmatprep.subr.mxu0 0.0
      %640 = vmatpush1.msra.mxu0 0.0
      %641 = vmatprep.subr.mxu0 0.0
      %642 = vmatpush1.msra.mxu0 0.0
      %643 = vmatprep.subr.mxu0 0.0
      %644 = vmatpush1.msra.mxu0 0.0
      %645 = vmatprep.subr.mxu0 0.0
      %646 = vmatpush1.msra.mxu0 0.0
      %647 = vmatprep.subr.mxu0 0.0
      %648 = vmatpush1.msra.mxu0 0.0
      %649 = vmatprep.mubr.f32.mxu0 0.0
      %650 = vmatmul.mubr.f32.gmra.mrb[0].mxu0 %v425
      %v651 = vpop.f32.mrb[0].mxu0
      %v652 = vadd.f32 0.0, %v651
      %v653 = vpop.f32.mrb[0].mxu0
      %654 = vdwg.mxu0
      %s655 = scalar_lea.vmem %s1, 192
      %v656 = vld [vmem:[%s655] sm:$0xff]
      %v657 = vld [vmem:[%s655 + $0x8] sm:$0xff]
      %v658 = vld [vmem:[%s655 + $0x10] sm:$0xff]
      %v659 = vld [vmem:[%s655 + $0x18] sm:$0xff]
      %v660 = vld [vmem:[%s655 + $0x20] sm:$0xff]
      %v661 = vld [vmem:[%s655 + $0x28] sm:$0xff]
      %v662 = vld [vmem:[%s655 + $0x30] sm:$0xff]
      %v663 = vld [vmem:[%s655 + $0x38] sm:$0xff]
      %664 = vmatprep.subr.mxu0 0.0
      %665 = vmatpush1.msra.mxu0 %v656
      %666 = vmatprep.subr.mxu0 0.0
      %667 = vmatpush1.msra.mxu0 %v657
      %668 = vmatprep.subr.mxu0 0.0
      %669 = vmatpush1.msra.mxu0 %v658
      %670 = vmatprep.subr.mxu0 0.0
      %671 = vmatpush1.msra.mxu0 %v659
      %672 = vmatprep.subr.mxu0 0.0
      %673 = vmatpush1.msra.mxu0 %v660
      %674 = vmatprep.subr.mxu0 0.0
      %675 = vmatpush1.msra.mxu0 %v661
      %676 = vmatprep.subr.mxu0 0.0
      %677 = vmatpush1.msra.mxu0 %v662
      %678 = vmatprep.subr.mxu0 0.0
      %679 = vmatpush1.msra.mxu0 %v663
      %680 = vmatprep.subr.mxu0 0.0
      %681 = vmatpush1.msra.mxu0 0.0
      %682 = vmatprep.subr.mxu0 0.0
      %683 = vmatpush1.msra.mxu0 0.0
      %684 = vmatprep.subr.mxu0 0.0
      %685 = vmatpush1.msra.mxu0 0.0
      %686 = vmatprep.subr.mxu0 0.0
      %687 = vmatpush1.msra.mxu0 0.0
      %688 = vmatprep.subr.mxu0 0.0
      %689 = vmatpush1.msra.mxu0 0.0
      %690 = vmatprep.subr.mxu0 0.0
      %691 = vmatpush1.msra.mxu0 0.0
      %692 = vmatprep.subr.mxu0 0.0
      %693 = vmatpush1.msra.mxu0 0.0
      %694 = vmatprep.subr.mxu0 0.0
      %695 = vmatpush1.msra.mxu0 0.0
      %696 = vmatprep.subr.mxu0 0.0
      %697 = vmatpush1.msra.mxu0 0.0
      %698 = vmatprep.subr.mxu0 0.0
      %699 = vmatpush1.msra.mxu0 0.0
      %700 = vmatprep.subr.mxu0 0.0
      %701 = vmatpush1.msra.mxu0 0.0
      %702 = vmatprep.subr.mxu0 0.0
      %703 = vmatpush1.msra.mxu0 0.0
      %704 = vmatprep.subr.mxu0 0.0
      %705 = vmatpush1.msra.mxu0 0.0
      %706 = vmatprep.subr.mxu0 0.0
      %707 = vmatpush1.msra.mxu0 0.0
      %708 = vmatprep.subr.mxu0 0.0
      %709 = vmatpush1.msra.mxu0 0.0
      %710 = vmatprep.subr.mxu0 0.0
      %711 = vmatpush1.msra.mxu0 0.0
      %712 = vmatprep.subr.mxu0 0.0
      %713 = vmatpush1.msra.mxu0 0.0
      %714 = vmatprep.subr.mxu0 0.0
      %715 = vmatpush1.msra.mxu0 0.0
      %716 = vmatprep.subr.mxu0 0.0
      %717 = vmatpush1.msra.mxu0 0.0
      %718 = vmatprep.subr.mxu0 0.0
      %719 = vmatpush1.msra.mxu0 0.0
      %720 = vmatprep.subr.mxu0 0.0
      %721 = vmatpush1.msra.mxu0 0.0
      %722 = vmatprep.subr.mxu0 0.0
      %723 = vmatpush1.msra.mxu0 0.0
      %724 = vmatprep.subr.mxu0 0.0
      %725 = vmatpush1.msra.mxu0 0.0
      %726 = vmatprep.subr.mxu0 0.0
      %727 = vmatpush1.msra.mxu0 0.0
      %728 = vmatprep.mubr.f32.mxu0 0.0
      %729 = vmatmul.mubr.f32.gmra.mrb[0].mxu0 %v425
      %v730 = vpop.f32.mrb[0].mxu0
      %v731 = vadd.f32 0.0, %v730
      %v732 = vpop.f32.mrb[0].mxu0
      %733 = vdwg.mxu0
      %v734 = vld [vmem:[%s5] sm:$0xff]
      %s735 = scalar_lea.vmem %s8, 8
      %v736 = vld [vmem:[%s735] sm:$0xff]
      %738 = vset.pattern.permute.xlu0 0
      %739 = vperm.xlu0 %738, %v736
      %v740 = vpop.permute.xlu0 %739
      %vm742 = vcmask 261120
      %v744 = vsel %vm742, %v734, 0
      %746 = vmatprep.subr.mxu0 0.0
      %747 = vmatpush1.msra.mxu0 %v494
      %748 = vmatprep.subr.mxu0 0.0
      %749 = vmatpush1.msra.mxu0 %v573
      %750 = vmatprep.subr.mxu0 0.0
      %751 = vmatpush1.msra.mxu0 %v652
      %752 = vmatprep.subr.mxu0 0.0
      %753 = vmatpush1.msra.mxu0 %v731
      %754 = vmatprep.subr.mxu0 0.0
      %755 = vmatpush1.msra.mxu0 0.0
      %756 = vmatprep.subr.mxu0 0.0
      %757 = vmatpush1.msra.mxu0 0.0
      %758 = vmatprep.subr.mxu0 0.0
      %759 = vmatpush1.msra.mxu0 0.0
      %760 = vmatprep.subr.mxu0 0.0
      %761 = vmatpush1.msra.mxu0 0.0
      %762 = vmatprep.subr.mxu0 0.0
      %763 = vmatpush1.msra.mxu0 0.0
      %764 = vmatprep.subr.mxu0 0.0
      %765 = vmatpush1.msra.mxu0 0.0
      %766 = vmatprep.subr.mxu0 0.0
      %767 = vmatpush1.msra.mxu0 0.0
      %768 = vmatprep.subr.mxu0 0.0
      %769 = vmatpush1.msra.mxu0 0.0
      %770 = vmatprep.subr.mxu0 0.0
      %771 = vmatpush1.msra.mxu0 0.0
      %772 = vmatprep.subr.mxu0 0.0
      %773 = vmatpush1.msra.mxu0 0.0
      %774 = vmatprep.subr.mxu0 0.0
      %775 = vmatpush1.msra.mxu0 0.0
      %776 = vmatprep.subr.mxu0 0.0
      %777 = vmatpush1.msra.mxu0 0.0
      %778 = vmatprep.subr.mxu0 0.0
      %779 = vmatpush1.msra.mxu0 0.0
      %780 = vmatprep.subr.mxu0 0.0
      %781 = vmatpush1.msra.mxu0 0.0
      %782 = vmatprep.subr.mxu0 0.0
      %783 = vmatpush1.msra.mxu0 0.0
      %784 = vmatprep.subr.mxu0 0.0
      %785 = vmatpush1.msra.mxu0 0.0
      %786 = vmatprep.subr.mxu0 0.0
      %787 = vmatpush1.msra.mxu0 0.0
      %788 = vmatprep.subr.mxu0 0.0
      %789 = vmatpush1.msra.mxu0 0.0
      %790 = vmatprep.subr.mxu0 0.0
      %791 = vmatpush1.msra.mxu0 0.0
      %792 = vmatprep.subr.mxu0 0.0
      %793 = vmatpush1.msra.mxu0 0.0
      %794 = vmatprep.subr.mxu0 0.0
      %795 = vmatpush1.msra.mxu0 0.0
      %796 = vmatprep.subr.mxu0 0.0
      %797 = vmatpush1.msra.mxu0 0.0
      %798 = vmatprep.subr.mxu0 0.0
      %799 = vmatpush1.msra.mxu0 0.0
      %800 = vmatprep.subr.mxu0 0.0
      %801 = vmatpush1.msra.mxu0 0.0
      %802 = vmatprep.subr.mxu0 0.0
      %803 = vmatpush1.msra.mxu0 0.0
      %804 = vmatprep.subr.mxu0 0.0
      %805 = vmatpush1.msra.mxu0 0.0
      %806 = vmatprep.subr.mxu0 0.0
      %807 = vmatpush1.msra.mxu0 0.0
      %808 = vmatprep.subr.mxu0 0.0
      %809 = vmatpush1.msra.mxu0 0.0
      %810 = vmatprep.mubr.f32.mxu0 0.0
      %811 = vmatmul.mubr.f32.gmra.mrb[0].mxu0 %v744
      %v812 = vpop.f32.mrb[0].mxu0
      %v813 = vadd.f32 %v740, %v812
      %v814 = vpop.f32.mrb[0].mxu0
      %815 = vdwg.mxu0
      %v816 = vmax.f32 %v813, 0.0
      %v817 = vld [vmem:[%s2] sm:$0xff]
      %v818 = vld [vmem:[%s2 + $0x8] sm:$0xff]
      %v820 = vsel %vm340, %v816, 0
      %822 = vmatprep.subr.mxu0 0.0
      %823 = vmatpush1.msra.mxu0 %v817
      %824 = vmatprep.subr.mxu0 0.0
      %825 = vmatpush1.msra.mxu0 %v818
      %826 = vmatprep.subr.mxu0 0.0
      %827 = vmatpush1.msra.mxu0 0.0
      %828 = vmatprep.subr.mxu0 0.0
      %829 = vmatpush1.msra.mxu0 0.0
      %830 = vmatprep.subr.mxu0 0.0
      %831 = vmatpush1.msra.mxu0 0.0
      %832 = vmatprep.subr.mxu0 0.0
      %833 = vmatpush1.msra.mxu0 0.0
      %834 = vmatprep.subr.mxu0 0.0
      %835 = vmatpush1.msra.mxu0 0.0
      %836 = vmatprep.subr.mxu0 0.0
      %837 = vmatpush1.msra.mxu0 0.0
      %838 = vmatprep.subr.mxu0 0.0
      %839 = vmatpush1.msra.mxu0 0.0
      %840 = vmatprep.subr.mxu0 0.0
      %841 = vmatpush1.msra.mxu0 0.0
      %842 = vmatprep.subr.mxu0 0.0
      %843 = vmatpush1.msra.mxu0 0.0
      %844 = vmatprep.subr.mxu0 0.0
      %845 = vmatpush1.msra.mxu0 0.0
      %846 = vmatprep.subr.mxu0 0.0
      %847 = vmatpush1.msra.mxu0 0.0
      %848 = vmatprep.subr.mxu0 0.0
      %849 = vmatpush1.msra.mxu0 0.0
      %850 = vmatprep.subr.mxu0 0.0
      %851 = vmatpush1.msra.mxu0 0.0
      %852 = vmatprep.subr.mxu0 0.0
      %853 = vmatpush1.msra.mxu0 0.0
      %854 = vmatprep.subr.mxu0 0.0
      %855 = vmatpush1.msra.mxu0 0.0
      %856 = vmatprep.subr.mxu0 0.0
      %857 = vmatpush1.msra.mxu0 0.0
      %858 = vmatprep.subr.mxu0 0.0
      %859 = vmatpush1.msra.mxu0 0.0
      %860 = vmatprep.subr.mxu0 0.0
      %861 = vmatpush1.msra.mxu0 0.0
      %862 = vmatprep.subr.mxu0 0.0
      %863 = vmatpush1.msra.mxu0 0.0
      %864 = vmatprep.subr.mxu0 0.0
      %865 = vmatpush1.msra.mxu0 0.0
      %866 = vmatprep.subr.mxu0 0.0
      %867 = vmatpush1.msra.mxu0 0.0
      %868 = vmatprep.subr.mxu0 0.0
      %869 = vmatpush1.msra.mxu0 0.0
      %870 = vmatprep.subr.mxu0 0.0
      %871 = vmatpush1.msra.mxu0 0.0
      %872 = vmatprep.subr.mxu0 0.0
      %873 = vmatpush1.msra.mxu0 0.0
      %874 = vmatprep.subr.mxu0 0.0
      %875 = vmatpush1.msra.mxu0 0.0
      %876 = vmatprep.subr.mxu0 0.0
      %877 = vmatpush1.msra.mxu0 0.0
      %878 = vmatprep.subr.mxu0 0.0
      %879 = vmatpush1.msra.mxu0 0.0
      %880 = vmatprep.subr.mxu0 0.0
      %881 = vmatpush1.msra.mxu0 0.0
      %882 = vmatprep.subr.mxu0 0.0
      %883 = vmatpush1.msra.mxu0 0.0
      %884 = vmatprep.subr.mxu0 0.0
      %885 = vmatpush1.msra.mxu0 0.0
      %886 = vmatprep.mubr.f32.mxu0 0.0
      %887 = vmatmul.mubr.f32.gmra.mrb[0].mxu0 %v820
      %v888 = vpop.f32.mrb[0].mxu0
      %v889 = vadd.f32 0.0, %v888
      %v890 = vpop.f32.mrb[0].mxu0
      %891 = vdwg.mxu0
      %s892 = scalar_lea.vmem %s2, 16
      %v893 = vld [vmem:[%s892] sm:$0xff]
      %v894 = vld [vmem:[%s892 + $0x8] sm:$0xff]
      %895 = vmatprep.subr.mxu0 0.0
      %896 = vmatpush1.msra.mxu0 %v893
      %897 = vmatprep.subr.mxu0 0.0
      %898 = vmatpush1.msra.mxu0 %v894
      %899 = vmatprep.subr.mxu0 0.0
      %900 = vmatpush1.msra.mxu0 0.0
      %901 = vmatprep.subr.mxu0 0.0
      %902 = vmatpush1.msra.mxu0 0.0
      %903 = vmatprep.subr.mxu0 0.0
      %904 = vmatpush1.msra.mxu0 0.0
      %905 = vmatprep.subr.mxu0 0.0
      %906 = vmatpush1.msra.mxu0 0.0
      %907 = vmatprep.subr.mxu0 0.0
      %908 = vmatpush1.msra.mxu0 0.0
      %909 = vmatprep.subr.mxu0 0.0
      %910 = vmatpush1.msra.mxu0 0.0
      %911 = vmatprep.subr.mxu0 0.0
      %912 = vmatpush1.msra.mxu0 0.0
      %913 = vmatprep.subr.mxu0 0.0
      %914 = vmatpush1.msra.mxu0 0.0
      %915 = vmatprep.subr.mxu0 0.0
      %916 = vmatpush1.msra.mxu0 0.0
      %917 = vmatprep.subr.mxu0 0.0
      %918 = vmatpush1.msra.mxu0 0.0
      %919 = vmatprep.subr.mxu0 0.0
      %920 = vmatpush1.msra.mxu0 0.0
      %921 = vmatprep.subr.mxu0 0.0
      %922 = vmatpush1.msra.mxu0 0.0
      %923 = vmatprep.subr.mxu0 0.0
      %924 = vmatpush1.msra.mxu0 0.0
      %925 = vmatprep.subr.mxu0 0.0
      %926 = vmatpush1.msra.mxu0 0.0
      %927 = vmatprep.subr.mxu0 0.0
      %928 = vmatpush1.msra.mxu0 0.0
      %929 = vmatprep.subr.mxu0 0.0
      %930 = vmatpush1.msra.mxu0 0.0
      %931 = vmatprep.subr.mxu0 0.0
      %932 = vmatpush1.msra.mxu0 0.0
      %933 = vmatprep.subr.mxu0 0.0
      %934 = vmatpush1.msra.mxu0 0.0
      %935 = vmatprep.subr.mxu0 0.0
      %936 = vmatpush1.msra.mxu0 0.0
      %937 = vmatprep.subr.mxu0 0.0
      %938 = vmatpush1.msra.mxu0 0.0
      %939 = vmatprep.subr.mxu0 0.0
      %940 = vmatpush1.msra.mxu0 0.0
      %941 = vmatprep.subr.mxu0 0.0
      %942 = vmatpush1.msra.mxu0 0.0
      %943 = vmatprep.subr.mxu0 0.0
      %944 = vmatpush1.msra.mxu0 0.0
      %945 = vmatprep.subr.mxu0 0.0
      %946 = vmatpush1.msra.mxu0 0.0
      %947 = vmatprep.subr.mxu0 0.0
      %948 = vmatpush1.msra.mxu0 0.0
      %949 = vmatprep.subr.mxu0 0.0
      %950 = vmatpush1.msra.mxu0 0.0
      %951 = vmatprep.subr.mxu0 0.0
      %952 = vmatpush1.msra.mxu0 0.0
      %953 = vmatprep.subr.mxu0 0.0
      %954 = vmatpush1.msra.mxu0 0.0
      %955 = vmatprep.subr.mxu0 0.0
      %956 = vmatpush1.msra.mxu0 0.0
      %957 = vmatprep.subr.mxu0 0.0
      %958 = vmatpush1.msra.mxu0 0.0
      %959 = vmatprep.mubr.f32.mxu0 0.0
      %960 = vmatmul.mubr.f32.gmra.mrb[0].mxu0 %v820
      %v961 = vpop.f32.mrb[0].mxu0
      %v962 = vadd.f32 0.0, %v961
      %v963 = vpop.f32.mrb[0].mxu0
      %964 = vdwg.mxu0
      %s965 = scalar_lea.vmem %s2, 32
      %v966 = vld [vmem:[%s965] sm:$0xff]
      %v967 = vld [vmem:[%s965 + $0x8] sm:$0xff]
      %968 = vmatprep.subr.mxu0 0.0
      %969 = vmatpush1.msra.mxu0 %v966
      %970 = vmatprep.subr.mxu0 0.0
      %971 = vmatpush1.msra.mxu0 %v967
      %972 = vmatprep.subr.mxu0 0.0
      %973 = vmatpush1.msra.mxu0 0.0
      %974 = vmatprep.subr.mxu0 0.0
      %975 = vmatpush1.msra.mxu0 0.0
      %976 = vmatprep.subr.mxu0 0.0
      %977 = vmatpush1.msra.mxu0 0.0
      %978 = vmatprep.subr.mxu0 0.0
      %979 = vmatpush1.msra.mxu0 0.0
      %980 = vmatprep.subr.mxu0 0.0
      %981 = vmatpush1.msra.mxu0 0.0
      %982 = vmatprep.subr.mxu0 0.0
      %983 = vmatpush1.msra.mxu0 0.0
      %984 = vmatprep.subr.mxu0 0.0
      %985 = vmatpush1.msra.mxu0 0.0
      %986 = vmatprep.subr.mxu0 0.0
      %987 = vmatpush1.msra.mxu0 0.0
      %988 = vmatprep.subr.mxu0 0.0
      %989 = vmatpush1.msra.mxu0 0.0
      %990 = vmatprep.subr.mxu0 0.0
      %991 = vmatpush1.msra.mxu0 0.0
      %992 = vmatprep.subr.mxu0 0.0
      %993 = vmatpush1.msra.mxu0 0.0
      %994 = vmatprep.subr.mxu0 0.0
      %995 = vmatpush1.msra.mxu0 0.0
      %996 = vmatprep.subr.mxu0 0.0
      %997 = vmatpush1.msra.mxu0 0.0
      %998 = vmatprep.subr.mxu0 0.0
      %999 = vmatpush1.msra.mxu0 0.0
      %1000 = vmatprep.subr.mxu0 0.0
      %1001 = vmatpush1.msra.mxu0 0.0
      %1002 = vmatprep.subr.mxu0 0.0
      %1003 = vmatpush1.msra.mxu0 0.0
      %1004 = vmatprep.subr.mxu0 0.0
      %1005 = vmatpush1.msra.mxu0 0.0
      %1006 = vmatprep.subr.mxu0 0.0
      %1007 = vmatpush1.msra.mxu0 0.0
      %1008 = vmatprep.subr.mxu0 0.0
      %1009 = vmatpush1.msra.mxu0 0.0
      %1010 = vmatprep.subr.mxu0 0.0
      %1011 = vmatpush1.msra.mxu0 0.0
      %1012 = vmatprep.subr.mxu0 0.0
      %1013 = vmatpush1.msra.mxu0 0.0
      %1014 = vmatprep.subr.mxu0 0.0
      %1015 = vmatpush1.msra.mxu0 0.0
      %1016 = vmatprep.subr.mxu0 0.0
      %1017 = vmatpush1.msra.mxu0 0.0
      %1018 = vmatprep.subr.mxu0 0.0
      %1019 = vmatpush1.msra.mxu0 0.0
      %1020 = vmatprep.subr.mxu0 0.0
      %1021 = vmatpush1.msra.mxu0 0.0
      %1022 = vmatprep.subr.mxu0 0.0
      %1023 = vmatpush1.msra.mxu0 0.0
      %1024 = vmatprep.subr.mxu0 0.0
      %1025 = vmatpush1.msra.mxu0 0.0
      %1026 = vmatprep.subr.mxu0 0.0
      %1027 = vmatpush1.msra.mxu0 0.0
      %1028 = vmatprep.subr.mxu0 0.0
      %1029 = vmatpush1.msra.mxu0 0.0
      %1030 = vmatprep.subr.mxu0 0.0
      %1031 = vmatpush1.msra.mxu0 0.0
      %1032 = vmatprep.mubr.f32.mxu0 0.0
      %1033 = vmatmul.mubr.f32.gmra.mrb[0].mxu0 %v820
      %v1034 = vpop.f32.mrb[0].mxu0
      %v1035 = vadd.f32 0.0, %v1034
      %v1036 = vpop.f32.mrb[0].mxu0
      %1037 = vdwg.mxu0
      %s1038 = scalar_lea.vmem %s2, 48
      %v1039 = vld [vmem:[%s1038] sm:$0xff]
      %v1040 = vld [vmem:[%s1038 + $0x8] sm:$0xff]
      %1041 = vmatprep.subr.mxu0 0.0
      %1042 = vmatpush1.msra.mxu0 %v1039
      %1043 = vmatprep.subr.mxu0 0.0
      %1044 = vmatpush1.msra.mxu0 %v1040
      %1045 = vmatprep.subr.mxu0 0.0
      %1046 = vmatpush1.msra.mxu0 0.0
      %1047 = vmatprep.subr.mxu0 0.0
      %1048 = vmatpush1.msra.mxu0 0.0
      %1049 = vmatprep.subr.mxu0 0.0
      %1050 = vmatpush1.msra.mxu0 0.0
      %1051 = vmatprep.subr.mxu0 0.0
      %1052 = vmatpush1.msra.mxu0 0.0
      %1053 = vmatprep.subr.mxu0 0.0
      %1054 = vmatpush1.msra.mxu0 0.0
      %1055 = vmatprep.subr.mxu0 0.0
      %1056 = vmatpush1.msra.mxu0 0.0
      %1057 = vmatprep.subr.mxu0 0.0
      %1058 = vmatpush1.msra.mxu0 0.0
      %1059 = vmatprep.subr.mxu0 0.0
      %1060 = vmatpush1.msra.mxu0 0.0
      %1061 = vmatprep.subr.mxu0 0.0
      %1062 = vmatpush1.msra.mxu0 0.0
      %1063 = vmatprep.subr.mxu0 0.0
      %1064 = vmatpush1.msra.mxu0 0.0
      %1065 = vmatprep.subr.mxu0 0.0
      %1066 = vmatpush1.msra.mxu0 0.0
      %1067 = vmatprep.subr.mxu0 0.0
      %1068 = vmatpush1.msra.mxu0 0.0
      %1069 = vmatprep.subr.mxu0 0.0
      %1070 = vmatpush1.msra.mxu0 0.0
      %1071 = vmatprep.subr.mxu0 0.0
      %1072 = vmatpush1.msra.mxu0 0.0
      %1073 = vmatprep.subr.mxu0 0.0
      %1074 = vmatpush1.msra.mxu0 0.0
      %1075 = vmatprep.subr.mxu0 0.0
      %1076 = vmatpush1.msra.mxu0 0.0
      %1077 = vmatprep.subr.mxu0 0.0
      %1078 = vmatpush1.msra.mxu0 0.0
      %1079 = vmatprep.subr.mxu0 0.0
      %1080 = vmatpush1.msra.mxu0 0.0
      %1081 = vmatprep.subr.mxu0 0.0
      %1082 = vmatpush1.msra.mxu0 0.0
      %1083 = vmatprep.subr.mxu0 0.0
      %1084 = vmatpush1.msra.mxu0 0.0
      %1085 = vmatprep.subr.mxu0 0.0
      %1086 = vmatpush1.msra.mxu0 0.0
      %1087 = vmatprep.subr.mxu0 0.0
      %1088 = vmatpush1.msra.mxu0 0.0
      %1089 = vmatprep.subr.mxu0 0.0
      %1090 = vmatpush1.msra.mxu0 0.0
      %1091 = vmatprep.subr.mxu0 0.0
      %1092 = vmatpush1.msra.mxu0 0.0
      %1093 = vmatprep.subr.mxu0 0.0
      %1094 = vmatpush1.msra.mxu0 0.0
      %1095 = vmatprep.subr.mxu0 0.0
      %1096 = vmatpush1.msra.mxu0 0.0
      %1097 = vmatprep.subr.mxu0 0.0
      %1098 = vmatpush1.msra.mxu0 0.0
      %1099 = vmatprep.subr.mxu0 0.0
      %1100 = vmatpush1.msra.mxu0 0.0
      %1101 = vmatprep.subr.mxu0 0.0
      %1102 = vmatpush1.msra.mxu0 0.0
      %1103 = vmatprep.subr.mxu0 0.0
      %1104 = vmatpush1.msra.mxu0 0.0
      %1105 = vmatprep.mubr.f32.mxu0 0.0
      %1106 = vmatmul.mubr.f32.gmra.mrb[0].mxu0 %v820
      %v1107 = vpop.f32.mrb[0].mxu0
      %v1108 = vadd.f32 0.0, %v1107
      %v1109 = vpop.f32.mrb[0].mxu0
      %1110 = vdwg.mxu0
      %v1111 = vld [vmem:[%s6] sm:$0xff]
      %s1112 = scalar_lea.vmem %s8, 16
      %v1113 = vld [vmem:[%s1112] sm:$0xff]
      %1115 = vset.pattern.permute.xlu0 0
      %1116 = vperm.xlu0 %1115, %v1113
      %v1117 = vpop.permute.xlu0 %1116
      %v1120 = vsel %vm742, %v1111, 0
      %1122 = vmatprep.subr.mxu0 0.0
      %1123 = vmatpush1.msra.mxu0 %v889
      %1124 = vmatprep.subr.mxu0 0.0
      %1125 = vmatpush1.msra.mxu0 %v962
      %1126 = vmatprep.subr.mxu0 0.0
      %1127 = vmatpush1.msra.mxu0 %v1035
      %1128 = vmatprep.subr.mxu0 0.0
      %1129 = vmatpush1.msra.mxu0 %v1108
      %1130 = vmatprep.subr.mxu0 0.0
      %1131 = vmatpush1.msra.mxu0 0.0
      %1132 = vmatprep.subr.mxu0 0.0
      %1133 = vmatpush1.msra.mxu0 0.0
      %1134 = vmatprep.subr.mxu0 0.0
      %1135 = vmatpush1.msra.mxu0 0.0
      %1136 = vmatprep.subr.mxu0 0.0
      %1137 = vmatpush1.msra.mxu0 0.0
      %1138 = vmatprep.subr.mxu0 0.0
      %1139 = vmatpush1.msra.mxu0 0.0
      %1140 = vmatprep.subr.mxu0 0.0
      %1141 = vmatpush1.msra.mxu0 0.0
      %1142 = vmatprep.subr.mxu0 0.0
      %1143 = vmatpush1.msra.mxu0 0.0
      %1144 = vmatprep.subr.mxu0 0.0
      %1145 = vmatpush1.msra.mxu0 0.0
      %1146 = vmatprep.subr.mxu0 0.0
      %1147 = vmatpush1.msra.mxu0 0.0
      %1148 = vmatprep.subr.mxu0 0.0
      %1149 = vmatpush1.msra.mxu0 0.0
      %1150 = vmatprep.subr.mxu0 0.0
      %1151 = vmatpush1.msra.mxu0 0.0
      %1152 = vmatprep.subr.mxu0 0.0
      %1153 = vmatpush1.msra.mxu0 0.0
      %1154 = vmatprep.subr.mxu0 0.0
      %1155 = vmatpush1.msra.mxu0 0.0
      %1156 = vmatprep.subr.mxu0 0.0
      %1157 = vmatpush1.msra.mxu0 0.0
      %1158 = vmatprep.subr.mxu0 0.0
      %1159 = vmatpush1.msra.mxu0 0.0
      %1160 = vmatprep.subr.mxu0 0.0
      %1161 = vmatpush1.msra.mxu0 0.0
      %1162 = vmatprep.subr.mxu0 0.0
      %1163 = vmatpush1.msra.mxu0 0.0
      %1164 = vmatprep.subr.mxu0 0.0
      %1165 = vmatpush1.msra.mxu0 0.0
      %1166 = vmatprep.subr.mxu0 0.0
      %1167 = vmatpush1.msra.mxu0 0.0
      %1168 = vmatprep.subr.mxu0 0.0
      %1169 = vmatpush1.msra.mxu0 0.0
      %1170 = vmatprep.subr.mxu0 0.0
      %1171 = vmatpush1.msra.mxu0 0.0
      %1172 = vmatprep.subr.mxu0 0.0
      %1173 = vmatpush1.msra.mxu0 0.0
      %1174 = vmatprep.subr.mxu0 0.0
      %1175 = vmatpush1.msra.mxu0 0.0
      %1176 = vmatprep.subr.mxu0 0.0
      %1177 = vmatpush1.msra.mxu0 0.0
      %1178 = vmatprep.subr.mxu0 0.0
      %1179 = vmatpush1.msra.mxu0 0.0
      %1180 = vmatprep.subr.mxu0 0.0
      %1181 = vmatpush1.msra.mxu0 0.0
      %1182 = vmatprep.subr.mxu0 0.0
      %1183 = vmatpush1.msra.mxu0 0.0
      %1184 = vmatprep.subr.mxu0 0.0
      %1185 = vmatpush1.msra.mxu0 0.0
      %1186 = vmatprep.mubr.f32.mxu0 0.0
      %1187 = vmatmul.mubr.f32.gmra.mrb[0].mxu0 %v1120
      %v1188 = vpop.f32.mrb[0].mxu0
      %v1189 = vadd.f32 %v1117, %v1188
      %v1190 = vpop.f32.mrb[0].mxu0
      %1191 = vdwg.mxu0
      %v1192 = vmax.f32 %v1189, 0.0
      %v1193 = vld [vmem:[%s3] sm:$0xf]
      %vm1194 = vcmask 31744
      %v1196 = vsel %vm1194, %v1192, 0
      %vm1198 = vcmask 1043456
      %v1200 = vsel %vm1198, %v1193, 0
      %1202 = vmatprep.subr.mxu0 0.0
      %1203 = vmatpush1.msra.mxu0 %v1200
      %1204 = vmatprep.subr.mxu0 0.0
      %1205 = vmatpush1.msra.mxu0 0.0
      %1206 = vmatprep.subr.mxu0 0.0
      %1207 = vmatpush1.msra.mxu0 0.0
      %1208 = vmatprep.subr.mxu0 0.0
      %1209 = vmatpush1.msra.mxu0 0.0
      %1210 = vmatprep.subr.mxu0 0.0
      %1211 = vmatpush1.msra.mxu0 0.0
      %1212 = vmatprep.subr.mxu0 0.0
      %1213 = vmatpush1.msra.mxu0 0.0
      %1214 = vmatprep.subr.mxu0 0.0
      %1215 = vmatpush1.msra.mxu0 0.0
      %1216 = vmatprep.subr.mxu0 0.0
      %1217 = vmatpush1.msra.mxu0 0.0
      %1218 = vmatprep.subr.mxu0 0.0
      %1219 = vmatpush1.msra.mxu0 0.0
      %1220 = vmatprep.subr.mxu0 0.0
      %1221 = vmatpush1.msra.mxu0 0.0
      %1222 = vmatprep.subr.mxu0 0.0
      %1223 = vmatpush1.msra.mxu0 0.0
      %1224 = vmatprep.subr.mxu0 0.0
      %1225 = vmatpush1.msra.mxu0 0.0
      %1226 = vmatprep.subr.mxu0 0.0
      %1227 = vmatpush1.msra.mxu0 0.0
      %1228 = vmatprep.subr.mxu0 0.0
      %1229 = vmatpush1.msra.mxu0 0.0
      %1230 = vmatprep.subr.mxu0 0.0
      %1231 = vmatpush1.msra.mxu0 0.0
      %1232 = vmatprep.subr.mxu0 0.0
      %1233 = vmatpush1.msra.mxu0 0.0
      %1234 = vmatprep.subr.mxu0 0.0
      %1235 = vmatpush1.msra.mxu0 0.0
      %1236 = vmatprep.subr.mxu0 0.0
      %1237 = vmatpush1.msra.mxu0 0.0
      %1238 = vmatprep.subr.mxu0 0.0
      %1239 = vmatpush1.msra.mxu0 0.0
      %1240 = vmatprep.subr.mxu0 0.0
      %1241 = vmatpush1.msra.mxu0 0.0
      %1242 = vmatprep.subr.mxu0 0.0
      %1243 = vmatpush1.msra.mxu0 0.0
      %1244 = vmatprep.subr.mxu0 0.0
      %1245 = vmatpush1.msra.mxu0 0.0
      %1246 = vmatprep.subr.mxu0 0.0
      %1247 = vmatpush1.msra.mxu0 0.0
      %1248 = vmatprep.subr.mxu0 0.0
      %1249 = vmatpush1.msra.mxu0 0.0
      %1250 = vmatprep.subr.mxu0 0.0
      %1251 = vmatpush1.msra.mxu0 0.0
      %1252 = vmatprep.subr.mxu0 0.0
      %1253 = vmatpush1.msra.mxu0 0.0
      %1254 = vmatprep.subr.mxu0 0.0
      %1255 = vmatpush1.msra.mxu0 0.0
      %1256 = vmatprep.subr.mxu0 0.0
      %1257 = vmatpush1.msra.mxu0 0.0
      %1258 = vmatprep.subr.mxu0 0.0
      %1259 = vmatpush1.msra.mxu0 0.0
      %1260 = vmatprep.subr.mxu0 0.0
      %1261 = vmatpush1.msra.mxu0 0.0
      %1262 = vmatprep.subr.mxu0 0.0
      %1263 = vmatpush1.msra.mxu0 0.0
      %1264 = vmatprep.subr.mxu0 0.0
      %1265 = vmatpush1.msra.mxu0 0.0
      %1266 = vmatprep.mubr.f32.mxu0 0.0
      %1267 = vmatmul.mubr.f32.gmra.mrb[0].mxu0 %v1196
      %v1268 = vpop.f32.mrb[0].mxu0
      %v1269 = vadd.f32 0.0, %v1268
      %v1270 = vpop.f32.mrb[0].mxu0
      %1271 = vdwg.mxu0
      %s1272 = scalar_lea.vmem %s3, 4
      %v1273 = vld [vmem:[%s1272] sm:$0xf]
      %v1275 = vsel %vm1198, %v1273, 0
      %1277 = vmatprep.subr.mxu0 0.0
      %1278 = vmatpush1.msra.mxu0 %v1275
      %1279 = vmatprep.subr.mxu0 0.0
      %1280 = vmatpush1.msra.mxu0 0.0
      %1281 = vmatprep.subr.mxu0 0.0
      %1282 = vmatpush1.msra.mxu0 0.0
      %1283 = vmatprep.subr.mxu0 0.0
      %1284 = vmatpush1.msra.mxu0 0.0
      %1285 = vmatprep.subr.mxu0 0.0
      %1286 = vmatpush1.msra.mxu0 0.0
      %1287 = vmatprep.subr.mxu0 0.0
      %1288 = vmatpush1.msra.mxu0 0.0
      %1289 = vmatprep.subr.mxu0 0.0
      %1290 = vmatpush1.msra.mxu0 0.0
      %1291 = vmatprep.subr.mxu0 0.0
      %1292 = vmatpush1.msra.mxu0 0.0
      %1293 = vmatprep.subr.mxu0 0.0
      %1294 = vmatpush1.msra.mxu0 0.0
      %1295 = vmatprep.subr.mxu0 0.0
      %1296 = vmatpush1.msra.mxu0 0.0
      %1297 = vmatprep.subr.mxu0 0.0
      %1298 = vmatpush1.msra.mxu0 0.0
      %1299 = vmatprep.subr.mxu0 0.0
      %1300 = vmatpush1.msra.mxu0 0.0
      %1301 = vmatprep.subr.mxu0 0.0
      %1302 = vmatpush1.msra.mxu0 0.0
      %1303 = vmatprep.subr.mxu0 0.0
      %1304 = vmatpush1.msra.mxu0 0.0
      %1305 = vmatprep.subr.mxu0 0.0
      %1306 = vmatpush1.msra.mxu0 0.0
      %1307 = vmatprep.subr.mxu0 0.0
      %1308 = vmatpush1.msra.mxu0 0.0
      %1309 = vmatprep.subr.mxu0 0.0
      %1310 = vmatpush1.msra.mxu0 0.0
      %1311 = vmatprep.subr.mxu0 0.0
      %1312 = vmatpush1.msra.mxu0 0.0
      %1313 = vmatprep.subr.mxu0 0.0
      %1314 = vmatpush1.msra.mxu0 0.0
      %1315 = vmatprep.subr.mxu0 0.0
      %1316 = vmatpush1.msra.mxu0 0.0
      %1317 = vmatprep.subr.mxu0 0.0
      %1318 = vmatpush1.msra.mxu0 0.0
      %1319 = vmatprep.subr.mxu0 0.0
      %1320 = vmatpush1.msra.mxu0 0.0
      %1321 = vmatprep.subr.mxu0 0.0
      %1322 = vmatpush1.msra.mxu0 0.0
      %1323 = vmatprep.subr.mxu0 0.0
      %1324 = vmatpush1.msra.mxu0 0.0
      %1325 = vmatprep.subr.mxu0 0.0
      %1326 = vmatpush1.msra.mxu0 0.0
      %1327 = vmatprep.subr.mxu0 0.0
      %1328 = vmatpush1.msra.mxu0 0.0
      %1329 = vmatprep.subr.mxu0 0.0
      %1330 = vmatpush1.msra.mxu0 0.0
      %1331 = vmatprep.subr.mxu0 0.0
      %1332 = vmatpush1.msra.mxu0 0.0
      %1333 = vmatprep.subr.mxu0 0.0
      %1334 = vmatpush1.msra.mxu0 0.0
      %1335 = vmatprep.subr.mxu0 0.0
      %1336 = vmatpush1.msra.mxu0 0.0
      %1337 = vmatprep.subr.mxu0 0.0
      %1338 = vmatpush1.msra.mxu0 0.0
      %1339 = vmatprep.subr.mxu0 0.0
      %1340 = vmatpush1.msra.mxu0 0.0
      %1341 = vmatprep.mubr.f32.mxu0 0.0
      %1342 = vmatmul.mubr.f32.gmra.mrb[0].mxu0 %v1196
      %v1343 = vpop.f32.mrb[0].mxu0
      %v1344 = vadd.f32 0.0, %v1343
      %v1345 = vpop.f32.mrb[0].mxu0
      %1346 = vdwg.mxu0
      %s1347 = scalar_lea.vmem %s3, 8
      %v1348 = vld [vmem:[%s1347] sm:$0xf]
      %v1350 = vsel %vm1198, %v1348, 0
      %1352 = vmatprep.subr.mxu0 0.0
      %1353 = vmatpush1.msra.mxu0 %v1350
      %1354 = vmatprep.subr.mxu0 0.0
      %1355 = vmatpush1.msra.mxu0 0.0
      %1356 = vmatprep.subr.mxu0 0.0
      %1357 = vmatpush1.msra.mxu0 0.0
      %1358 = vmatprep.subr.mxu0 0.0
      %1359 = vmatpush1.msra.mxu0 0.0
      %1360 = vmatprep.subr.mxu0 0.0
      %1361 = vmatpush1.msra.mxu0 0.0
      %1362 = vmatprep.subr.mxu0 0.0
      %1363 = vmatpush1.msra.mxu0 0.0
      %1364 = vmatprep.subr.mxu0 0.0
      %1365 = vmatpush1.msra.mxu0 0.0
      %1366 = vmatprep.subr.mxu0 0.0
      %1367 = vmatpush1.msra.mxu0 0.0
      %1368 = vmatprep.subr.mxu0 0.0
      %1369 = vmatpush1.msra.mxu0 0.0
      %1370 = vmatprep.subr.mxu0 0.0
      %1371 = vmatpush1.msra.mxu0 0.0
      %1372 = vmatprep.subr.mxu0 0.0
      %1373 = vmatpush1.msra.mxu0 0.0
      %1374 = vmatprep.subr.mxu0 0.0
      %1375 = vmatpush1.msra.mxu0 0.0
      %1376 = vmatprep.subr.mxu0 0.0
      %1377 = vmatpush1.msra.mxu0 0.0
      %1378 = vmatprep.subr.mxu0 0.0
      %1379 = vmatpush1.msra.mxu0 0.0
      %1380 = vmatprep.subr.mxu0 0.0
      %1381 = vmatpush1.msra.mxu0 0.0
      %1382 = vmatprep.subr.mxu0 0.0
      %1383 = vmatpush1.msra.mxu0 0.0
      %1384 = vmatprep.subr.mxu0 0.0
      %1385 = vmatpush1.msra.mxu0 0.0
      %1386 = vmatprep.subr.mxu0 0.0
      %1387 = vmatpush1.msra.mxu0 0.0
      %1388 = vmatprep.subr.mxu0 0.0
      %1389 = vmatpush1.msra.mxu0 0.0
      %1390 = vmatprep.subr.mxu0 0.0
      %1391 = vmatpush1.msra.mxu0 0.0
      %1392 = vmatprep.subr.mxu0 0.0
      %1393 = vmatpush1.msra.mxu0 0.0
      %1394 = vmatprep.subr.mxu0 0.0
      %1395 = vmatpush1.msra.mxu0 0.0
      %1396 = vmatprep.subr.mxu0 0.0
      %1397 = vmatpush1.msra.mxu0 0.0
      %1398 = vmatprep.subr.mxu0 0.0
      %1399 = vmatpush1.msra.mxu0 0.0
      %1400 = vmatprep.subr.mxu0 0.0
      %1401 = vmatpush1.msra.mxu0 0.0
      %1402 = vmatprep.subr.mxu0 0.0
      %1403 = vmatpush1.msra.mxu0 0.0
      %1404 = vmatprep.subr.mxu0 0.0
      %1405 = vmatpush1.msra.mxu0 0.0
      %1406 = vmatprep.subr.mxu0 0.0
      %1407 = vmatpush1.msra.mxu0 0.0
      %1408 = vmatprep.subr.mxu0 0.0
      %1409 = vmatpush1.msra.mxu0 0.0
      %1410 = vmatprep.subr.mxu0 0.0
      %1411 = vmatpush1.msra.mxu0 0.0
      %1412 = vmatprep.subr.mxu0 0.0
      %1413 = vmatpush1.msra.mxu0 0.0
      %1414 = vmatprep.subr.mxu0 0.0
      %1415 = vmatpush1.msra.mxu0 0.0
      %1416 = vmatprep.mubr.f32.mxu0 0.0
      %1417 = vmatmul.mubr.f32.gmra.mrb[0].mxu0 %v1196
      %v1418 = vpop.f32.mrb[0].mxu0
      %v1419 = vadd.f32 0.0, %v1418
      %v1420 = vpop.f32.mrb[0].mxu0
      %1421 = vdwg.mxu0
      %s1422 = scalar_lea.vmem %s3, 12
      %v1423 = vld [vmem:[%s1422] sm:$0xf]
      %v1425 = vsel %vm1198, %v1423, 0
      %1427 = vmatprep.subr.mxu0 0.0
      %1428 = vmatpush1.msra.mxu0 %v1425
      %1429 = vmatprep.subr.mxu0 0.0
      %1430 = vmatpush1.msra.mxu0 0.0
      %1431 = vmatprep.subr.mxu0 0.0
      %1432 = vmatpush1.msra.mxu0 0.0
      %1433 = vmatprep.subr.mxu0 0.0
      %1434 = vmatpush1.msra.mxu0 0.0
      %1435 = vmatprep.subr.mxu0 0.0
      %1436 = vmatpush1.msra.mxu0 0.0
      %1437 = vmatprep.subr.mxu0 0.0
      %1438 = vmatpush1.msra.mxu0 0.0
      %1439 = vmatprep.subr.mxu0 0.0
      %1440 = vmatpush1.msra.mxu0 0.0
      %1441 = vmatprep.subr.mxu0 0.0
      %1442 = vmatpush1.msra.mxu0 0.0
      %1443 = vmatprep.subr.mxu0 0.0
      %1444 = vmatpush1.msra.mxu0 0.0
      %1445 = vmatprep.subr.mxu0 0.0
      %1446 = vmatpush1.msra.mxu0 0.0
      %1447 = vmatprep.subr.mxu0 0.0
      %1448 = vmatpush1.msra.mxu0 0.0
      %1449 = vmatprep.subr.mxu0 0.0
      %1450 = vmatpush1.msra.mxu0 0.0
      %1451 = vmatprep.subr.mxu0 0.0
      %1452 = vmatpush1.msra.mxu0 0.0
      %1453 = vmatprep.subr.mxu0 0.0
      %1454 = vmatpush1.msra.mxu0 0.0
      %1455 = vmatprep.subr.mxu0 0.0
      %1456 = vmatpush1.msra.mxu0 0.0
      %1457 = vmatprep.subr.mxu0 0.0
      %1458 = vmatpush1.msra.mxu0 0.0
      %1459 = vmatprep.subr.mxu0 0.0
      %1460 = vmatpush1.msra.mxu0 0.0
      %1461 = vmatprep.subr.mxu0 0.0
      %1462 = vmatpush1.msra.mxu0 0.0
      %1463 = vmatprep.subr.mxu0 0.0
      %1464 = vmatpush1.msra.mxu0 0.0
      %1465 = vmatprep.subr.mxu0 0.0
      %1466 = vmatpush1.msra.mxu0 0.0
      %1467 = vmatprep.subr.mxu0 0.0
      %1468 = vmatpush1.msra.mxu0 0.0
      %1469 = vmatprep.subr.mxu0 0.0
      %1470 = vmatpush1.msra.mxu0 0.0
      %1471 = vmatprep.subr.mxu0 0.0
      %1472 = vmatpush1.msra.mxu0 0.0
      %1473 = vmatprep.subr.mxu0 0.0
      %1474 = vmatpush1.msra.mxu0 0.0
      %1475 = vmatprep.subr.mxu0 0.0
      %1476 = vmatpush1.msra.mxu0 0.0
      %1477 = vmatprep.subr.mxu0 0.0
      %1478 = vmatpush1.msra.mxu0 0.0
      %1479 = vmatprep.subr.mxu0 0.0
      %1480 = vmatpush1.msra.mxu0 0.0
      %1481 = vmatprep.subr.mxu0 0.0
      %1482 = vmatpush1.msra.mxu0 0.0
      %1483 = vmatprep.subr.mxu0 0.0
      %1484 = vmatpush1.msra.mxu0 0.0
      %1485 = vmatprep.subr.mxu0 0.0
      %1486 = vmatpush1.msra.mxu0 0.0
      %1487 = vmatprep.subr.mxu0 0.0
      %1488 = vmatpush1.msra.mxu0 0.0
      %1489 = vmatprep.subr.mxu0 0.0
      %1490 = vmatpush1.msra.mxu0 0.0
      %1491 = vmatprep.mubr.f32.mxu0 0.0
      %1492 = vmatmul.mubr.f32.gmra.mrb[0].mxu0 %v1196
      %v1493 = vpop.f32.mrb[0].mxu0
      %v1494 = vadd.f32 0.0, %v1493
      %v1495 = vpop.f32.mrb[0].mxu0
      %1496 = vdwg.mxu0
      %v1497 = vld [vmem:[%s7] sm:$0xff]
      %s1498 = scalar_lea.vmem %s8, 24
      %v1499 = vld [vmem:[%s1498] sm:$0xff]
      %v1501 = vsel %vm742, %v1497, 0
      %1503 = vmatprep.subr.mxu0 0.0
      %1504 = vmatpush1.msra.mxu0 %v1269
      %1505 = vmatprep.subr.mxu0 0.0
      %1506 = vmatpush1.msra.mxu0 %v1344
      %1507 = vmatprep.subr.mxu0 0.0
      %1508 = vmatpush1.msra.mxu0 %v1419
      %1509 = vmatprep.subr.mxu0 0.0
      %1510 = vmatpush1.msra.mxu0 %v1494
      %1511 = vmatprep.subr.mxu0 0.0
      %1512 = vmatpush1.msra.mxu0 0.0
      %1513 = vmatprep.subr.mxu0 0.0
      %1514 = vmatpush1.msra.mxu0 0.0
      %1515 = vmatprep.subr.mxu0 0.0
      %1516 = vmatpush1.msra.mxu0 0.0
      %1517 = vmatprep.subr.mxu0 0.0
      %1518 = vmatpush1.msra.mxu0 0.0
      %1519 = vmatprep.subr.mxu0 0.0
      %1520 = vmatpush1.msra.mxu0 0.0
      %1521 = vmatprep.subr.mxu0 0.0
      %1522 = vmatpush1.msra.mxu0 0.0
      %1523 = vmatprep.subr.mxu0 0.0
      %1524 = vmatpush1.msra.mxu0 0.0
      %1525 = vmatprep.subr.mxu0 0.0
      %1526 = vmatpush1.msra.mxu0 0.0
      %1527 = vmatprep.subr.mxu0 0.0
      %1528 = vmatpush1.msra.mxu0 0.0
      %1529 = vmatprep.subr.mxu0 0.0
      %1530 = vmatpush1.msra.mxu0 0.0
      %1531 = vmatprep.subr.mxu0 0.0
      %1532 = vmatpush1.msra.mxu0 0.0
      %1533 = vmatprep.subr.mxu0 0.0
      %1534 = vmatpush1.msra.mxu0 0.0
      %1535 = vmatprep.subr.mxu0 0.0
      %1536 = vmatpush1.msra.mxu0 0.0
      %1537 = vmatprep.subr.mxu0 0.0
      %1538 = vmatpush1.msra.mxu0 0.0
      %1539 = vmatprep.subr.mxu0 0.0
      %1540 = vmatpush1.msra.mxu0 0.0
      %1541 = vmatprep.subr.mxu0 0.0
      %1542 = vmatpush1.msra.mxu0 0.0
      %1543 = vmatprep.subr.mxu0 0.0
      %1544 = vmatpush1.msra.mxu0 0.0
      %1545 = vmatprep.subr.mxu0 0.0
      %1546 = vmatpush1.msra.mxu0 0.0
      %1547 = vmatprep.subr.mxu0 0.0
      %1548 = vmatpush1.msra.mxu0 0.0
      %1549 = vmatprep.subr.mxu0 0.0
      %1550 = vmatpush1.msra.mxu0 0.0
      %1551 = vmatprep.subr.mxu0 0.0
      %1552 = vmatpush1.msra.mxu0 0.0
      %1553 = vmatprep.subr.mxu0 0.0
      %1554 = vmatpush1.msra.mxu0 0.0
      %1555 = vmatprep.subr.mxu0 0.0
      %1556 = vmatpush1.msra.mxu0 0.0
      %1557 = vmatprep.subr.mxu0 0.0
      %1558 = vmatpush1.msra.mxu0 0.0
      %1559 = vmatprep.subr.mxu0 0.0
      %1560 = vmatpush1.msra.mxu0 0.0
      %1561 = vmatprep.subr.mxu0 0.0
      %1562 = vmatpush1.msra.mxu0 0.0
      %1563 = vmatprep.subr.mxu0 0.0
      %1564 = vmatpush1.msra.mxu0 0.0
      %1565 = vmatprep.subr.mxu0 0.0
      %1566 = vmatpush1.msra.mxu0 0.0
      %1567 = vmatprep.mubr.f32.mxu0 0.0
      %1568 = vmatmul.mubr.f32.gmra.mrb[0].mxu0 %v1501
      %v1569 = vpop.f32.mrb[0].mxu0
      %v1570 = vadd.f32 %v1499, %v1569
      %v1571 = vpop.f32.mrb[0].mxu0
      %1572 = vdwg.mxu0
      %v1573 = vmax.f32 %v1570, 0.0
      %v1574 = vadd.f32 %v1573, 0.0
      %vm1575 = vcmask 7168
      %1576 = vst.msk [vmem:[%s330] sm:$0xff] %vm1575, %v1574
      %p1577 = scmp.lt.s32.totalorder %s20, 1
      %s1578 = scalar_select %p1577, %s20, 1
      %s1579 = smul.addr %s1578, 8
      %s1580 = scalar_lea.vmem %s9, %s1579
      // Predicated region
      $region57: #{_lambda_.1} parent=55 // pred_check
        %p1581 = pneg %p232
      $region58: #{_lambda_.1} parent=55 // pred_check_branch
        %1583 = sbr.rel (%p1581) target = $region60
      $region59: #{_lambda_.1} parent=55 // pred_region
        _
      $region60: #{_lambda_.1} parent=55 // pred_fallthru
        _
    $region56: #{_lambda_.1} parent=5 // pred_fallthru
      _
    %p1584 = scmp.le.s32.totalorder 2, %s15
    // Predicated region
    $region61: #{_lambda_.1} parent=5 // pred_check
      %p1585 = pneg %p1584
    $region62: #{_lambda_.1} parent=5 // pred_check_branch
      %1587 = sbr.rel (%p1585) target = $region64
    $region63: #{_lambda_.1} parent=5 // pred_region
      %s1588 = ssub.s32 %s15, 2
      // Predicated region
      $region65: #{_lambda_.1} parent=63 // pred_check
        %p1589 = pneg %p238
      $region66: #{_lambda_.1} parent=63 // pred_check_branch
        %1591 = sbr.rel (%p1589) target = $region68
      $region67: #{_lambda_.1} parent=63 // pred_region
        %p1592 = scmp.lt.s32.totalorder %s21, 1
        %s1593 = scalar_select %p1592, %s21, 1
        %s1594 = smul.addr %s1593, 8
        %s1595 = scalar_lea.vmem %s9, %s1594
      $region68: #{_lambda_.1} parent=63 // pred_fallthru
        _
    $region64: #{_lambda_.1} parent=5 // pred_fallthru
      _
  $region6: #{_lambda_.1} parent=0 // loop_footer
    %s19 = sadd.s32 1, %s15
  $region7: #{_lambda_.1} parent=0 // loop_footer_branch
    %14 = sbr.rel target = $region3
  $region8: #{_lambda_.1} parent=0 // loop_exit
    _

</llo_original>
